<compile_context>
chip_gen: v7x
topology: tpu7x:2x2x1
jax: 0.10.0
libtpu: 0.0.40
codegen_flags: <defaults>
</compile_context>

<pallas_src>
import numpy as np
import jax
import jax.numpy as jnp
from jax.experimental import pallas as pl
from jax.experimental.pallas import tpu as pltpu

LEAKY_SLOPE = 0.2
_BLUR_1D = (0.25, 0.5, 0.25)            # [1,2,1]/4 ; full blur = outer product = /16

# 3x3 anti-aliasing blur filter (get_filter(3)) for the pure-JAX reference.
_BLUR = np.outer([1.0, 2.0, 1.0], [1.0, 2.0, 1.0])
_BLUR = (_BLUR / _BLUR.sum()).astype(np.float32)


def _round_up(x, m):
    return ((x + m - 1) // m) * m


def _reflect(i, n):
    # ReflectionPad2d(1) index mapping (pad=1): -1 -> 1, n -> n-2.
    if i < 0:
        return -i
    if i > n - 1:
        return 2 * (n - 1) - i
    return i


# ----------------------------------------------------------------------------
# Fused ConvBlock_cond forward
# ----------------------------------------------------------------------------
def conv_block_cond(x, t_emb, conv_w, dense_w, dense_b):
    """Conv2d(K=4,s=1,p=1,no bias) + dense(t_emb) + LeakyReLU(0.2) + blur-downsample."""
    B, Cin, H, W = x.shape
    Cout, _, K, _ = conv_w.shape
    pad = 1
    Hp, Wp = H + 2 * pad, W + 2 * pad
    Ho, Wo = Hp - K + 1, Wp - K + 1                    # conv output (stride 1)
    Hd, Wd = (Ho - 1) // 2 + 1, (Wo - 1) // 2 + 1      # blur-downsample output
    Npos = Ho * Wp                                     # full-width flattened conv cols
    max_off = (K - 1) * Wp + (K - 1)                   # largest tap offset
    L = _round_up(Hp * Wp + K - 1, 128)                # flattened input length (>= Npos+max_off)

    # --- cheap host-side (XLA) prep: ~1x-data layout ops, no multiplicative blowup ----
    xpad = jnp.pad(x, ((0, 0), (0, 0), (pad, pad), (pad, pad)))      # zero pad of conv
    xflat = xpad.reshape(B, Cin, Hp * Wp)
    xflat = jnp.pad(xflat, ((0, 0), (0, 0), (0, L - Hp * Wp))).astype(jnp.float32)

    # Hoisted time-embedding projection: (B, Cout, 1) broadcast inside the kernel.
    tproj = (t_emb @ dense_w.T + dense_b).astype(jnp.float32).reshape(B, Cout, 1)

    # Conv weights, tap-major: wt[kh*K + kw] = conv_w[:, :, kh, kw]  -> (K*K, Cout, Cin)
    wt = jnp.transpose(conv_w, (2, 3, 0, 1)).reshape(K * K, Cout, Cin).astype(jnp.float32)

    # Horizontal blur ([1,2,1]/4) + reflect(1) + stride 2 folded into a (Wo, Wd) matrix.
    sh_np = np.zeros((Wo, Wd), np.float32)
    for dx in range(Wd):
        for kw, wv in enumerate(_BLUR_1D):
            sh_np[_reflect(2 * dx - 1 + kw, Wo), dx] += wv
    sh = jnp.asarray(sh_np)

    def kernel(xflat_ref, w_ref, tproj_ref, sh_ref, out_ref):
        # xflat_ref: (Cin, L)          w_ref:  (K*K, Cout, Cin)
        # tproj_ref: (Cout, 1)         sh_ref: (Wo, Wd)
        # out_ref:   (Cout, Hd*Wd)
        #
        # 1) Conv as K*K accumulated matmuls, lane-dense over flattened spatial.
        #    Column p = oy*Wp + ox; columns with ox >= Wo are harmless junk (never read).
        acc = jnp.zeros((Cout, Npos), jnp.float32)
        for kh in range(K):
            for kw in range(K):
                off = kh * Wp + kw
                acc = acc + jnp.dot(w_ref[kh * K + kw],
                                    xflat_ref[:, off:off + Npos],
                                    preferred_element_type=jnp.float32)
        # 2) + dense(t_emb) per channel, LeakyReLU(0.2).
        z = acc + tproj_ref[...]
        a = jnp.where(z >= 0, z, LEAKY_SLOPE * z)               # (Cout, Ho*Wp)

        # 3) Vertical blur [1,2,1]/4 with reflect(1), still flattened full-width.
        a_pad = jnp.concatenate(
            [a[:, Wp:2 * Wp],                      # row -1 -> reflect -> row 1
             a,                                    # rows 0 .. Ho-1
             a[:, (Ho - 2) * Wp:(Ho - 1) * Wp]],   # row Ho -> reflect -> row Ho-2
            axis=1)                                # (Cout, (Ho+2)*Wp)
        vb = (0.25 * a_pad[:, 0:Ho * Wp]
              + 0.5 * a_pad[:, Wp:(Ho + 1) * Wp]
              + 0.25 * a_pad[:, 2 * Wp:(Ho + 2) * Wp])          # (Cout, Ho*Wp)

        # 4) Horizontal blur + reflect + stride 2 as one small matmul per output row.
        sh_m = sh_ref[...]
        for dy in range(Hd):
            row = vb[:, 2 * dy * Wp: 2 * dy * Wp + Wo]          # (Cout, Wo) valid cols
            out_ref[:, dy * Wd:(dy + 1) * Wd] = jnp.dot(
                row, sh_m, preferred_element_type=jnp.float32)

    flops = 2 * B * (K * K * Cin * Cout * Npos + Cout * Hd * Wo * Wd)
    bytes_accessed = 4 * (B * Cin * L + K * K * Cout * Cin + B * Cout
                          + Wo * Wd + B * Cout * Hd * Wd)

    out_flat = pl.pallas_call(
        kernel,
        out_shape=jax.ShapeDtypeStruct((B, Cout, Hd * Wd), jnp.float32),
        grid=(B,),
        in_specs=[
            pl.BlockSpec((None, Cin, L), lambda b: (b, 0, 0)),
            pl.BlockSpec((K * K, Cout, Cin), lambda b: (0, 0, 0)),
            pl.BlockSpec((None, Cout, 1), lambda b: (b, 0, 0)),
            pl.BlockSpec((Wo, Wd), lambda b: (0, 0)),
        ],
        out_specs=pl.BlockSpec((None, Cout, Hd * Wd), lambda b: (b, 0, 0)),
        compiler_params=pltpu.CompilerParams(
            dimension_semantics=("parallel",),          # batch axis -> 2 TCs on v7x
            vmem_limit_bytes=48 * 1024 * 1024,          # fits v7x 64 MiB physical VMEM
        ),
        cost_estimate=pl.CostEstimate(flops=flops, transcendentals=0,
                                      bytes_accessed=bytes_accessed),
    )(xflat, wt, tproj, sh)

    return out_flat.reshape(B, Cout, Hd, Wd)


# ----------------------------------------------------------------------------
# Pure-JAX reference for validation
# ----------------------------------------------------------------------------
def _reference(x, t_emb, conv_w, dense_w, dense_b):
    conv = jax.lax.conv_general_dilated(
        x, conv_w, window_strides=(1, 1), padding=((1, 1), (1, 1)),
        dimension_numbers=("NCHW", "OIHW", "NCHW"))
    tproj = t_emb @ dense_w.T + dense_b
    out = conv + tproj[:, :, None, None]
    out = jnp.where(out >= 0, out, LEAKY_SLOPE * out)
    padded = jnp.pad(out, ((0, 0), (0, 0), (1, 1), (1, 1)), mode="reflect")
    C = out.shape[1]
    filt = jnp.tile(jnp.asarray(_BLUR)[None, None], (C, 1, 1, 1))
    down = jax.lax.conv_general_dilated(
        padded, filt, window_strides=(2, 2), padding="VALID",
        dimension_numbers=("NCHW", "OIHW", "NCHW"), feature_group_count=C)
    return down


if __name__ == "__main__":
    B, Cin, H, W = 2, 4, 16, 16
    Cout, T = 8, 32
    K = 4

    key = jax.random.PRNGKey(0)
    k_x, k_t, k_cw, k_dw, k_db = jax.random.split(key, 5)

    x = jax.random.normal(k_x, (B, Cin, H, W), dtype=jnp.float32)
    t_emb = jax.random.normal(k_t, (B, T), dtype=jnp.float32)

    # Synthetic parameters (shapes match nn.Conv2d / nn.Linear in __init__;
    # conv has no bias since use_bias=None).
    conv_w = 0.1 * jax.random.normal(k_cw, (Cout, Cin, K, K), dtype=jnp.float32)
    dense_w = 0.1 * jax.random.normal(k_dw, (Cout, T), dtype=jnp.float32)
    dense_b = 0.1 * jax.random.normal(k_db, (Cout,), dtype=jnp.float32)

    out = jax.block_until_ready(conv_block_cond(x, t_emb, conv_w, dense_w, dense_b))
    ref = jax.block_until_ready(_reference(x, t_emb, conv_w, dense_w, dense_b))

    assert out.shape == (B, Cout, 8, 8), out.shape
    assert np.allclose(np.asarray(out), np.asarray(ref), atol=2e-4, rtol=2e-4), \
        float(np.max(np.abs(np.asarray(out) - np.asarray(ref))))
    print("KERNEL_OK")
</pallas_src>

<mosaic_0001>
module attributes {stable_mosaic.version = 11 : i64} {
  func.func @kernel(%arg0: i32, %arg1: memref<1x4x384xf32, #tpu.memory_space<vmem>>, %arg2: memref<16x8x4xf32, #tpu.memory_space<vmem>>, %arg3: memref<1x8x1xf32, #tpu.memory_space<vmem>>, %arg4: memref<15x8xf32, #tpu.memory_space<vmem>>, %arg5: memref<1x8x64xf32, #tpu.memory_space<vmem>>) attributes {dimension_semantics = [#tpu.dimension_semantics<parallel>], iteration_bounds = array<i64: 2>, scalar_prefetch = 0 : i64, scratch_operands = 0 : i64, tpu.core_type = #tpu.core_type<tc>, window_params = [{transform_indices = @transform_0, window_bounds = array<i64: 1, 4, 384>}, {pipeline_mode = #tpu.pipeline_mode<synchronous>, transform_indices = @transform_1, window_bounds = array<i64: 16, 8, 4>}, {transform_indices = @transform_2, window_bounds = array<i64: 1, 8, 1>}, {pipeline_mode = #tpu.pipeline_mode<synchronous>, transform_indices = @transform_3, window_bounds = array<i64: 15, 8>}, {transform_indices = @transform_4, window_bounds = array<i64: 1, 8, 64>}]} {
    %cst = arith.constant 0.000000e+00 : f32
    %0 = vector.broadcast %cst : f32 to vector<8x270xf32>
    %c0 = arith.constant 0 : index
    %c0_0 = arith.constant 0 : index
    %c0_1 = arith.constant 0 : index
    %1 = vector.load %arg2[%c0, %c0_0, %c0_1] : memref<16x8x4xf32, #tpu.memory_space<vmem>>, vector<1x8x4xf32>
    %2 = vector.shape_cast %1 : vector<1x8x4xf32> to vector<8x4xf32>
    %c0_2 = arith.constant 0 : index
    %c0_3 = arith.constant 0 : index
    %c0_4 = arith.constant 0 : index
    %3 = vector.load %arg1[%c0_2, %c0_3, %c0_4] : memref<1x4x384xf32, #tpu.memory_space<vmem>>, vector<1x4x270xf32>
    %4 = vector.shape_cast %3 : vector<1x4x270xf32> to vector<4x270xf32>
    %cst_5 = arith.constant dense<0.000000e+00> : vector<8x270xf32>
    %5 = tpu.matmul %2, %4, %cst_5 {dimension_numbers = #tpu.dot_dimension_numbers<[1], [0], [0], [1], [0, 0, 1, 1], [], []>} : vector<8x4xf32>, vector<4x270xf32>, vector<8x270xf32> -> vector<8x270xf32>
    %6 = arith.addf %0, %5 : vector<8x270xf32>
    %c1 = arith.constant 1 : index
    %c0_6 = arith.constant 0 : index
    %c0_7 = arith.constant 0 : index
    %7 = vector.load %arg2[%c1, %c0_6, %c0_7] : memref<16x8x4xf32, #tpu.memory_space<vmem>>, vector<1x8x4xf32>
    %8 = vector.shape_cast %7 : vector<1x8x4xf32> to vector<8x4xf32>
    %c0_8 = arith.constant 0 : index
    %c0_9 = arith.constant 0 : index
    %c1_10 = arith.constant 1 : index
    %9 = vector.load %arg1[%c0_8, %c0_9, %c1_10] : memref<1x4x384xf32, #tpu.memory_space<vmem>>, vector<1x4x270xf32>
    %10 = vector.shape_cast %9 : vector<1x4x270xf32> to vector<4x270xf32>
    %cst_11 = arith.constant dense<0.000000e+00> : vector<8x270xf32>
    %11 = tpu.matmul %8, %10, %cst_11 {dimension_numbers = #tpu.dot_dimension_numbers<[1], [0], [0], [1], [0, 0, 1, 1], [], []>} : vector<8x4xf32>, vector<4x270xf32>, vector<8x270xf32> -> vector<8x270xf32>
    %12 = arith.addf %6, %11 : vector<8x270xf32>
    %c2 = arith.constant 2 : index
    %c0_12 = arith.constant 0 : index
    %c0_13 = arith.constant 0 : index
    %13 = vector.load %arg2[%c2, %c0_12, %c0_13] : memref<16x8x4xf32, #tpu.memory_space<vmem>>, vector<1x8x4xf32>
    %14 = vector.shape_cast %13 : vector<1x8x4xf32> to vector<8x4xf32>
    %c0_14 = arith.constant 0 : index
    %c0_15 = arith.constant 0 : index
    %c2_16 = arith.constant 2 : index
    %15 = vector.load %arg1[%c0_14, %c0_15, %c2_16] : memref<1x4x384xf32, #tpu.memory_space<vmem>>, vector<1x4x270xf32>
    %16 = vector.shape_cast %15 : vector<1x4x270xf32> to vector<4x270xf32>
    %cst_17 = arith.constant dense<0.000000e+00> : vector<8x270xf32>
    %17 = tpu.matmul %14, %16, %cst_17 {dimension_numbers = #tpu.dot_dimension_numbers<[1], [0], [0], [1], [0, 0, 1, 1], [], []>} : vector<8x4xf32>, vector<4x270xf32>, vector<8x270xf32> -> vector<8x270xf32>
    %18 = arith.addf %12, %17 : vector<8x270xf32>
    %c3 = arith.constant 3 : index
    %c0_18 = arith.constant 0 : index
    %c0_19 = arith.constant 0 : index
    %19 = vector.load %arg2[%c3, %c0_18, %c0_19] : memref<16x8x4xf32, #tpu.memory_space<vmem>>, vector<1x8x4xf32>
    %20 = vector.shape_cast %19 : vector<1x8x4xf32> to vector<8x4xf32>
    %c0_20 = arith.constant 0 : index
    %c0_21 = arith.constant 0 : index
    %c3_22 = arith.constant 3 : index
    %21 = vector.load %arg1[%c0_20, %c0_21, %c3_22] : memref<1x4x384xf32, #tpu.memory_space<vmem>>, vector<1x4x270xf32>
    %22 = vector.shape_cast %21 : vector<1x4x270xf32> to vector<4x270xf32>
    %cst_23 = arith.constant dense<0.000000e+00> : vector<8x270xf32>
    %23 = tpu.matmul %20, %22, %cst_23 {dimension_numbers = #tpu.dot_dimension_numbers<[1], [0], [0], [1], [0, 0, 1, 1], [], []>} : vector<8x4xf32>, vector<4x270xf32>, vector<8x270xf32> -> vector<8x270xf32>
    %24 = arith.addf %18, %23 : vector<8x270xf32>
    %c4 = arith.constant 4 : index
    %c0_24 = arith.constant 0 : index
    %c0_25 = arith.constant 0 : index
    %25 = vector.load %arg2[%c4, %c0_24, %c0_25] : memref<16x8x4xf32, #tpu.memory_space<vmem>>, vector<1x8x4xf32>
    %26 = vector.shape_cast %25 : vector<1x8x4xf32> to vector<8x4xf32>
    %c0_26 = arith.constant 0 : index
    %c0_27 = arith.constant 0 : index
    %c18 = arith.constant 18 : index
    %27 = vector.load %arg1[%c0_26, %c0_27, %c18] : memref<1x4x384xf32, #tpu.memory_space<vmem>>, vector<1x4x270xf32>
    %28 = vector.shape_cast %27 : vector<1x4x270xf32> to vector<4x270xf32>
    %cst_28 = arith.constant dense<0.000000e+00> : vector<8x270xf32>
    %29 = tpu.matmul %26, %28, %cst_28 {dimension_numbers = #tpu.dot_dimension_numbers<[1], [0], [0], [1], [0, 0, 1, 1], [], []>} : vector<8x4xf32>, vector<4x270xf32>, vector<8x270xf32> -> vector<8x270xf32>
    %30 = arith.addf %24, %29 : vector<8x270xf32>
    %c5 = arith.constant 5 : index
    %c0_29 = arith.constant 0 : index
    %c0_30 = arith.constant 0 : index
    %31 = vector.load %arg2[%c5, %c0_29, %c0_30] : memref<16x8x4xf32, #tpu.memory_space<vmem>>, vector<1x8x4xf32>
    %32 = vector.shape_cast %31 : vector<1x8x4xf32> to vector<8x4xf32>
    %c0_31 = arith.constant 0 : index
    %c0_32 = arith.constant 0 : index
    %c19 = arith.constant 19 : index
    %33 = vector.load %arg1[%c0_31, %c0_32, %c19] : memref<1x4x384xf32, #tpu.memory_space<vmem>>, vector<1x4x270xf32>
    %34 = vector.shape_cast %33 : vector<1x4x270xf32> to vector<4x270xf32>
    %cst_33 = arith.constant dense<0.000000e+00> : vector<8x270xf32>
    %35 = tpu.matmul %32, %34, %cst_33 {dimension_numbers = #tpu.dot_dimension_numbers<[1], [0], [0], [1], [0, 0, 1, 1], [], []>} : vector<8x4xf32>, vector<4x270xf32>, vector<8x270xf32> -> vector<8x270xf32>
    %36 = arith.addf %30, %35 : vector<8x270xf32>
    %c6 = arith.constant 6 : index
    %c0_34 = arith.constant 0 : index
    %c0_35 = arith.constant 0 : index
    %37 = vector.load %arg2[%c6, %c0_34, %c0_35] : memref<16x8x4xf32, #tpu.memory_space<vmem>>, vector<1x8x4xf32>
    %38 = vector.shape_cast %37 : vector<1x8x4xf32> to vector<8x4xf32>
    %c0_36 = arith.constant 0 : index
    %c0_37 = arith.constant 0 : index
    %c20 = arith.constant 20 : index
    %39 = vector.load %arg1[%c0_36, %c0_37, %c20] : memref<1x4x384xf32, #tpu.memory_space<vmem>>, vector<1x4x270xf32>
    %40 = vector.shape_cast %39 : vector<1x4x270xf32> to vector<4x270xf32>
    %cst_38 = arith.constant dense<0.000000e+00> : vector<8x270xf32>
    %41 = tpu.matmul %38, %40, %cst_38 {dimension_numbers = #tpu.dot_dimension_numbers<[1], [0], [0], [1], [0, 0, 1, 1], [], []>} : vector<8x4xf32>, vector<4x270xf32>, vector<8x270xf32> -> vector<8x270xf32>
    %42 = arith.addf %36, %41 : vector<8x270xf32>
    %c7 = arith.constant 7 : index
    %c0_39 = arith.constant 0 : index
    %c0_40 = arith.constant 0 : index
    %43 = vector.load %arg2[%c7, %c0_39, %c0_40] : memref<16x8x4xf32, #tpu.memory_space<vmem>>, vector<1x8x4xf32>
    %44 = vector.shape_cast %43 : vector<1x8x4xf32> to vector<8x4xf32>
    %c0_41 = arith.constant 0 : index
    %c0_42 = arith.constant 0 : index
    %c21 = arith.constant 21 : index
    %45 = vector.load %arg1[%c0_41, %c0_42, %c21] : memref<1x4x384xf32, #tpu.memory_space<vmem>>, vector<1x4x270xf32>
    %46 = vector.shape_cast %45 : vector<1x4x270xf32> to vector<4x270xf32>
    %cst_43 = arith.constant dense<0.000000e+00> : vector<8x270xf32>
    %47 = tpu.matmul %44, %46, %cst_43 {dimension_numbers = #tpu.dot_dimension_numbers<[1], [0], [0], [1], [0, 0, 1, 1], [], []>} : vector<8x4xf32>, vector<4x270xf32>, vector<8x270xf32> -> vector<8x270xf32>
    %48 = arith.addf %42, %47 : vector<8x270xf32>
    %c8 = arith.constant 8 : index
    %c0_44 = arith.constant 0 : index
    %c0_45 = arith.constant 0 : index
    %49 = vector.load %arg2[%c8, %c0_44, %c0_45] : memref<16x8x4xf32, #tpu.memory_space<vmem>>, vector<1x8x4xf32>
    %50 = vector.shape_cast %49 : vector<1x8x4xf32> to vector<8x4xf32>
    %c0_46 = arith.constant 0 : index
    %c0_47 = arith.constant 0 : index
    %c36 = arith.constant 36 : index
    %51 = vector.load %arg1[%c0_46, %c0_47, %c36] : memref<1x4x384xf32, #tpu.memory_space<vmem>>, vector<1x4x270xf32>
    %52 = vector.shape_cast %51 : vector<1x4x270xf32> to vector<4x270xf32>
    %cst_48 = arith.constant dense<0.000000e+00> : vector<8x270xf32>
    %53 = tpu.matmul %50, %52, %cst_48 {dimension_numbers = #tpu.dot_dimension_numbers<[1], [0], [0], [1], [0, 0, 1, 1], [], []>} : vector<8x4xf32>, vector<4x270xf32>, vector<8x270xf32> -> vector<8x270xf32>
    %54 = arith.addf %48, %53 : vector<8x270xf32>
    %c9 = arith.constant 9 : index
    %c0_49 = arith.constant 0 : index
    %c0_50 = arith.constant 0 : index
    %55 = vector.load %arg2[%c9, %c0_49, %c0_50] : memref<16x8x4xf32, #tpu.memory_space<vmem>>, vector<1x8x4xf32>
    %56 = vector.shape_cast %55 : vector<1x8x4xf32> to vector<8x4xf32>
    %c0_51 = arith.constant 0 : index
    %c0_52 = arith.constant 0 : index
    %c37 = arith.constant 37 : index
    %57 = vector.load %arg1[%c0_51, %c0_52, %c37] : memref<1x4x384xf32, #tpu.memory_space<vmem>>, vector<1x4x270xf32>
    %58 = vector.shape_cast %57 : vector<1x4x270xf32> to vector<4x270xf32>
    %cst_53 = arith.constant dense<0.000000e+00> : vector<8x270xf32>
    %59 = tpu.matmul %56, %58, %cst_53 {dimension_numbers = #tpu.dot_dimension_numbers<[1], [0], [0], [1], [0, 0, 1, 1], [], []>} : vector<8x4xf32>, vector<4x270xf32>, vector<8x270xf32> -> vector<8x270xf32>
    %60 = arith.addf %54, %59 : vector<8x270xf32>
    %c10 = arith.constant 10 : index
    %c0_54 = arith.constant 0 : index
    %c0_55 = arith.constant 0 : index
    %61 = vector.load %arg2[%c10, %c0_54, %c0_55] : memref<16x8x4xf32, #tpu.memory_space<vmem>>, vector<1x8x4xf32>
    %62 = vector.shape_cast %61 : vector<1x8x4xf32> to vector<8x4xf32>
    %c0_56 = arith.constant 0 : index
    %c0_57 = arith.constant 0 : index
    %c38 = arith.constant 38 : index
    %63 = vector.load %arg1[%c0_56, %c0_57, %c38] : memref<1x4x384xf32, #tpu.memory_space<vmem>>, vector<1x4x270xf32>
    %64 = vector.shape_cast %63 : vector<1x4x270xf32> to vector<4x270xf32>
    %cst_58 = arith.constant dense<0.000000e+00> : vector<8x270xf32>
    %65 = tpu.matmul %62, %64, %cst_58 {dimension_numbers = #tpu.dot_dimension_numbers<[1], [0], [0], [1], [0, 0, 1, 1], [], []>} : vector<8x4xf32>, vector<4x270xf32>, vector<8x270xf32> -> vector<8x270xf32>
    %66 = arith.addf %60, %65 : vector<8x270xf32>
    %c11 = arith.constant 11 : index
    %c0_59 = arith.constant 0 : index
    %c0_60 = arith.constant 0 : index
    %67 = vector.load %arg2[%c11, %c0_59, %c0_60] : memref<16x8x4xf32, #tpu.memory_space<vmem>>, vector<1x8x4xf32>
    %68 = vector.shape_cast %67 : vector<1x8x4xf32> to vector<8x4xf32>
    %c0_61 = arith.constant 0 : index
    %c0_62 = arith.constant 0 : index
    %c39 = arith.constant 39 : index
    %69 = vector.load %arg1[%c0_61, %c0_62, %c39] : memref<1x4x384xf32, #tpu.memory_space<vmem>>, vector<1x4x270xf32>
    %70 = vector.shape_cast %69 : vector<1x4x270xf32> to vector<4x270xf32>
    %cst_63 = arith.constant dense<0.000000e+00> : vector<8x270xf32>
    %71 = tpu.matmul %68, %70, %cst_63 {dimension_numbers = #tpu.dot_dimension_numbers<[1], [0], [0], [1], [0, 0, 1, 1], [], []>} : vector<8x4xf32>, vector<4x270xf32>, vector<8x270xf32> -> vector<8x270xf32>
    %72 = arith.addf %66, %71 : vector<8x270xf32>
    %c12 = arith.constant 12 : index
    %c0_64 = arith.constant 0 : index
    %c0_65 = arith.constant 0 : index
    %73 = vector.load %arg2[%c12, %c0_64, %c0_65] : memref<16x8x4xf32, #tpu.memory_space<vmem>>, vector<1x8x4xf32>
    %74 = vector.shape_cast %73 : vector<1x8x4xf32> to vector<8x4xf32>
    %c0_66 = arith.constant 0 : index
    %c0_67 = arith.constant 0 : index
    %c54 = arith.constant 54 : index
    %75 = vector.load %arg1[%c0_66, %c0_67, %c54] : memref<1x4x384xf32, #tpu.memory_space<vmem>>, vector<1x4x270xf32>
    %76 = vector.shape_cast %75 : vector<1x4x270xf32> to vector<4x270xf32>
    %cst_68 = arith.constant dense<0.000000e+00> : vector<8x270xf32>
    %77 = tpu.matmul %74, %76, %cst_68 {dimension_numbers = #tpu.dot_dimension_numbers<[1], [0], [0], [1], [0, 0, 1, 1], [], []>} : vector<8x4xf32>, vector<4x270xf32>, vector<8x270xf32> -> vector<8x270xf32>
    %78 = arith.addf %72, %77 : vector<8x270xf32>
    %c13 = arith.constant 13 : index
    %c0_69 = arith.constant 0 : index
    %c0_70 = arith.constant 0 : index
    %79 = vector.load %arg2[%c13, %c0_69, %c0_70] : memref<16x8x4xf32, #tpu.memory_space<vmem>>, vector<1x8x4xf32>
    %80 = vector.shape_cast %79 : vector<1x8x4xf32> to vector<8x4xf32>
    %c0_71 = arith.constant 0 : index
    %c0_72 = arith.constant 0 : index
    %c55 = arith.constant 55 : index
    %81 = vector.load %arg1[%c0_71, %c0_72, %c55] : memref<1x4x384xf32, #tpu.memory_space<vmem>>, vector<1x4x270xf32>
    %82 = vector.shape_cast %81 : vector<1x4x270xf32> to vector<4x270xf32>
    %cst_73 = arith.constant dense<0.000000e+00> : vector<8x270xf32>
    %83 = tpu.matmul %80, %82, %cst_73 {dimension_numbers = #tpu.dot_dimension_numbers<[1], [0], [0], [1], [0, 0, 1, 1], [], []>} : vector<8x4xf32>, vector<4x270xf32>, vector<8x270xf32> -> vector<8x270xf32>
    %84 = arith.addf %78, %83 : vector<8x270xf32>
    %c14 = arith.constant 14 : index
    %c0_74 = arith.constant 0 : index
    %c0_75 = arith.constant 0 : index
    %85 = vector.load %arg2[%c14, %c0_74, %c0_75] : memref<16x8x4xf32, #tpu.memory_space<vmem>>, vector<1x8x4xf32>
    %86 = vector.shape_cast %85 : vector<1x8x4xf32> to vector<8x4xf32>
    %c0_76 = arith.constant 0 : index
    %c0_77 = arith.constant 0 : index
    %c56 = arith.constant 56 : index
    %87 = vector.load %arg1[%c0_76, %c0_77, %c56] : memref<1x4x384xf32, #tpu.memory_space<vmem>>, vector<1x4x270xf32>
    %88 = vector.shape_cast %87 : vector<1x4x270xf32> to vector<4x270xf32>
    %cst_78 = arith.constant dense<0.000000e+00> : vector<8x270xf32>
    %89 = tpu.matmul %86, %88, %cst_78 {dimension_numbers = #tpu.dot_dimension_numbers<[1], [0], [0], [1], [0, 0, 1, 1], [], []>} : vector<8x4xf32>, vector<4x270xf32>, vector<8x270xf32> -> vector<8x270xf32>
    %90 = arith.addf %84, %89 : vector<8x270xf32>
    %c15 = arith.constant 15 : index
    %c0_79 = arith.constant 0 : index
    %c0_80 = arith.constant 0 : index
    %91 = vector.load %arg2[%c15, %c0_79, %c0_80] : memref<16x8x4xf32, #tpu.memory_space<vmem>>, vector<1x8x4xf32>
    %92 = vector.shape_cast %91 : vector<1x8x4xf32> to vector<8x4xf32>
    %c0_81 = arith.constant 0 : index
    %c0_82 = arith.constant 0 : index
    %c57 = arith.constant 57 : index
    %93 = vector.load %arg1[%c0_81, %c0_82, %c57] : memref<1x4x384xf32, #tpu.memory_space<vmem>>, vector<1x4x270xf32>
    %94 = vector.shape_cast %93 : vector<1x4x270xf32> to vector<4x270xf32>
    %cst_83 = arith.constant dense<0.000000e+00> : vector<8x270xf32>
    %95 = tpu.matmul %92, %94, %cst_83 {dimension_numbers = #tpu.dot_dimension_numbers<[1], [0], [0], [1], [0, 0, 1, 1], [], []>} : vector<8x4xf32>, vector<4x270xf32>, vector<8x270xf32> -> vector<8x270xf32>
    %96 = arith.addf %90, %95 : vector<8x270xf32>
    %c0_84 = arith.constant 0 : index
    %c0_85 = arith.constant 0 : index
    %c0_86 = arith.constant 0 : index
    %97 = vector.load %arg3[%c0_84, %c0_85, %c0_86] : memref<1x8x1xf32, #tpu.memory_space<vmem>>, vector<1x8x1xf32>
    %98 = vector.shape_cast %97 : vector<1x8x1xf32> to vector<8x1xf32>
    %99 = vector.broadcast %98 : vector<8x1xf32> to vector<8x270xf32>
    %100 = arith.addf %96, %99 : vector<8x270xf32>
    %cst_87 = arith.constant 0.000000e+00 : f32
    %101 = vector.broadcast %cst_87 : f32 to vector<8x270xf32>
    %102 = arith.cmpf oge, %100, %101 : vector<8x270xf32>
    %cst_88 = arith.constant 2.000000e-01 : f32
    %103 = vector.broadcast %cst_88 : f32 to vector<8x270xf32>
    %104 = arith.mulf %103, %100 : vector<8x270xf32>
    %105 = arith.select %102, %100, %104 : vector<8x270xi1>, vector<8x270xf32>
    %106 = vector.extract_strided_slice %105 {offsets = [0, 18], sizes = [8, 18], strides = [1, 1]} : vector<8x270xf32> to vector<8x18xf32>
    %107 = vector.extract_strided_slice %105 {offsets = [0, 234], sizes = [8, 18], strides = [1, 1]} : vector<8x270xf32> to vector<8x18xf32>
    %108 = tpu.concatenate %106, %105, %107 in 1 : vector<8x18xf32>, vector<8x270xf32>, vector<8x18xf32> -> vector<8x306xf32>
    %109 = vector.extract_strided_slice %108 {offsets = [0, 0], sizes = [8, 270], strides = [1, 1]} : vector<8x306xf32> to vector<8x270xf32>
    %cst_89 = arith.constant 2.500000e-01 : f32
    %110 = vector.broadcast %cst_89 : f32 to vector<8x270xf32>
    %111 = arith.mulf %110, %109 : vector<8x270xf32>
    %112 = vector.extract_strided_slice %108 {offsets = [0, 18], sizes = [8, 270], strides = [1, 1]} : vector<8x306xf32> to vector<8x270xf32>
    %cst_90 = arith.constant 5.000000e-01 : f32
    %113 = vector.broadcast %cst_90 : f32 to vector<8x270xf32>
    %114 = arith.mulf %113, %112 : vector<8x270xf32>
    %115 = arith.addf %111, %114 : vector<8x270xf32>
    %116 = vector.extract_strided_slice %108 {offsets = [0, 36], sizes = [8, 270], strides = [1, 1]} : vector<8x306xf32> to vector<8x270xf32>
    %cst_91 = arith.constant 2.500000e-01 : f32
    %117 = vector.broadcast %cst_91 : f32 to vector<8x270xf32>
    %118 = arith.mulf %117, %116 : vector<8x270xf32>
    %119 = arith.addf %115, %118 : vector<8x270xf32>
    %c0_92 = arith.constant 0 : index
    %c0_93 = arith.constant 0 : index
    %120 = vector.load %arg4[%c0_92, %c0_93] : memref<15x8xf32, #tpu.memory_space<vmem>>, vector<15x8xf32>
    %121 = vector.extract_strided_slice %119 {offsets = [0, 0], sizes = [8, 15], strides = [1, 1]} : vector<8x270xf32> to vector<8x15xf32>
    %cst_94 = arith.constant dense<0.000000e+00> : vector<8x8xf32>
    %122 = tpu.matmul %121, %120, %cst_94 {dimension_numbers = #tpu.dot_dimension_numbers<[1], [0], [0], [1], [0, 0, 1, 1], [], []>} : vector<8x15xf32>, vector<15x8xf32>, vector<8x8xf32> -> vector<8x8xf32>
    %c0_95 = arith.constant 0 : index
    %c0_96 = arith.constant 0 : index
    %c0_97 = arith.constant 0 : index
    %123 = vector.load %arg5[%c0_95, %c0_96, %c0_97] : memref<1x8x64xf32, #tpu.memory_space<vmem>>, vector<1x8x8xf32>
    %124 = vector.shape_cast %123 : vector<1x8x8xf32> to vector<8x8xf32>
    %125 = vector.shape_cast %122 : vector<8x8xf32> to vector<1x8x8xf32>
    tpu.vector_store %arg5[%c0_95, %c0_96, %c0_97], %125 {strides = array<i32>} : memref<1x8x64xf32, #tpu.memory_space<vmem>>, vector<1x8x8xf32>,
    %126 = vector.extract_strided_slice %119 {offsets = [0, 36], sizes = [8, 15], strides = [1, 1]} : vector<8x270xf32> to vector<8x15xf32>
    %cst_98 = arith.constant dense<0.000000e+00> : vector<8x8xf32>
    %127 = tpu.matmul %126, %120, %cst_98 {dimension_numbers = #tpu.dot_dimension_numbers<[1], [0], [0], [1], [0, 0, 1, 1], [], []>} : vector<8x15xf32>, vector<15x8xf32>, vector<8x8xf32> -> vector<8x8xf32>
    %c0_99 = arith.constant 0 : index
    %c0_100 = arith.constant 0 : index
    %c8_101 = arith.constant 8 : index
    %128 = vector.load %arg5[%c0_99, %c0_100, %c8_101] : memref<1x8x64xf32, #tpu.memory_space<vmem>>, vector<1x8x8xf32>
    %129 = vector.shape_cast %128 : vector<1x8x8xf32> to vector<8x8xf32>
    %130 = vector.shape_cast %127 : vector<8x8xf32> to vector<1x8x8xf32>
    tpu.vector_store %arg5[%c0_99, %c0_100, %c8_101], %130 {strides = array<i32>} : memref<1x8x64xf32, #tpu.memory_space<vmem>>, vector<1x8x8xf32>,
    %131 = vector.extract_strided_slice %119 {offsets = [0, 72], sizes = [8, 15], strides = [1, 1]} : vector<8x270xf32> to vector<8x15xf32>
    %cst_102 = arith.constant dense<0.000000e+00> : vector<8x8xf32>
    %132 = tpu.matmul %131, %120, %cst_102 {dimension_numbers = #tpu.dot_dimension_numbers<[1], [0], [0], [1], [0, 0, 1, 1], [], []>} : vector<8x15xf32>, vector<15x8xf32>, vector<8x8xf32> -> vector<8x8xf32>
    %c0_103 = arith.constant 0 : index
    %c0_104 = arith.constant 0 : index
    %c16 = arith.constant 16 : index
    %133 = vector.load %arg5[%c0_103, %c0_104, %c16] : memref<1x8x64xf32, #tpu.memory_space<vmem>>, vector<1x8x8xf32>
    %134 = vector.shape_cast %133 : vector<1x8x8xf32> to vector<8x8xf32>
    %135 = vector.shape_cast %132 : vector<8x8xf32> to vector<1x8x8xf32>
    tpu.vector_store %arg5[%c0_103, %c0_104, %c16], %135 {strides = array<i32>} : memref<1x8x64xf32, #tpu.memory_space<vmem>>, vector<1x8x8xf32>,
    %136 = vector.extract_strided_slice %119 {offsets = [0, 108], sizes = [8, 15], strides = [1, 1]} : vector<8x270xf32> to vector<8x15xf32>
    %cst_105 = arith.constant dense<0.000000e+00> : vector<8x8xf32>
    %137 = tpu.matmul %136, %120, %cst_105 {dimension_numbers = #tpu.dot_dimension_numbers<[1], [0], [0], [1], [0, 0, 1, 1], [], []>} : vector<8x15xf32>, vector<15x8xf32>, vector<8x8xf32> -> vector<8x8xf32>
    %c0_106 = arith.constant 0 : index
    %c0_107 = arith.constant 0 : index
    %c24 = arith.constant 24 : index
    %138 = vector.load %arg5[%c0_106, %c0_107, %c24] : memref<1x8x64xf32, #tpu.memory_space<vmem>>, vector<1x8x8xf32>
    %139 = vector.shape_cast %138 : vector<1x8x8xf32> to vector<8x8xf32>
    %140 = vector.shape_cast %137 : vector<8x8xf32> to vector<1x8x8xf32>
    tpu.vector_store %arg5[%c0_106, %c0_107, %c24], %140 {strides = array<i32>} : memref<1x8x64xf32, #tpu.memory_space<vmem>>, vector<1x8x8xf32>,
    %141 = vector.extract_strided_slice %119 {offsets = [0, 144], sizes = [8, 15], strides = [1, 1]} : vector<8x270xf32> to vector<8x15xf32>
    %cst_108 = arith.constant dense<0.000000e+00> : vector<8x8xf32>
    %142 = tpu.matmul %141, %120, %cst_108 {dimension_numbers = #tpu.dot_dimension_numbers<[1], [0], [0], [1], [0, 0, 1, 1], [], []>} : vector<8x15xf32>, vector<15x8xf32>, vector<8x8xf32> -> vector<8x8xf32>
    %c0_109 = arith.constant 0 : index
    %c0_110 = arith.constant 0 : index
    %c32 = arith.constant 32 : index
    %143 = vector.load %arg5[%c0_109, %c0_110, %c32] : memref<1x8x64xf32, #tpu.memory_space<vmem>>, vector<1x8x8xf32>
    %144 = vector.shape_cast %143 : vector<1x8x8xf32> to vector<8x8xf32>
    %145 = vector.shape_cast %142 : vector<8x8xf32> to vector<1x8x8xf32>
    tpu.vector_store %arg5[%c0_109, %c0_110, %c32], %145 {strides = array<i32>} : memref<1x8x64xf32, #tpu.memory_space<vmem>>, vector<1x8x8xf32>,
    %146 = vector.extract_strided_slice %119 {offsets = [0, 180], sizes = [8, 15], strides = [1, 1]} : vector<8x270xf32> to vector<8x15xf32>
    %cst_111 = arith.constant dense<0.000000e+00> : vector<8x8xf32>
    %147 = tpu.matmul %146, %120, %cst_111 {dimension_numbers = #tpu.dot_dimension_numbers<[1], [0], [0], [1], [0, 0, 1, 1], [], []>} : vector<8x15xf32>, vector<15x8xf32>, vector<8x8xf32> -> vector<8x8xf32>
    %c0_112 = arith.constant 0 : index
    %c0_113 = arith.constant 0 : index
    %c40 = arith.constant 40 : index
    %148 = vector.load %arg5[%c0_112, %c0_113, %c40] : memref<1x8x64xf32, #tpu.memory_space<vmem>>, vector<1x8x8xf32>
    %149 = vector.shape_cast %148 : vector<1x8x8xf32> to vector<8x8xf32>
    %150 = vector.shape_cast %147 : vector<8x8xf32> to vector<1x8x8xf32>
    tpu.vector_store %arg5[%c0_112, %c0_113, %c40], %150 {strides = array<i32>} : memref<1x8x64xf32, #tpu.memory_space<vmem>>, vector<1x8x8xf32>,
    %151 = vector.extract_strided_slice %119 {offsets = [0, 216], sizes = [8, 15], strides = [1, 1]} : vector<8x270xf32> to vector<8x15xf32>
    %cst_114 = arith.constant dense<0.000000e+00> : vector<8x8xf32>
    %152 = tpu.matmul %151, %120, %cst_114 {dimension_numbers = #tpu.dot_dimension_numbers<[1], [0], [0], [1], [0, 0, 1, 1], [], []>} : vector<8x15xf32>, vector<15x8xf32>, vector<8x8xf32> -> vector<8x8xf32>
    %c0_115 = arith.constant 0 : index
    %c0_116 = arith.constant 0 : index
    %c48 = arith.constant 48 : index
    %153 = vector.load %arg5[%c0_115, %c0_116, %c48] : memref<1x8x64xf32, #tpu.memory_space<vmem>>, vector<1x8x8xf32>
    %154 = vector.shape_cast %153 : vector<1x8x8xf32> to vector<8x8xf32>
    %155 = vector.shape_cast %152 : vector<8x8xf32> to vector<1x8x8xf32>
    tpu.vector_store %arg5[%c0_115, %c0_116, %c48], %155 {strides = array<i32>} : memref<1x8x64xf32, #tpu.memory_space<vmem>>, vector<1x8x8xf32>,
    %156 = vector.extract_strided_slice %119 {offsets = [0, 252], sizes = [8, 15], strides = [1, 1]} : vector<8x270xf32> to vector<8x15xf32>
    %cst_117 = arith.constant dense<0.000000e+00> : vector<8x8xf32>
    %157 = tpu.matmul %156, %120, %cst_117 {dimension_numbers = #tpu.dot_dimension_numbers<[1], [0], [0], [1], [0, 0, 1, 1], [], []>} : vector<8x15xf32>, vector<15x8xf32>, vector<8x8xf32> -> vector<8x8xf32>
    %c0_118 = arith.constant 0 : index
    %c0_119 = arith.constant 0 : index
    %c56_120 = arith.constant 56 : index
    %158 = vector.load %arg5[%c0_118, %c0_119, %c56_120] : memref<1x8x64xf32, #tpu.memory_space<vmem>>, vector<1x8x8xf32>
    %159 = vector.shape_cast %158 : vector<1x8x8xf32> to vector<8x8xf32>
    %160 = vector.shape_cast %157 : vector<8x8xf32> to vector<1x8x8xf32>
    tpu.vector_store %arg5[%c0_118, %c0_119, %c56_120], %160 {strides = array<i32>} : memref<1x8x64xf32, #tpu.memory_space<vmem>>, vector<1x8x8xf32>,
    return
  }
  func.func @transform_0(%arg0: i32) -> (i32, i32, i32) {
    %c0_i32 = arith.constant 0 : i32
    %c0_i32_0 = arith.constant 0 : i32
    %c0_i32_1 = arith.constant 0 : i32
    return %arg0, %c0_i32, %c0_i32_0 : i32, i32, i32
  }
  func.func @transform_1(%arg0: i32) -> (i32, i32, i32) {
    %c0_i32 = arith.constant 0 : i32
    %c0_i32_0 = arith.constant 0 : i32
    %c0_i32_1 = arith.constant 0 : i32
    %c0_i32_2 = arith.constant 0 : i32
    return %c0_i32, %c0_i32_0, %c0_i32_1 : i32, i32, i32
  }
  func.func @transform_2(%arg0: i32) -> (i32, i32, i32) {
    %c0_i32 = arith.constant 0 : i32
    %c0_i32_0 = arith.constant 0 : i32
    %c0_i32_1 = arith.constant 0 : i32
    return %arg0, %c0_i32, %c0_i32_0 : i32, i32, i32
  }
  func.func @transform_3(%arg0: i32) -> (i32, i32) {
    %c0_i32 = arith.constant 0 : i32
    %c0_i32_0 = arith.constant 0 : i32
    %c0_i32_1 = arith.constant 0 : i32
    return %c0_i32, %c0_i32_0 : i32, i32
  }
  func.func @transform_4(%arg0: i32) -> (i32, i32, i32) {
    %c0_i32 = arith.constant 0 : i32
    %c0_i32_0 = arith.constant 0 : i32
    %c0_i32_1 = arith.constant 0 : i32
    return %arg0, %c0_i32, %c0_i32_0 : i32, i32, i32
  }
}

</mosaic_0001>

<llo_original>
// kernel: tpu_custom_call.1
$region0: #{tpu_custom_call.1}
  #allocation0 [shape = 'u32[]', space=smem, size = 0x4, offset = 0x4, fixed_abs, tag = 'smem constant byte address 0x4 - core index']
  #allocation1 [shape = 'u32[144,128]{1,0:T(1,128)}', space=vmem, size = 0x12000, scoped, tag = 'internal scratch']
  %s0 = inlined_call_operand.vmem [shape: f32[2,4,384], index: 0, kind: input, shape index: {}]
  %s1 = inlined_call_operand.vmem [shape: f32[16,8,4], index: 1, kind: input, shape index: {}]
  %s2 = inlined_call_operand.vmem [shape: f32[2,8,1], index: 2, kind: input, shape index: {}]
  %s3 = inlined_call_operand.vmem [shape: f32[15,8], index: 3, kind: input, shape index: {}]
  %s4 = inlined_call_operand.hbm [shape: f32[2,8,64], index: 4, kind: output, shape index: {}]
  %s5 = sld [smem:[#allocation0]]
  $region49: #{tpu_custom_call.1} parent=0
    _
  %s7 = ssub.s32 1, %s5
  %s8 = scalar_select 0, %s7, %s5
  $region1: #{tpu_custom_call.1} parent=0
    #allocation2 [shape = 'u8[8192]{0}', space=vmem, size = 0x2000, scoped, tag = 'output window, operand 0']
    #allocation3 [shape = 's32[2]{0}', space=sflag, size = 0x8, scoped, tag = 'scoped memory for tpu_custom_call.1']
    %9 = vsyncpa [#allocation3], 0
    %s10 = scalar_lea.sflag [#allocation3], 1
    %11 = vsyncpa %s10, 0
    loop: start=0, step=1, limit=4
    $region2: #{tpu_custom_call.1} parent=1 // loop_pre_header
      _
    $region3: #{tpu_custom_call.1} parent=1 // loop_header
      %s13 = sphi 0, %s17
      %p14 = scmp.ge.s32.totalorder %s13, 4
      %s23 = sphi 0, %s25
      %s26 = sphi 0, %s23
      %s27 = sphi 0, %s26
      %s43 = sphi 0, %s27
      %s47 = sphi 0, %s47
      %s49 = sphi 0, %s47
      %s50 = sphi 0, %s49
      %s64 = sphi 0, %s50
      %s70 = sphi 0, %s72
      %s73 = sphi 0, %s70
      %s74 = sphi 0, %s73
      %s90 = sphi 0, %s74
      %s94 = sphi 0, %s94
      %s96 = sphi 0, %s94
      %s97 = sphi 0, %s96
      %s111 = sphi 0, %s97
      %s117 = sphi 0, %s119
      %s120 = sphi 0, %s117
      %s121 = sphi 0, %s120
      %s137 = sphi 0, %s121
    $region4: #{tpu_custom_call.1} parent=1 // loop_header_branch
      %16 = sbr.rel (%p14) target = $region8
    $region5: #{tpu_custom_call.1} parent=1 // loop_body
      %s18 = ssub.s32 %s13, 1
      %s19 = ssub.s32 %s13, 2
      %s20 = sadd.s32 %s13, 1
      %s21 = ssub.s32 %s13, %s20
      %p22 = scmp.eq.s32.totalorder %s21, 0
      %s24 = sadd.s32 %s23, 1
      %s25 = scalar_select %p22, %s23, %s24
      %p28 = pneg %p22
      %p29 = scmp.eq.s32.totalorder %s13, 1
      %p30 = por %p28, %p29
      %p31 = scmp.ne.s32.totalorder %s23, %s26
      %p32 = scmp.eq.s32.totalorder %s13, 0
      %p33 = por %p31, %p32
      %p34 = scmp.ne.s32.totalorder %s23, %s26
      %p35 = scmp.eq.s32.totalorder %s18, 1
      %p36 = por %p34, %p35
      %p37 = scmp.ne.s32.totalorder %s26, %s27
      %p38 = scmp.eq.s32.totalorder %s18, 0
      %p39 = por %p37, %p38
      %p40 = scmp.ne.s32.totalorder %s26, %s27
      %p41 = scmp.eq.s32.totalorder %s19, 1
      %p42 = por %p40, %p41
      %p44 = scmp.ne.s32.totalorder %s27, %s43
      %p45 = scmp.eq.s32.totalorder %s19, 0
      %p46 = por %p44, %p45
      %s48 = sadd.s32 %s47, 1
      %p51 = scmp.eq.s32.totalorder %s13, 1
      %p52 = scmp.ne.s32.totalorder %s47, %s49
      %p53 = scmp.eq.s32.totalorder %s13, 0
      %p54 = por %p52, %p53
      %p55 = scmp.ne.s32.totalorder %s47, %s49
      %p56 = scmp.eq.s32.totalorder %s18, 1
      %p57 = por %p55, %p56
      %p58 = scmp.ne.s32.totalorder %s49, %s50
      %p59 = scmp.eq.s32.totalorder %s18, 0
      %p60 = por %p58, %p59
      %p61 = scmp.ne.s32.totalorder %s49, %s50
      %p62 = scmp.eq.s32.totalorder %s19, 1
      %p63 = por %p61, %p62
      %p65 = scmp.ne.s32.totalorder %s50, %s64
      %p66 = scmp.eq.s32.totalorder %s19, 0
      %p67 = por %p65, %p66
      %s68 = ssub.s32 %s13, %s20
      %p69 = scmp.eq.s32.totalorder %s68, 0
      %s71 = sadd.s32 %s70, 1
      %s72 = scalar_select %p69, %s70, %s71
      %p75 = pneg %p69
      %p76 = scmp.eq.s32.totalorder %s13, 1
      %p77 = por %p75, %p76
      %p78 = scmp.ne.s32.totalorder %s70, %s73
      %p79 = scmp.eq.s32.totalorder %s13, 0
      %p80 = por %p78, %p79
      %p81 = scmp.ne.s32.totalorder %s70, %s73
      %p82 = scmp.eq.s32.totalorder %s18, 1
      %p83 = por %p81, %p82
      %p84 = scmp.ne.s32.totalorder %s73, %s74
      %p85 = scmp.eq.s32.totalorder %s18, 0
      %p86 = por %p84, %p85
      %p87 = scmp.ne.s32.totalorder %s73, %s74
      %p88 = scmp.eq.s32.totalorder %s19, 1
      %p89 = por %p87, %p88
      %p91 = scmp.ne.s32.totalorder %s74, %s90
      %p92 = scmp.eq.s32.totalorder %s19, 0
      %p93 = por %p91, %p92
      %s95 = sadd.s32 %s94, 1
      %p98 = scmp.eq.s32.totalorder %s13, 1
      %p99 = scmp.ne.s32.totalorder %s94, %s96
      %p100 = scmp.eq.s32.totalorder %s13, 0
      %p101 = por %p99, %p100
      %p102 = scmp.ne.s32.totalorder %s94, %s96
      %p103 = scmp.eq.s32.totalorder %s18, 1
      %p104 = por %p102, %p103
      %p105 = scmp.ne.s32.totalorder %s96, %s97
      %p106 = scmp.eq.s32.totalorder %s18, 0
      %p107 = por %p105, %p106
      %p108 = scmp.ne.s32.totalorder %s96, %s97
      %p109 = scmp.eq.s32.totalorder %s19, 1
      %p110 = por %p108, %p109
      %p112 = scmp.ne.s32.totalorder %s97, %s111
      %p113 = scmp.eq.s32.totalorder %s19, 0
      %p114 = por %p112, %p113
      %s115 = ssub.s32 %s13, %s20
      %p116 = scmp.eq.s32.totalorder %s115, 0
      %s118 = sadd.s32 %s117, 1
      %s119 = scalar_select %p116, %s117, %s118
      %p122 = pneg %p116
      %p123 = scmp.eq.s32.totalorder %s13, 1
      %p124 = por %p122, %p123
      %p125 = scmp.ne.s32.totalorder %s117, %s120
      %p126 = scmp.eq.s32.totalorder %s13, 0
      %p127 = por %p125, %p126
      %p128 = scmp.ne.s32.totalorder %s117, %s120
      %p129 = scmp.eq.s32.totalorder %s18, 1
      %p130 = por %p128, %p129
      %p131 = scmp.ne.s32.totalorder %s120, %s121
      %p132 = scmp.eq.s32.totalorder %s18, 0
      %p133 = por %p131, %p132
      %p134 = scmp.ne.s32.totalorder %s120, %s121
      %p135 = scmp.eq.s32.totalorder %s19, 1
      %p136 = por %p134, %p135
      %p138 = scmp.ne.s32.totalorder %s121, %s137
      %p139 = scmp.eq.s32.totalorder %s19, 0
      %p140 = por %p138, %p139
      %p141 = scmp.le.s32.totalorder 1, %s13
      %p142 = scmp.lt.s32.totalorder %s13, 3
      %p143 = pnand %p141, %p142
      %p144 = pneg %p143
      // Predicated region
      $region9: #{tpu_custom_call.1} parent=5 // pred_check
        _
      $region10: #{tpu_custom_call.1} parent=5 // pred_check_branch
        %146 = sbr.rel (%p143) target = $region12
      $region11: #{tpu_custom_call.1} parent=5 // pred_region
        %s147 = ssub.s32 %s13, 1
        // Predicated region
        $region13: #{tpu_custom_call.1} parent=11 // pred_check
          %p148 = pneg %p60
        $region14: #{tpu_custom_call.1} parent=11 // pred_check_branch
          %150 = sbr.rel (%p148) target = $region16
        $region15: #{tpu_custom_call.1} parent=11 // pred_region
          _
        $region16: #{tpu_custom_call.1} parent=11 // pred_fallthru
          _
        // Predicated region
        $region17: #{tpu_custom_call.1} parent=11 // pred_check
          %p151 = pneg %p107
        $region18: #{tpu_custom_call.1} parent=11 // pred_check_branch
          %153 = sbr.rel (%p151) target = $region20
        $region19: #{tpu_custom_call.1} parent=11 // pred_region
          _
        $region20: #{tpu_custom_call.1} parent=11 // pred_fallthru
          _
      $region12: #{tpu_custom_call.1} parent=5 // pred_fallthru
        _
      %p154 = scmp.lt.s32.totalorder %s13, 2
      // Predicated region
      $region21: #{tpu_custom_call.1} parent=5 // pred_check
        %p155 = pneg %p154
      $region22: #{tpu_custom_call.1} parent=5 // pred_check_branch
        %157 = sbr.rel (%p155) target = $region24
      $region23: #{tpu_custom_call.1} parent=5 // pred_region
        // Predicated region
        $region25: #{tpu_custom_call.1} parent=23 // pred_check
          %p158 = pneg %p33
        $region26: #{tpu_custom_call.1} parent=23 // pred_check_branch
          %160 = sbr.rel (%p158) target = $region28
        $region27: #{tpu_custom_call.1} parent=23 // pred_region
          %p161 = scmp.lt.s32.totalorder %s13, 1
          %s162 = scalar_select %p161, %s13, 1
          %s163 = smul.addr %s162, 3
          %s164 = smul.addr %s163, 4
          %s165 = scalar_lea.vmem %s0, %s164
        $region28: #{tpu_custom_call.1} parent=23 // pred_fallthru
          _
        // Predicated region
        $region29: #{tpu_custom_call.1} parent=23 // pred_check
          %p166 = pneg %p80
        $region30: #{tpu_custom_call.1} parent=23 // pred_check_branch
          %168 = sbr.rel (%p166) target = $region32
        $region31: #{tpu_custom_call.1} parent=23 // pred_region
          %p169 = scmp.lt.s32.totalorder %s13, 1
          %s170 = scalar_select %p169, %s13, 1
          %s171 = smul.addr %s170, 8
          %s172 = scalar_lea.vmem %s2, %s171
        $region32: #{tpu_custom_call.1} parent=23 // pred_fallthru
          _
      $region24: #{tpu_custom_call.1} parent=5 // pred_fallthru
        _
      %p173 = scmp.le.s32.totalorder 1, %s13
      %p174 = scmp.lt.s32.totalorder %s13, 3
      %p175 = pnand %p173, %p174
      %p176 = pneg %p175
      // Predicated region
      $region33: #{tpu_custom_call.1} parent=5 // pred_check
        _
      $region34: #{tpu_custom_call.1} parent=5 // pred_check_branch
        %178 = sbr.rel (%p175) target = $region36
      $region35: #{tpu_custom_call.1} parent=5 // pred_region
        %s179 = ssub.s32 %s13, 1
        %p180 = scmp.lt.s32.totalorder %s18, 1
        %s181 = scalar_select %p180, %s18, 1
        %s182 = smul.addr %s181, 3
        %s183 = smul.addr %s182, 4
        %s184 = scalar_lea.vmem %s0, %s183
        %p185 = pneg %p39
        %p186 = pneg %p36
        %p187 = pneg %p60
        %p188 = pneg %p57
        %p189 = scmp.lt.s32.totalorder %s18, 1
        %s190 = scalar_select %p189, %s18, 1
        %s191 = smul.addr %s190, 8
        %s192 = scalar_lea.vmem %s2, %s191
        %p193 = pneg %p86
        %p194 = pneg %p83
        %p195 = pneg %p107
        %p196 = pneg %p104
        %p197 = pneg %p133
        %p198 = pneg %p130
        %s199 = sand.u32 %s120, 1
        %s200 = scalar_lea.sflag [#allocation3], %s199
        %s201 = sand.u32 %s120, 1
        %s202 = smul.addr %s201, 8
        %s203 = scalar_lea.vmem [#allocation2], %s202
        %p204 = scmp.lt.s32.totalorder %s18, 1
        %s205 = scalar_select %p204, %s18, 1
        %s206 = smul.addr %s205, 3
        %s207 = smul.addr %s206, 4
        %s208 = scalar_lea.vmem %s0, %s207
        %p209 = scmp.lt.s32.totalorder %s18, 1
        %s210 = scalar_select %p209, %s18, 1
        %s211 = smul.addr %s210, 8
        %s212 = scalar_lea.vmem %s2, %s211
        %v213 = vld [vmem:[%s1] sm:$0xff]
        %v214 = vld [vmem:[%s208] sm:$0xff]
        %v215 = vld [vmem:[%s208 + $0x8] sm:$0xf]
        %s216 = scalar_lea.vmem %s1, 8
        %v217 = vld [vmem:[%s216] sm:$0xff]
        %v220 = vcombine.high %v214, %v214
        %221 = vrot.lane.b32.xlu0 %v214, 127
        %v222 = vpop.permute.xlu0 %221
        %223 = vrot.lane.b32.xlu0 %v220, 127
        %v224 = vpop.permute.xlu0 %223
        %225 = vrot.lane.b32.xlu0 %v215, 127
        %v226 = vpop.permute.xlu0 %225
        %vm227 = vcmask 1039360
        %v228 = vsel %vm227, %v222, %v224
        %v229 = vsel %vm227, %v224, %v226
        %vm230 = vcmask 31744
        %v232 = vsel %vm230, %v217, 0
        %vm234 = vcmask 1043456
        %v235 = vsel %vm234, %v228, 0
        %v237 = vsel %vm234, %v229, 0
        %v239 = vsel %vm234, %v226, 0
        %241 = vmatprep.subr.mxu0 %v237
        %242 = vmatpush1.msra.mxu0 %v235
        %243 = vmatprep.subr.mxu0 0.0
        %244 = vmatpush1.msra.mxu0 0.0
        %245 = vmatprep.subr.mxu0 0.0
        %246 = vmatpush1.msra.mxu0 0.0
        %247 = vmatprep.subr.mxu0 0.0
        %248 = vmatpush1.msra.mxu0 0.0
        %249 = vmatprep.subr.mxu0 0.0
        %250 = vmatpush1.msra.mxu0 0.0
        %251 = vmatprep.subr.mxu0 0.0
        %252 = vmatpush1.msra.mxu0 0.0
        %253 = vmatprep.subr.mxu0 0.0
        %254 = vmatpush1.msra.mxu0 0.0
        %255 = vmatprep.subr.mxu0 0.0
        %256 = vmatpush1.msra.mxu0 0.0
        %257 = vmatprep.subr.mxu0 0.0
        %258 = vmatpush1.msra.mxu0 0.0
        %259 = vmatprep.subr.mxu0 0.0
        %260 = vmatpush1.msra.mxu0 0.0
        %261 = vmatprep.subr.mxu0 0.0
        %262 = vmatpush1.msra.mxu0 0.0
        %263 = vmatprep.subr.mxu0 0.0
        %264 = vmatpush1.msra.mxu0 0.0
        %265 = vmatprep.subr.mxu0 0.0
        %266 = vmatpush1.msra.mxu0 0.0
        %267 = vmatprep.subr.mxu0 0.0
        %268 = vmatpush1.msra.mxu0 0.0
        %269 = vmatprep.subr.mxu0 0.0
        %270 = vmatpush1.msra.mxu0 0.0
        %271 = vmatprep.subr.mxu0 0.0
        %272 = vmatpush1.msra.mxu0 0.0
        %273 = vmatprep.subr.mxu0 0.0
        %274 = vmatpush1.msra.mxu0 0.0
        %275 = vmatprep.subr.mxu0 0.0
        %276 = vmatpush1.msra.mxu0 0.0
        %277 = vmatprep.subr.mxu0 0.0
        %278 = vmatpush1.msra.mxu0 0.0
        %279 = vmatprep.subr.mxu0 0.0
        %280 = vmatpush1.msra.mxu0 0.0
        %281 = vmatprep.subr.mxu0 0.0
        %282 = vmatpush1.msra.mxu0 0.0
        %283 = vmatprep.subr.mxu0 0.0
        %284 = vmatpush1.msra.mxu0 0.0
        %285 = vmatprep.subr.mxu0 0.0
        %286 = vmatpush1.msra.mxu0 0.0
        %287 = vmatprep.subr.mxu0 0.0
        %288 = vmatpush1.msra.mxu0 0.0
        %289 = vmatprep.subr.mxu0 0.0
        %290 = vmatpush1.msra.mxu0 0.0
        %291 = vmatprep.subr.mxu0 0.0
        %292 = vmatpush1.msra.mxu0 0.0
        %293 = vmatprep.subr.mxu0 0.0
        %294 = vmatpush1.msra.mxu0 0.0
        %295 = vmatprep.subr.mxu0 0.0
        %296 = vmatpush1.msra.mxu0 0.0
        %297 = vmatprep.subr.mxu0 0.0
        %298 = vmatpush1.msra.mxu0 0.0
        %299 = vmatprep.subr.mxu0 0.0
        %300 = vmatpush1.msra.mxu0 0.0
        %301 = vmatprep.subr.mxu0 0.0
        %302 = vmatpush1.msra.mxu0 0.0
        %303 = vmatprep.subr.mxu0 0.0
        %304 = vmatpush1.msra.mxu0 0.0
        %305 = vmatprep.mubr.f32.mxu0 0.0
        %306 = vmatmul.mubr.f32.gmra.mrb[0].mxu0 %v232
        %v307 = vpop.f32.mrb[0].mxu0
        %v308 = vadd.f32 0.0, %v307
        %v309 = vpop.f32.mrb[0].mxu0
        %v310 = vadd.f32 0.0, %v309
        %311 = vdwg.mxu0
        %312 = vmatprep.subr.mxu0 0.0
        %313 = vmatpush1.msra.mxu0 %v239
        %314 = vmatprep.subr.mxu0 0.0
        %315 = vmatpush1.msra.mxu0 0.0
        %316 = vmatprep.subr.mxu0 0.0
        %317 = vmatpush1.msra.mxu0 0.0
        %318 = vmatprep.subr.mxu0 0.0
        %319 = vmatpush1.msra.mxu0 0.0
        %320 = vmatprep.subr.mxu0 0.0
        %321 = vmatpush1.msra.mxu0 0.0
        %322 = vmatprep.subr.mxu0 0.0
        %323 = vmatpush1.msra.mxu0 0.0
        %324 = vmatprep.subr.mxu0 0.0
        %325 = vmatpush1.msra.mxu0 0.0
        %326 = vmatprep.subr.mxu0 0.0
        %327 = vmatpush1.msra.mxu0 0.0
        %328 = vmatprep.subr.mxu0 0.0
        %329 = vmatpush1.msra.mxu0 0.0
        %330 = vmatprep.subr.mxu0 0.0
        %331 = vmatpush1.msra.mxu0 0.0
        %332 = vmatprep.subr.mxu0 0.0
        %333 = vmatpush1.msra.mxu0 0.0
        %334 = vmatprep.subr.mxu0 0.0
        %335 = vmatpush1.msra.mxu0 0.0
        %336 = vmatprep.subr.mxu0 0.0
        %337 = vmatpush1.msra.mxu0 0.0
        %338 = vmatprep.subr.mxu0 0.0
        %339 = vmatpush1.msra.mxu0 0.0
        %340 = vmatprep.subr.mxu0 0.0
        %341 = vmatpush1.msra.mxu0 0.0
        %342 = vmatprep.subr.mxu0 0.0
        %343 = vmatpush1.msra.mxu0 0.0
        %344 = vmatprep.subr.mxu0 0.0
        %345 = vmatpush1.msra.mxu0 0.0
        %346 = vmatprep.subr.mxu0 0.0
        %347 = vmatpush1.msra.mxu0 0.0
        %348 = vmatprep.subr.mxu0 0.0
        %349 = vmatpush1.msra.mxu0 0.0
        %350 = vmatprep.subr.mxu0 0.0
        %351 = vmatpush1.msra.mxu0 0.0
        %352 = vmatprep.subr.mxu0 0.0
        %353 = vmatpush1.msra.mxu0 0.0
        %354 = vmatprep.subr.mxu0 0.0
        %355 = vmatpush1.msra.mxu0 0.0
        %356 = vmatprep.subr.mxu0 0.0
        %357 = vmatpush1.msra.mxu0 0.0
        %358 = vmatprep.subr.mxu0 0.0
        %359 = vmatpush1.msra.mxu0 0.0
        %360 = vmatprep.subr.mxu0 0.0
        %361 = vmatpush1.msra.mxu0 0.0
        %362 = vmatprep.subr.mxu0 0.0
        %363 = vmatpush1.msra.mxu0 0.0
        %364 = vmatprep.subr.mxu0 0.0
        %365 = vmatpush1.msra.mxu0 0.0
        %366 = vmatprep.subr.mxu0 0.0
        %367 = vmatpush1.msra.mxu0 0.0
        %368 = vmatprep.subr.mxu0 0.0
        %369 = vmatpush1.msra.mxu0 0.0
        %370 = vmatprep.subr.mxu0 0.0
        %371 = vmatpush1.msra.mxu0 0.0
        %372 = vmatprep.subr.mxu0 0.0
        %373 = vmatpush1.msra.mxu0 0.0
        %374 = vmatprep.subr.mxu0 0.0
        %375 = vmatpush1.msra.mxu0 0.0
        %376 = vmatprep.mubr.f32.mxu0 0.0
        %377 = vmatmul.mubr.f32.gmra.mrb[0].mxu0 %v232
        %v378 = vpop.f32.mrb[0].mxu0
        %v379 = vadd.f32 0.0, %v378
        %v380 = vpop.f32.mrb[0].mxu0
        %381 = vdwg.mxu0
        %v383 = vsel %vm230, %v213, 0
        %v385 = vsel %vm234, %v214, 0
        %v387 = vsel %vm234, %v220, 0
        %v389 = vsel %vm234, %v215, 0
        %391 = vmatprep.subr.mxu0 %v387
        %392 = vmatpush1.msra.mxu0 %v385
        %393 = vmatprep.subr.mxu0 0.0
        %394 = vmatpush1.msra.mxu0 0.0
        %395 = vmatprep.subr.mxu0 0.0
        %396 = vmatpush1.msra.mxu0 0.0
        %397 = vmatprep.subr.mxu0 0.0
        %398 = vmatpush1.msra.mxu0 0.0
        %399 = vmatprep.subr.mxu0 0.0
        %400 = vmatpush1.msra.mxu0 0.0
        %401 = vmatprep.subr.mxu0 0.0
        %402 = vmatpush1.msra.mxu0 0.0
        %403 = vmatprep.subr.mxu0 0.0
        %404 = vmatpush1.msra.mxu0 0.0
        %405 = vmatprep.subr.mxu0 0.0
        %406 = vmatpush1.msra.mxu0 0.0
        %407 = vmatprep.subr.mxu0 0.0
        %408 = vmatpush1.msra.mxu0 0.0
        %409 = vmatprep.subr.mxu0 0.0
        %410 = vmatpush1.msra.mxu0 0.0
        %411 = vmatprep.subr.mxu0 0.0
        %412 = vmatpush1.msra.mxu0 0.0
        %413 = vmatprep.subr.mxu0 0.0
        %414 = vmatpush1.msra.mxu0 0.0
        %415 = vmatprep.subr.mxu0 0.0
        %416 = vmatpush1.msra.mxu0 0.0
        %417 = vmatprep.subr.mxu0 0.0
        %418 = vmatpush1.msra.mxu0 0.0
        %419 = vmatprep.subr.mxu0 0.0
        %420 = vmatpush1.msra.mxu0 0.0
        %421 = vmatprep.subr.mxu0 0.0
        %422 = vmatpush1.msra.mxu0 0.0
        %423 = vmatprep.subr.mxu0 0.0
        %424 = vmatpush1.msra.mxu0 0.0
        %425 = vmatprep.subr.mxu0 0.0
        %426 = vmatpush1.msra.mxu0 0.0
        %427 = vmatprep.subr.mxu0 0.0
        %428 = vmatpush1.msra.mxu0 0.0
        %429 = vmatprep.subr.mxu0 0.0
        %430 = vmatpush1.msra.mxu0 0.0
        %431 = vmatprep.subr.mxu0 0.0
        %432 = vmatpush1.msra.mxu0 0.0
        %433 = vmatprep.subr.mxu0 0.0
        %434 = vmatpush1.msra.mxu0 0.0
        %435 = vmatprep.subr.mxu0 0.0
        %436 = vmatpush1.msra.mxu0 0.0
        %437 = vmatprep.subr.mxu0 0.0
        %438 = vmatpush1.msra.mxu0 0.0
        %439 = vmatprep.subr.mxu0 0.0
        %440 = vmatpush1.msra.mxu0 0.0
        %441 = vmatprep.subr.mxu0 0.0
        %442 = vmatpush1.msra.mxu0 0.0
        %443 = vmatprep.subr.mxu0 0.0
        %444 = vmatpush1.msra.mxu0 0.0
        %445 = vmatprep.subr.mxu0 0.0
        %446 = vmatpush1.msra.mxu0 0.0
        %447 = vmatprep.subr.mxu0 0.0
        %448 = vmatpush1.msra.mxu0 0.0
        %449 = vmatprep.subr.mxu0 0.0
        %450 = vmatpush1.msra.mxu0 0.0
        %451 = vmatprep.subr.mxu0 0.0
        %452 = vmatpush1.msra.mxu0 0.0
        %453 = vmatprep.subr.mxu0 0.0
        %454 = vmatpush1.msra.mxu0 0.0
        %455 = vmatprep.mubr.f32.mxu0 0.0
        %456 = vmatmul.mubr.f32.gmra.mrb[0].mxu0 %v383
        %v457 = vpop.f32.mrb[0].mxu0
        %v458 = vadd.f32 %v308, %v457
        %v459 = vpop.f32.mrb[0].mxu0
        %v460 = vadd.f32 %v310, %v459
        %461 = vdwg.mxu0
        %462 = vmatprep.subr.mxu0 0.0
        %463 = vmatpush1.msra.mxu0 %v389
        %464 = vmatprep.subr.mxu0 0.0
        %465 = vmatpush1.msra.mxu0 0.0
        %466 = vmatprep.subr.mxu0 0.0
        %467 = vmatpush1.msra.mxu0 0.0
        %468 = vmatprep.subr.mxu0 0.0
        %469 = vmatpush1.msra.mxu0 0.0
        %470 = vmatprep.subr.mxu0 0.0
        %471 = vmatpush1.msra.mxu0 0.0
        %472 = vmatprep.subr.mxu0 0.0
        %473 = vmatpush1.msra.mxu0 0.0
        %474 = vmatprep.subr.mxu0 0.0
        %475 = vmatpush1.msra.mxu0 0.0
        %476 = vmatprep.subr.mxu0 0.0
        %477 = vmatpush1.msra.mxu0 0.0
        %478 = vmatprep.subr.mxu0 0.0
        %479 = vmatpush1.msra.mxu0 0.0
        %480 = vmatprep.subr.mxu0 0.0
        %481 = vmatpush1.msra.mxu0 0.0
        %482 = vmatprep.subr.mxu0 0.0
        %483 = vmatpush1.msra.mxu0 0.0
        %484 = vmatprep.subr.mxu0 0.0
        %485 = vmatpush1.msra.mxu0 0.0
        %486 = vmatprep.subr.mxu0 0.0
        %487 = vmatpush1.msra.mxu0 0.0
        %488 = vmatprep.subr.mxu0 0.0
        %489 = vmatpush1.msra.mxu0 0.0
        %490 = vmatprep.subr.mxu0 0.0
        %491 = vmatpush1.msra.mxu0 0.0
        %492 = vmatprep.subr.mxu0 0.0
        %493 = vmatpush1.msra.mxu0 0.0
        %494 = vmatprep.subr.mxu0 0.0
        %495 = vmatpush1.msra.mxu0 0.0
        %496 = vmatprep.subr.mxu0 0.0
        %497 = vmatpush1.msra.mxu0 0.0
        %498 = vmatprep.subr.mxu0 0.0
        %499 = vmatpush1.msra.mxu0 0.0
        %500 = vmatprep.subr.mxu0 0.0
        %501 = vmatpush1.msra.mxu0 0.0
        %502 = vmatprep.subr.mxu0 0.0
        %503 = vmatpush1.msra.mxu0 0.0
        %504 = vmatprep.subr.mxu0 0.0
        %505 = vmatpush1.msra.mxu0 0.0
        %506 = vmatprep.subr.mxu0 0.0
        %507 = vmatpush1.msra.mxu0 0.0
        %508 = vmatprep.subr.mxu0 0.0
        %509 = vmatpush1.msra.mxu0 0.0
        %510 = vmatprep.subr.mxu0 0.0
        %511 = vmatpush1.msra.mxu0 0.0
        %512 = vmatprep.subr.mxu0 0.0
        %513 = vmatpush1.msra.mxu0 0.0
        %514 = vmatprep.subr.mxu0 0.0
        %515 = vmatpush1.msra.mxu0 0.0
        %516 = vmatprep.subr.mxu0 0.0
        %517 = vmatpush1.msra.mxu0 0.0
        %518 = vmatprep.subr.mxu0 0.0
        %519 = vmatpush1.msra.mxu0 0.0
        %520 = vmatprep.subr.mxu0 0.0
        %521 = vmatpush1.msra.mxu0 0.0
        %522 = vmatprep.subr.mxu0 0.0
        %523 = vmatpush1.msra.mxu0 0.0
        %524 = vmatprep.subr.mxu0 0.0
        %525 = vmatpush1.msra.mxu0 0.0
        %526 = vmatprep.mubr.f32.mxu0 0.0
        %527 = vmatmul.mubr.f32.gmra.mrb[0].mxu0 %v383
        %v528 = vpop.f32.mrb[0].mxu0
        %v529 = vadd.f32 %v379, %v528
        %v530 = vpop.f32.mrb[0].mxu0
        %531 = vdwg.mxu0
        %s532 = scalar_lea.vmem %s1, 16
        %v533 = vld [vmem:[%s532] sm:$0xff]
        %v534 = vld [vmem:[%s208] sm:$0xff]
        %v535 = vld [vmem:[%s208 + $0x8] sm:$0xf]
        %v538 = vcombine.high %v534, %v534
        %539 = vrot.lane.b32.xlu0 %v534, 126
        %v540 = vpop.permute.xlu0 %539
        %541 = vrot.lane.b32.xlu0 %v538, 126
        %v542 = vpop.permute.xlu0 %541
        %543 = vrot.lane.b32.xlu0 %v535, 126
        %v544 = vpop.permute.xlu0 %543
        %vm545 = vcmask 1031168
        %v546 = vsel %vm545, %v540, %v542
        %v547 = vsel %vm545, %v542, %v544
        %v549 = vsel %vm230, %v533, 0
        %v551 = vsel %vm234, %v546, 0
        %v553 = vsel %vm234, %v547, 0
        %v555 = vsel %vm234, %v544, 0
        %557 = vmatprep.subr.mxu0 %v553
        %558 = vmatpush1.msra.mxu0 %v551
        %559 = vmatprep.subr.mxu0 0.0
        %560 = vmatpush1.msra.mxu0 0.0
        %561 = vmatprep.subr.mxu0 0.0
        %562 = vmatpush1.msra.mxu0 0.0
        %563 = vmatprep.subr.mxu0 0.0
        %564 = vmatpush1.msra.mxu0 0.0
        %565 = vmatprep.subr.mxu0 0.0
        %566 = vmatpush1.msra.mxu0 0.0
        %567 = vmatprep.subr.mxu0 0.0
        %568 = vmatpush1.msra.mxu0 0.0
        %569 = vmatprep.subr.mxu0 0.0
        %570 = vmatpush1.msra.mxu0 0.0
        %571 = vmatprep.subr.mxu0 0.0
        %572 = vmatpush1.msra.mxu0 0.0
        %573 = vmatprep.subr.mxu0 0.0
        %574 = vmatpush1.msra.mxu0 0.0
        %575 = vmatprep.subr.mxu0 0.0
        %576 = vmatpush1.msra.mxu0 0.0
        %577 = vmatprep.subr.mxu0 0.0
        %578 = vmatpush1.msra.mxu0 0.0
        %579 = vmatprep.subr.mxu0 0.0
        %580 = vmatpush1.msra.mxu0 0.0
        %581 = vmatprep.subr.mxu0 0.0
        %582 = vmatpush1.msra.mxu0 0.0
        %583 = vmatprep.subr.mxu0 0.0
        %584 = vmatpush1.msra.mxu0 0.0
        %585 = vmatprep.subr.mxu0 0.0
        %586 = vmatpush1.msra.mxu0 0.0
        %587 = vmatprep.subr.mxu0 0.0
        %588 = vmatpush1.msra.mxu0 0.0
        %589 = vmatprep.subr.mxu0 0.0
        %590 = vmatpush1.msra.mxu0 0.0
        %591 = vmatprep.subr.mxu0 0.0
        %592 = vmatpush1.msra.mxu0 0.0
        %593 = vmatprep.subr.mxu0 0.0
        %594 = vmatpush1.msra.mxu0 0.0
        %595 = vmatprep.subr.mxu0 0.0
        %596 = vmatpush1.msra.mxu0 0.0
        %597 = vmatprep.subr.mxu0 0.0
        %598 = vmatpush1.msra.mxu0 0.0
        %599 = vmatprep.subr.mxu0 0.0
        %600 = vmatpush1.msra.mxu0 0.0
        %601 = vmatprep.subr.mxu0 0.0
        %602 = vmatpush1.msra.mxu0 0.0
        %603 = vmatprep.subr.mxu0 0.0
        %604 = vmatpush1.msra.mxu0 0.0
        %605 = vmatprep.subr.mxu0 0.0
        %606 = vmatpush1.msra.mxu0 0.0
        %607 = vmatprep.subr.mxu0 0.0
        %608 = vmatpush1.msra.mxu0 0.0
        %609 = vmatprep.subr.mxu0 0.0
        %610 = vmatpush1.msra.mxu0 0.0
        %611 = vmatprep.subr.mxu0 0.0
        %612 = vmatpush1.msra.mxu0 0.0
        %613 = vmatprep.subr.mxu0 0.0
        %614 = vmatpush1.msra.mxu0 0.0
        %615 = vmatprep.subr.mxu0 0.0
        %616 = vmatpush1.msra.mxu0 0.0
        %617 = vmatprep.subr.mxu0 0.0
        %618 = vmatpush1.msra.mxu0 0.0
        %619 = vmatprep.subr.mxu0 0.0
        %620 = vmatpush1.msra.mxu0 0.0
        %621 = vmatprep.mubr.f32.mxu0 0.0
        %622 = vmatmul.mubr.f32.gmra.mrb[0].mxu0 %v549
        %v623 = vpop.f32.mrb[0].mxu0
        %v624 = vadd.f32 0.0, %v623
        %v625 = vpop.f32.mrb[0].mxu0
        %v626 = vadd.f32 0.0, %v625
        %627 = vdwg.mxu0
        %628 = vmatprep.subr.mxu0 0.0
        %629 = vmatpush1.msra.mxu0 %v555
        %630 = vmatprep.subr.mxu0 0.0
        %631 = vmatpush1.msra.mxu0 0.0
        %632 = vmatprep.subr.mxu0 0.0
        %633 = vmatpush1.msra.mxu0 0.0
        %634 = vmatprep.subr.mxu0 0.0
        %635 = vmatpush1.msra.mxu0 0.0
        %636 = vmatprep.subr.mxu0 0.0
        %637 = vmatpush1.msra.mxu0 0.0
        %638 = vmatprep.subr.mxu0 0.0
        %639 = vmatpush1.msra.mxu0 0.0
        %640 = vmatprep.subr.mxu0 0.0
        %641 = vmatpush1.msra.mxu0 0.0
        %642 = vmatprep.subr.mxu0 0.0
        %643 = vmatpush1.msra.mxu0 0.0
        %644 = vmatprep.subr.mxu0 0.0
        %645 = vmatpush1.msra.mxu0 0.0
        %646 = vmatprep.subr.mxu0 0.0
        %647 = vmatpush1.msra.mxu0 0.0
        %648 = vmatprep.subr.mxu0 0.0
        %649 = vmatpush1.msra.mxu0 0.0
        %650 = vmatprep.subr.mxu0 0.0
        %651 = vmatpush1.msra.mxu0 0.0
        %652 = vmatprep.subr.mxu0 0.0
        %653 = vmatpush1.msra.mxu0 0.0
        %654 = vmatprep.subr.mxu0 0.0
        %655 = vmatpush1.msra.mxu0 0.0
        %656 = vmatprep.subr.mxu0 0.0
        %657 = vmatpush1.msra.mxu0 0.0
        %658 = vmatprep.subr.mxu0 0.0
        %659 = vmatpush1.msra.mxu0 0.0
        %660 = vmatprep.subr.mxu0 0.0
        %661 = vmatpush1.msra.mxu0 0.0
        %662 = vmatprep.subr.mxu0 0.0
        %663 = vmatpush1.msra.mxu0 0.0
        %664 = vmatprep.subr.mxu0 0.0
        %665 = vmatpush1.msra.mxu0 0.0
        %666 = vmatprep.subr.mxu0 0.0
        %667 = vmatpush1.msra.mxu0 0.0
        %668 = vmatprep.subr.mxu0 0.0
        %669 = vmatpush1.msra.mxu0 0.0
        %670 = vmatprep.subr.mxu0 0.0
        %671 = vmatpush1.msra.mxu0 0.0
        %672 = vmatprep.subr.mxu0 0.0
        %673 = vmatpush1.msra.mxu0 0.0
        %674 = vmatprep.subr.mxu0 0.0
        %675 = vmatpush1.msra.mxu0 0.0
        %676 = vmatprep.subr.mxu0 0.0
        %677 = vmatpush1.msra.mxu0 0.0
        %678 = vmatprep.subr.mxu0 0.0
        %679 = vmatpush1.msra.mxu0 0.0
        %680 = vmatprep.subr.mxu0 0.0
        %681 = vmatpush1.msra.mxu0 0.0
        %682 = vmatprep.subr.mxu0 0.0
        %683 = vmatpush1.msra.mxu0 0.0
        %684 = vmatprep.subr.mxu0 0.0
        %685 = vmatpush1.msra.mxu0 0.0
        %686 = vmatprep.subr.mxu0 0.0
        %687 = vmatpush1.msra.mxu0 0.0
        %688 = vmatprep.subr.mxu0 0.0
        %689 = vmatpush1.msra.mxu0 0.0
        %690 = vmatprep.subr.mxu0 0.0
        %691 = vmatpush1.msra.mxu0 0.0
        %692 = vmatprep.mubr.f32.mxu0 0.0
        %693 = vmatmul.mubr.f32.gmra.mrb[0].mxu0 %v549
        %v694 = vpop.f32.mrb[0].mxu0
        %v695 = vadd.f32 0.0, %v694
        %v696 = vpop.f32.mrb[0].mxu0
        %697 = vdwg.mxu0
        %v698 = vadd.f32 %v458, %v624
        %v699 = vadd.f32 %v460, %v626
        %v700 = vadd.f32 %v529, %v695
        %s701 = scalar_lea.vmem %s1, 24
        %v702 = vld [vmem:[%s701] sm:$0xff]
        %v703 = vld [vmem:[%s208] sm:$0xff]
        %v704 = vld [vmem:[%s208 + $0x8] sm:$0xf]
        %v707 = vcombine.high %v703, %v703
        %708 = vrot.lane.b32.xlu0 %v703, 125
        %v709 = vpop.permute.xlu0 %708
        %710 = vrot.lane.b32.xlu0 %v707, 125
        %v711 = vpop.permute.xlu0 %710
        %712 = vrot.lane.b32.xlu0 %v704, 125
        %v713 = vpop.permute.xlu0 %712
        %vm714 = vcmask 1022976
        %v715 = vsel %vm714, %v709, %v711
        %v716 = vsel %vm714, %v711, %v713
        %v718 = vsel %vm230, %v702, 0
        %v720 = vsel %vm234, %v715, 0
        %v722 = vsel %vm234, %v716, 0
        %v724 = vsel %vm234, %v713, 0
        %726 = vmatprep.subr.mxu0 %v722
        %727 = vmatpush1.msra.mxu0 %v720
        %728 = vmatprep.subr.mxu0 0.0
        %729 = vmatpush1.msra.mxu0 0.0
        %730 = vmatprep.subr.mxu0 0.0
        %731 = vmatpush1.msra.mxu0 0.0
        %732 = vmatprep.subr.mxu0 0.0
        %733 = vmatpush1.msra.mxu0 0.0
        %734 = vmatprep.subr.mxu0 0.0
        %735 = vmatpush1.msra.mxu0 0.0
        %736 = vmatprep.subr.mxu0 0.0
        %737 = vmatpush1.msra.mxu0 0.0
        %738 = vmatprep.subr.mxu0 0.0
        %739 = vmatpush1.msra.mxu0 0.0
        %740 = vmatprep.subr.mxu0 0.0
        %741 = vmatpush1.msra.mxu0 0.0
        %742 = vmatprep.subr.mxu0 0.0
        %743 = vmatpush1.msra.mxu0 0.0
        %744 = vmatprep.subr.mxu0 0.0
        %745 = vmatpush1.msra.mxu0 0.0
        %746 = vmatprep.subr.mxu0 0.0
        %747 = vmatpush1.msra.mxu0 0.0
        %748 = vmatprep.subr.mxu0 0.0
        %749 = vmatpush1.msra.mxu0 0.0
        %750 = vmatprep.subr.mxu0 0.0
        %751 = vmatpush1.msra.mxu0 0.0
        %752 = vmatprep.subr.mxu0 0.0
        %753 = vmatpush1.msra.mxu0 0.0
        %754 = vmatprep.subr.mxu0 0.0
        %755 = vmatpush1.msra.mxu0 0.0
        %756 = vmatprep.subr.mxu0 0.0
        %757 = vmatpush1.msra.mxu0 0.0
        %758 = vmatprep.subr.mxu0 0.0
        %759 = vmatpush1.msra.mxu0 0.0
        %760 = vmatprep.subr.mxu0 0.0
        %761 = vmatpush1.msra.mxu0 0.0
        %762 = vmatprep.subr.mxu0 0.0
        %763 = vmatpush1.msra.mxu0 0.0
        %764 = vmatprep.subr.mxu0 0.0
        %765 = vmatpush1.msra.mxu0 0.0
        %766 = vmatprep.subr.mxu0 0.0
        %767 = vmatpush1.msra.mxu0 0.0
        %768 = vmatprep.subr.mxu0 0.0
        %769 = vmatpush1.msra.mxu0 0.0
        %770 = vmatprep.subr.mxu0 0.0
        %771 = vmatpush1.msra.mxu0 0.0
        %772 = vmatprep.subr.mxu0 0.0
        %773 = vmatpush1.msra.mxu0 0.0
        %774 = vmatprep.subr.mxu0 0.0
        %775 = vmatpush1.msra.mxu0 0.0
        %776 = vmatprep.subr.mxu0 0.0
        %777 = vmatpush1.msra.mxu0 0.0
        %778 = vmatprep.subr.mxu0 0.0
        %779 = vmatpush1.msra.mxu0 0.0
        %780 = vmatprep.subr.mxu0 0.0
        %781 = vmatpush1.msra.mxu0 0.0
        %782 = vmatprep.subr.mxu0 0.0
        %783 = vmatpush1.msra.mxu0 0.0
        %784 = vmatprep.subr.mxu0 0.0
        %785 = vmatpush1.msra.mxu0 0.0
        %786 = vmatprep.subr.mxu0 0.0
        %787 = vmatpush1.msra.mxu0 0.0
        %788 = vmatprep.subr.mxu0 0.0
        %789 = vmatpush1.msra.mxu0 0.0
        %790 = vmatprep.mubr.f32.mxu0 0.0
        %791 = vmatmul.mubr.f32.gmra.mrb[0].mxu0 %v718
        %v792 = vpop.f32.mrb[0].mxu0
        %v793 = vadd.f32 0.0, %v792
        %v794 = vpop.f32.mrb[0].mxu0
        %v795 = vadd.f32 0.0, %v794
        %796 = vdwg.mxu0
        %797 = vmatprep.subr.mxu0 0.0
        %798 = vmatpush1.msra.mxu0 %v724
        %799 = vmatprep.subr.mxu0 0.0
        %800 = vmatpush1.msra.mxu0 0.0
        %801 = vmatprep.subr.mxu0 0.0
        %802 = vmatpush1.msra.mxu0 0.0
        %803 = vmatprep.subr.mxu0 0.0
        %804 = vmatpush1.msra.mxu0 0.0
        %805 = vmatprep.subr.mxu0 0.0
        %806 = vmatpush1.msra.mxu0 0.0
        %807 = vmatprep.subr.mxu0 0.0
        %808 = vmatpush1.msra.mxu0 0.0
        %809 = vmatprep.subr.mxu0 0.0
        %810 = vmatpush1.msra.mxu0 0.0
        %811 = vmatprep.subr.mxu0 0.0
        %812 = vmatpush1.msra.mxu0 0.0
        %813 = vmatprep.subr.mxu0 0.0
        %814 = vmatpush1.msra.mxu0 0.0
        %815 = vmatprep.subr.mxu0 0.0
        %816 = vmatpush1.msra.mxu0 0.0
        %817 = vmatprep.subr.mxu0 0.0
        %818 = vmatpush1.msra.mxu0 0.0
        %819 = vmatprep.subr.mxu0 0.0
        %820 = vmatpush1.msra.mxu0 0.0
        %821 = vmatprep.subr.mxu0 0.0
        %822 = vmatpush1.msra.mxu0 0.0
        %823 = vmatprep.subr.mxu0 0.0
        %824 = vmatpush1.msra.mxu0 0.0
        %825 = vmatprep.subr.mxu0 0.0
        %826 = vmatpush1.msra.mxu0 0.0
        %827 = vmatprep.subr.mxu0 0.0
        %828 = vmatpush1.msra.mxu0 0.0
        %829 = vmatprep.subr.mxu0 0.0
        %830 = vmatpush1.msra.mxu0 0.0
        %831 = vmatprep.subr.mxu0 0.0
        %832 = vmatpush1.msra.mxu0 0.0
        %833 = vmatprep.subr.mxu0 0.0
        %834 = vmatpush1.msra.mxu0 0.0
        %835 = vmatprep.subr.mxu0 0.0
        %836 = vmatpush1.msra.mxu0 0.0
        %837 = vmatprep.subr.mxu0 0.0
        %838 = vmatpush1.msra.mxu0 0.0
        %839 = vmatprep.subr.mxu0 0.0
        %840 = vmatpush1.msra.mxu0 0.0
        %841 = vmatprep.subr.mxu0 0.0
        %842 = vmatpush1.msra.mxu0 0.0
        %843 = vmatprep.subr.mxu0 0.0
        %844 = vmatpush1.msra.mxu0 0.0
        %845 = vmatprep.subr.mxu0 0.0
        %846 = vmatpush1.msra.mxu0 0.0
        %847 = vmatprep.subr.mxu0 0.0
        %848 = vmatpush1.msra.mxu0 0.0
        %849 = vmatprep.subr.mxu0 0.0
        %850 = vmatpush1.msra.mxu0 0.0
        %851 = vmatprep.subr.mxu0 0.0
        %852 = vmatpush1.msra.mxu0 0.0
        %853 = vmatprep.subr.mxu0 0.0
        %854 = vmatpush1.msra.mxu0 0.0
        %855 = vmatprep.subr.mxu0 0.0
        %856 = vmatpush1.msra.mxu0 0.0
        %857 = vmatprep.subr.mxu0 0.0
        %858 = vmatpush1.msra.mxu0 0.0
        %859 = vmatprep.subr.mxu0 0.0
        %860 = vmatpush1.msra.mxu0 0.0
        %861 = vmatprep.mubr.f32.mxu0 0.0
        %862 = vmatmul.mubr.f32.gmra.mrb[0].mxu0 %v718
        %v863 = vpop.f32.mrb[0].mxu0
        %v864 = vadd.f32 0.0, %v863
        %v865 = vpop.f32.mrb[0].mxu0
        %866 = vdwg.mxu0
        %v867 = vadd.f32 %v698, %v793
        %v868 = vadd.f32 %v699, %v795
        %v869 = vadd.f32 %v700, %v864
        %s870 = scalar_lea.vmem %s1, 32
        %v871 = vld [vmem:[%s870] sm:$0xff]
        %v872 = vld [vmem:[%s208] sm:$0xff]
        %v873 = vld [vmem:[%s208 + $0x8] sm:$0xf]
        %v876 = vcombine.high %v872, %v872
        %877 = vrot.lane.b32.xlu0 %v872, 110
        %v878 = vpop.permute.xlu0 %877
        %879 = vrot.lane.b32.xlu0 %v876, 110
        %v880 = vpop.permute.xlu0 %879
        %881 = vrot.lane.b32.xlu0 %v873, 110
        %v882 = vpop.permute.xlu0 %881
        %vm883 = vcmask 900096
        %v884 = vsel %vm883, %v878, %v880
        %v885 = vsel %vm883, %v880, %v882
        %v887 = vsel %vm230, %v871, 0
        %v889 = vsel %vm234, %v884, 0
        %v891 = vsel %vm234, %v885, 0
        %v893 = vsel %vm234, %v882, 0
        %895 = vmatprep.subr.mxu0 %v891
        %896 = vmatpush1.msra.mxu0 %v889
        %897 = vmatprep.subr.mxu0 0.0
        %898 = vmatpush1.msra.mxu0 0.0
        %899 = vmatprep.subr.mxu0 0.0
        %900 = vmatpush1.msra.mxu0 0.0
        %901 = vmatprep.subr.mxu0 0.0
        %902 = vmatpush1.msra.mxu0 0.0
        %903 = vmatprep.subr.mxu0 0.0
        %904 = vmatpush1.msra.mxu0 0.0
        %905 = vmatprep.subr.mxu0 0.0
        %906 = vmatpush1.msra.mxu0 0.0
        %907 = vmatprep.subr.mxu0 0.0
        %908 = vmatpush1.msra.mxu0 0.0
        %909 = vmatprep.subr.mxu0 0.0
        %910 = vmatpush1.msra.mxu0 0.0
        %911 = vmatprep.subr.mxu0 0.0
        %912 = vmatpush1.msra.mxu0 0.0
        %913 = vmatprep.subr.mxu0 0.0
        %914 = vmatpush1.msra.mxu0 0.0
        %915 = vmatprep.subr.mxu0 0.0
        %916 = vmatpush1.msra.mxu0 0.0
        %917 = vmatprep.subr.mxu0 0.0
        %918 = vmatpush1.msra.mxu0 0.0
        %919 = vmatprep.subr.mxu0 0.0
        %920 = vmatpush1.msra.mxu0 0.0
        %921 = vmatprep.subr.mxu0 0.0
        %922 = vmatpush1.msra.mxu0 0.0
        %923 = vmatprep.subr.mxu0 0.0
        %924 = vmatpush1.msra.mxu0 0.0
        %925 = vmatprep.subr.mxu0 0.0
        %926 = vmatpush1.msra.mxu0 0.0
        %927 = vmatprep.subr.mxu0 0.0
        %928 = vmatpush1.msra.mxu0 0.0
        %929 = vmatprep.subr.mxu0 0.0
        %930 = vmatpush1.msra.mxu0 0.0
        %931 = vmatprep.subr.mxu0 0.0
        %932 = vmatpush1.msra.mxu0 0.0
        %933 = vmatprep.subr.mxu0 0.0
        %934 = vmatpush1.msra.mxu0 0.0
        %935 = vmatprep.subr.mxu0 0.0
        %936 = vmatpush1.msra.mxu0 0.0
        %937 = vmatprep.subr.mxu0 0.0
        %938 = vmatpush1.msra.mxu0 0.0
        %939 = vmatprep.subr.mxu0 0.0
        %940 = vmatpush1.msra.mxu0 0.0
        %941 = vmatprep.subr.mxu0 0.0
        %942 = vmatpush1.msra.mxu0 0.0
        %943 = vmatprep.subr.mxu0 0.0
        %944 = vmatpush1.msra.mxu0 0.0
        %945 = vmatprep.subr.mxu0 0.0
        %946 = vmatpush1.msra.mxu0 0.0
        %947 = vmatprep.subr.mxu0 0.0
        %948 = vmatpush1.msra.mxu0 0.0
        %949 = vmatprep.subr.mxu0 0.0
        %950 = vmatpush1.msra.mxu0 0.0
        %951 = vmatprep.subr.mxu0 0.0
        %952 = vmatpush1.msra.mxu0 0.0
        %953 = vmatprep.subr.mxu0 0.0
        %954 = vmatpush1.msra.mxu0 0.0
        %955 = vmatprep.subr.mxu0 0.0
        %956 = vmatpush1.msra.mxu0 0.0
        %957 = vmatprep.subr.mxu0 0.0
        %958 = vmatpush1.msra.mxu0 0.0
        %959 = vmatprep.mubr.f32.mxu0 0.0
        %960 = vmatmul.mubr.f32.gmra.mrb[0].mxu0 %v887
        %v961 = vpop.f32.mrb[0].mxu0
        %v962 = vadd.f32 0.0, %v961
        %v963 = vpop.f32.mrb[0].mxu0
        %v964 = vadd.f32 0.0, %v963
        %965 = vdwg.mxu0
        %966 = vmatprep.subr.mxu0 0.0
        %967 = vmatpush1.msra.mxu0 %v893
        %968 = vmatprep.subr.mxu0 0.0
        %969 = vmatpush1.msra.mxu0 0.0
        %970 = vmatprep.subr.mxu0 0.0
        %971 = vmatpush1.msra.mxu0 0.0
        %972 = vmatprep.subr.mxu0 0.0
        %973 = vmatpush1.msra.mxu0 0.0
        %974 = vmatprep.subr.mxu0 0.0
        %975 = vmatpush1.msra.mxu0 0.0
        %976 = vmatprep.subr.mxu0 0.0
        %977 = vmatpush1.msra.mxu0 0.0
        %978 = vmatprep.subr.mxu0 0.0
        %979 = vmatpush1.msra.mxu0 0.0
        %980 = vmatprep.subr.mxu0 0.0
        %981 = vmatpush1.msra.mxu0 0.0
        %982 = vmatprep.subr.mxu0 0.0
        %983 = vmatpush1.msra.mxu0 0.0
        %984 = vmatprep.subr.mxu0 0.0
        %985 = vmatpush1.msra.mxu0 0.0
        %986 = vmatprep.subr.mxu0 0.0
        %987 = vmatpush1.msra.mxu0 0.0
        %988 = vmatprep.subr.mxu0 0.0
        %989 = vmatpush1.msra.mxu0 0.0
        %990 = vmatprep.subr.mxu0 0.0
        %991 = vmatpush1.msra.mxu0 0.0
        %992 = vmatprep.subr.mxu0 0.0
        %993 = vmatpush1.msra.mxu0 0.0
        %994 = vmatprep.subr.mxu0 0.0
        %995 = vmatpush1.msra.mxu0 0.0
        %996 = vmatprep.subr.mxu0 0.0
        %997 = vmatpush1.msra.mxu0 0.0
        %998 = vmatprep.subr.mxu0 0.0
        %999 = vmatpush1.msra.mxu0 0.0
        %1000 = vmatprep.subr.mxu0 0.0
        %1001 = vmatpush1.msra.mxu0 0.0
        %1002 = vmatprep.subr.mxu0 0.0
        %1003 = vmatpush1.msra.mxu0 0.0
        %1004 = vmatprep.subr.mxu0 0.0
        %1005 = vmatpush1.msra.mxu0 0.0
        %1006 = vmatprep.subr.mxu0 0.0
        %1007 = vmatpush1.msra.mxu0 0.0
        %1008 = vmatprep.subr.mxu0 0.0
        %1009 = vmatpush1.msra.mxu0 0.0
        %1010 = vmatprep.subr.mxu0 0.0
        %1011 = vmatpush1.msra.mxu0 0.0
        %1012 = vmatprep.subr.mxu0 0.0
        %1013 = vmatpush1.msra.mxu0 0.0
        %1014 = vmatprep.subr.mxu0 0.0
        %1015 = vmatpush1.msra.mxu0 0.0
        %1016 = vmatprep.subr.mxu0 0.0
        %1017 = vmatpush1.msra.mxu0 0.0
        %1018 = vmatprep.subr.mxu0 0.0
        %1019 = vmatpush1.msra.mxu0 0.0
        %1020 = vmatprep.subr.mxu0 0.0
        %1021 = vmatpush1.msra.mxu0 0.0
        %1022 = vmatprep.subr.mxu0 0.0
        %1023 = vmatpush1.msra.mxu0 0.0
        %1024 = vmatprep.subr.mxu0 0.0
        %1025 = vmatpush1.msra.mxu0 0.0
        %1026 = vmatprep.subr.mxu0 0.0
        %1027 = vmatpush1.msra.mxu0 0.0
        %1028 = vmatprep.subr.mxu0 0.0
        %1029 = vmatpush1.msra.mxu0 0.0
        %1030 = vmatprep.mubr.f32.mxu0 0.0
        %1031 = vmatmul.mubr.f32.gmra.mrb[0].mxu0 %v887
        %v1032 = vpop.f32.mrb[0].mxu0
        %v1033 = vadd.f32 0.0, %v1032
        %v1034 = vpop.f32.mrb[0].mxu0
        %1035 = vdwg.mxu0
        %v1036 = vadd.f32 %v867, %v962
        %v1037 = vadd.f32 %v868, %v964
        %v1038 = vadd.f32 %v869, %v1033
        %s1039 = scalar_lea.vmem %s1, 40
        %v1040 = vld [vmem:[%s1039] sm:$0xff]
        %v1041 = vld [vmem:[%s208] sm:$0xff]
        %v1042 = vld [vmem:[%s208 + $0x8] sm:$0xf]
        %v1045 = vcombine.high %v1041, %v1041
        %1046 = vrot.lane.b32.xlu0 %v1041, 109
        %v1047 = vpop.permute.xlu0 %1046
        %1048 = vrot.lane.b32.xlu0 %v1045, 109
        %v1049 = vpop.permute.xlu0 %1048
        %1050 = vrot.lane.b32.xlu0 %v1042, 109
        %v1051 = vpop.permute.xlu0 %1050
        %vm1052 = vcmask 891904
        %v1053 = vsel %vm1052, %v1047, %v1049
        %v1054 = vsel %vm1052, %v1049, %v1051
        %v1056 = vsel %vm230, %v1040, 0
        %v1058 = vsel %vm234, %v1053, 0
        %v1060 = vsel %vm234, %v1054, 0
        %v1062 = vsel %vm234, %v1051, 0
        %1064 = vmatprep.subr.mxu0 %v1060
        %1065 = vmatpush1.msra.mxu0 %v1058
        %1066 = vmatprep.subr.mxu0 0.0
        %1067 = vmatpush1.msra.mxu0 0.0
        %1068 = vmatprep.subr.mxu0 0.0
        %1069 = vmatpush1.msra.mxu0 0.0
        %1070 = vmatprep.subr.mxu0 0.0
        %1071 = vmatpush1.msra.mxu0 0.0
        %1072 = vmatprep.subr.mxu0 0.0
        %1073 = vmatpush1.msra.mxu0 0.0
        %1074 = vmatprep.subr.mxu0 0.0
        %1075 = vmatpush1.msra.mxu0 0.0
        %1076 = vmatprep.subr.mxu0 0.0
        %1077 = vmatpush1.msra.mxu0 0.0
        %1078 = vmatprep.subr.mxu0 0.0
        %1079 = vmatpush1.msra.mxu0 0.0
        %1080 = vmatprep.subr.mxu0 0.0
        %1081 = vmatpush1.msra.mxu0 0.0
        %1082 = vmatprep.subr.mxu0 0.0
        %1083 = vmatpush1.msra.mxu0 0.0
        %1084 = vmatprep.subr.mxu0 0.0
        %1085 = vmatpush1.msra.mxu0 0.0
        %1086 = vmatprep.subr.mxu0 0.0
        %1087 = vmatpush1.msra.mxu0 0.0
        %1088 = vmatprep.subr.mxu0 0.0
        %1089 = vmatpush1.msra.mxu0 0.0
        %1090 = vmatprep.subr.mxu0 0.0
        %1091 = vmatpush1.msra.mxu0 0.0
        %1092 = vmatprep.subr.mxu0 0.0
        %1093 = vmatpush1.msra.mxu0 0.0
        %1094 = vmatprep.subr.mxu0 0.0
        %1095 = vmatpush1.msra.mxu0 0.0
        %1096 = vmatprep.subr.mxu0 0.0
        %1097 = vmatpush1.msra.mxu0 0.0
        %1098 = vmatprep.subr.mxu0 0.0
        %1099 = vmatpush1.msra.mxu0 0.0
        %1100 = vmatprep.subr.mxu0 0.0
        %1101 = vmatpush1.msra.mxu0 0.0
        %1102 = vmatprep.subr.mxu0 0.0
        %1103 = vmatpush1.msra.mxu0 0.0
        %1104 = vmatprep.subr.mxu0 0.0
        %1105 = vmatpush1.msra.mxu0 0.0
        %1106 = vmatprep.subr.mxu0 0.0
        %1107 = vmatpush1.msra.mxu0 0.0
        %1108 = vmatprep.subr.mxu0 0.0
        %1109 = vmatpush1.msra.mxu0 0.0
        %1110 = vmatprep.subr.mxu0 0.0
        %1111 = vmatpush1.msra.mxu0 0.0
        %1112 = vmatprep.subr.mxu0 0.0
        %1113 = vmatpush1.msra.mxu0 0.0
        %1114 = vmatprep.subr.mxu0 0.0
        %1115 = vmatpush1.msra.mxu0 0.0
        %1116 = vmatprep.subr.mxu0 0.0
        %1117 = vmatpush1.msra.mxu0 0.0
        %1118 = vmatprep.subr.mxu0 0.0
        %1119 = vmatpush1.msra.mxu0 0.0
        %1120 = vmatprep.subr.mxu0 0.0
        %1121 = vmatpush1.msra.mxu0 0.0
        %1122 = vmatprep.subr.mxu0 0.0
        %1123 = vmatpush1.msra.mxu0 0.0
        %1124 = vmatprep.subr.mxu0 0.0
        %1125 = vmatpush1.msra.mxu0 0.0
        %1126 = vmatprep.subr.mxu0 0.0
        %1127 = vmatpush1.msra.mxu0 0.0
        %1128 = vmatprep.mubr.f32.mxu0 0.0
        %1129 = vmatmul.mubr.f32.gmra.mrb[0].mxu0 %v1056
        %v1130 = vpop.f32.mrb[0].mxu0
        %v1131 = vadd.f32 0.0, %v1130
        %v1132 = vpop.f32.mrb[0].mxu0
        %v1133 = vadd.f32 0.0, %v1132
        %1134 = vdwg.mxu0
        %1135 = vmatprep.subr.mxu0 0.0
        %1136 = vmatpush1.msra.mxu0 %v1062
        %1137 = vmatprep.subr.mxu0 0.0
        %1138 = vmatpush1.msra.mxu0 0.0
        %1139 = vmatprep.subr.mxu0 0.0
        %1140 = vmatpush1.msra.mxu0 0.0
        %1141 = vmatprep.subr.mxu0 0.0
        %1142 = vmatpush1.msra.mxu0 0.0
        %1143 = vmatprep.subr.mxu0 0.0
        %1144 = vmatpush1.msra.mxu0 0.0
        %1145 = vmatprep.subr.mxu0 0.0
        %1146 = vmatpush1.msra.mxu0 0.0
        %1147 = vmatprep.subr.mxu0 0.0
        %1148 = vmatpush1.msra.mxu0 0.0
        %1149 = vmatprep.subr.mxu0 0.0
        %1150 = vmatpush1.msra.mxu0 0.0
        %1151 = vmatprep.subr.mxu0 0.0
        %1152 = vmatpush1.msra.mxu0 0.0
        %1153 = vmatprep.subr.mxu0 0.0
        %1154 = vmatpush1.msra.mxu0 0.0
        %1155 = vmatprep.subr.mxu0 0.0
        %1156 = vmatpush1.msra.mxu0 0.0
        %1157 = vmatprep.subr.mxu0 0.0
        %1158 = vmatpush1.msra.mxu0 0.0
        %1159 = vmatprep.subr.mxu0 0.0
        %1160 = vmatpush1.msra.mxu0 0.0
        %1161 = vmatprep.subr.mxu0 0.0
        %1162 = vmatpush1.msra.mxu0 0.0
        %1163 = vmatprep.subr.mxu0 0.0
        %1164 = vmatpush1.msra.mxu0 0.0
        %1165 = vmatprep.subr.mxu0 0.0
        %1166 = vmatpush1.msra.mxu0 0.0
        %1167 = vmatprep.subr.mxu0 0.0
        %1168 = vmatpush1.msra.mxu0 0.0
        %1169 = vmatprep.subr.mxu0 0.0
        %1170 = vmatpush1.msra.mxu0 0.0
        %1171 = vmatprep.subr.mxu0 0.0
        %1172 = vmatpush1.msra.mxu0 0.0
        %1173 = vmatprep.subr.mxu0 0.0
        %1174 = vmatpush1.msra.mxu0 0.0
        %1175 = vmatprep.subr.mxu0 0.0
        %1176 = vmatpush1.msra.mxu0 0.0
        %1177 = vmatprep.subr.mxu0 0.0
        %1178 = vmatpush1.msra.mxu0 0.0
        %1179 = vmatprep.subr.mxu0 0.0
        %1180 = vmatpush1.msra.mxu0 0.0
        %1181 = vmatprep.subr.mxu0 0.0
        %1182 = vmatpush1.msra.mxu0 0.0
        %1183 = vmatprep.subr.mxu0 0.0
        %1184 = vmatpush1.msra.mxu0 0.0
        %1185 = vmatprep.subr.mxu0 0.0
        %1186 = vmatpush1.msra.mxu0 0.0
        %1187 = vmatprep.subr.mxu0 0.0
        %1188 = vmatpush1.msra.mxu0 0.0
        %1189 = vmatprep.subr.mxu0 0.0
        %1190 = vmatpush1.msra.mxu0 0.0
        %1191 = vmatprep.subr.mxu0 0.0
        %1192 = vmatpush1.msra.mxu0 0.0
        %1193 = vmatprep.subr.mxu0 0.0
        %1194 = vmatpush1.msra.mxu0 0.0
        %1195 = vmatprep.subr.mxu0 0.0
        %1196 = vmatpush1.msra.mxu0 0.0
        %1197 = vmatprep.subr.mxu0 0.0
        %1198 = vmatpush1.msra.mxu0 0.0
        %1199 = vmatprep.mubr.f32.mxu0 0.0
        %1200 = vmatmul.mubr.f32.gmra.mrb[0].mxu0 %v1056
        %v1201 = vpop.f32.mrb[0].mxu0
        %v1202 = vadd.f32 0.0, %v1201
        %v1203 = vpop.f32.mrb[0].mxu0
        %1204 = vdwg.mxu0
        %v1205 = vadd.f32 %v1036, %v1131
        %v1206 = vadd.f32 %v1037, %v1133
        %v1207 = vadd.f32 %v1038, %v1202
        %s1208 = scalar_lea.vmem %s1, 48
        %v1209 = vld [vmem:[%s1208] sm:$0xff]
        %v1210 = vld [vmem:[%s208] sm:$0xff]
        %v1211 = vld [vmem:[%s208 + $0x8] sm:$0xf]
        %v1214 = vcombine.high %v1210, %v1210
        %1215 = vrot.lane.b32.xlu0 %v1210, 108
        %v1216 = vpop.permute.xlu0 %1215
        %1217 = vrot.lane.b32.xlu0 %v1214, 108
        %v1218 = vpop.permute.xlu0 %1217
        %1219 = vrot.lane.b32.xlu0 %v1211, 108
        %v1220 = vpop.permute.xlu0 %1219
        %vm1221 = vcmask 883712
        %v1222 = vsel %vm1221, %v1216, %v1218
        %v1223 = vsel %vm1221, %v1218, %v1220
        %v1225 = vsel %vm230, %v1209, 0
        %v1227 = vsel %vm234, %v1222, 0
        %v1229 = vsel %vm234, %v1223, 0
        %v1231 = vsel %vm234, %v1220, 0
        %1233 = vmatprep.subr.mxu0 %v1229
        %1234 = vmatpush1.msra.mxu0 %v1227
        %1235 = vmatprep.subr.mxu0 0.0
        %1236 = vmatpush1.msra.mxu0 0.0
        %1237 = vmatprep.subr.mxu0 0.0
        %1238 = vmatpush1.msra.mxu0 0.0
        %1239 = vmatprep.subr.mxu0 0.0
        %1240 = vmatpush1.msra.mxu0 0.0
        %1241 = vmatprep.subr.mxu0 0.0
        %1242 = vmatpush1.msra.mxu0 0.0
        %1243 = vmatprep.subr.mxu0 0.0
        %1244 = vmatpush1.msra.mxu0 0.0
        %1245 = vmatprep.subr.mxu0 0.0
        %1246 = vmatpush1.msra.mxu0 0.0
        %1247 = vmatprep.subr.mxu0 0.0
        %1248 = vmatpush1.msra.mxu0 0.0
        %1249 = vmatprep.subr.mxu0 0.0
        %1250 = vmatpush1.msra.mxu0 0.0
        %1251 = vmatprep.subr.mxu0 0.0
        %1252 = vmatpush1.msra.mxu0 0.0
        %1253 = vmatprep.subr.mxu0 0.0
        %1254 = vmatpush1.msra.mxu0 0.0
        %1255 = vmatprep.subr.mxu0 0.0
        %1256 = vmatpush1.msra.mxu0 0.0
        %1257 = vmatprep.subr.mxu0 0.0
        %1258 = vmatpush1.msra.mxu0 0.0
        %1259 = vmatprep.subr.mxu0 0.0
        %1260 = vmatpush1.msra.mxu0 0.0
        %1261 = vmatprep.subr.mxu0 0.0
        %1262 = vmatpush1.msra.mxu0 0.0
        %1263 = vmatprep.subr.mxu0 0.0
        %1264 = vmatpush1.msra.mxu0 0.0
        %1265 = vmatprep.subr.mxu0 0.0
        %1266 = vmatpush1.msra.mxu0 0.0
        %1267 = vmatprep.subr.mxu0 0.0
        %1268 = vmatpush1.msra.mxu0 0.0
        %1269 = vmatprep.subr.mxu0 0.0
        %1270 = vmatpush1.msra.mxu0 0.0
        %1271 = vmatprep.subr.mxu0 0.0
        %1272 = vmatpush1.msra.mxu0 0.0
        %1273 = vmatprep.subr.mxu0 0.0
        %1274 = vmatpush1.msra.mxu0 0.0
        %1275 = vmatprep.subr.mxu0 0.0
        %1276 = vmatpush1.msra.mxu0 0.0
        %1277 = vmatprep.subr.mxu0 0.0
        %1278 = vmatpush1.msra.mxu0 0.0
        %1279 = vmatprep.subr.mxu0 0.0
        %1280 = vmatpush1.msra.mxu0 0.0
        %1281 = vmatprep.subr.mxu0 0.0
        %1282 = vmatpush1.msra.mxu0 0.0
        %1283 = vmatprep.subr.mxu0 0.0
        %1284 = vmatpush1.msra.mxu0 0.0
        %1285 = vmatprep.subr.mxu0 0.0
        %1286 = vmatpush1.msra.mxu0 0.0
        %1287 = vmatprep.subr.mxu0 0.0
        %1288 = vmatpush1.msra.mxu0 0.0
        %1289 = vmatprep.subr.mxu0 0.0
        %1290 = vmatpush1.msra.mxu0 0.0
        %1291 = vmatprep.subr.mxu0 0.0
        %1292 = vmatpush1.msra.mxu0 0.0
        %1293 = vmatprep.subr.mxu0 0.0
        %1294 = vmatpush1.msra.mxu0 0.0
        %1295 = vmatprep.subr.mxu0 0.0
        %1296 = vmatpush1.msra.mxu0 0.0
        %1297 = vmatprep.mubr.f32.mxu0 0.0
        %1298 = vmatmul.mubr.f32.gmra.mrb[0].mxu0 %v1225
        %v1299 = vpop.f32.mrb[0].mxu0
        %v1300 = vadd.f32 0.0, %v1299
        %v1301 = vpop.f32.mrb[0].mxu0
        %v1302 = vadd.f32 0.0, %v1301
        %1303 = vdwg.mxu0
        %1304 = vmatprep.subr.mxu0 0.0
        %1305 = vmatpush1.msra.mxu0 %v1231
        %1306 = vmatprep.subr.mxu0 0.0
        %1307 = vmatpush1.msra.mxu0 0.0
        %1308 = vmatprep.subr.mxu0 0.0
        %1309 = vmatpush1.msra.mxu0 0.0
        %1310 = vmatprep.subr.mxu0 0.0
        %1311 = vmatpush1.msra.mxu0 0.0
        %1312 = vmatprep.subr.mxu0 0.0
        %1313 = vmatpush1.msra.mxu0 0.0
        %1314 = vmatprep.subr.mxu0 0.0
        %1315 = vmatpush1.msra.mxu0 0.0
        %1316 = vmatprep.subr.mxu0 0.0
        %1317 = vmatpush1.msra.mxu0 0.0
        %1318 = vmatprep.subr.mxu0 0.0
        %1319 = vmatpush1.msra.mxu0 0.0
        %1320 = vmatprep.subr.mxu0 0.0
        %1321 = vmatpush1.msra.mxu0 0.0
        %1322 = vmatprep.subr.mxu0 0.0
        %1323 = vmatpush1.msra.mxu0 0.0
        %1324 = vmatprep.subr.mxu0 0.0
        %1325 = vmatpush1.msra.mxu0 0.0
        %1326 = vmatprep.subr.mxu0 0.0
        %1327 = vmatpush1.msra.mxu0 0.0
        %1328 = vmatprep.subr.mxu0 0.0
        %1329 = vmatpush1.msra.mxu0 0.0
        %1330 = vmatprep.subr.mxu0 0.0
        %1331 = vmatpush1.msra.mxu0 0.0
        %1332 = vmatprep.subr.mxu0 0.0
        %1333 = vmatpush1.msra.mxu0 0.0
        %1334 = vmatprep.subr.mxu0 0.0
        %1335 = vmatpush1.msra.mxu0 0.0
        %1336 = vmatprep.subr.mxu0 0.0
        %1337 = vmatpush1.msra.mxu0 0.0
        %1338 = vmatprep.subr.mxu0 0.0
        %1339 = vmatpush1.msra.mxu0 0.0
        %1340 = vmatprep.subr.mxu0 0.0
        %1341 = vmatpush1.msra.mxu0 0.0
        %1342 = vmatprep.subr.mxu0 0.0
        %1343 = vmatpush1.msra.mxu0 0.0
        %1344 = vmatprep.subr.mxu0 0.0
        %1345 = vmatpush1.msra.mxu0 0.0
        %1346 = vmatprep.subr.mxu0 0.0
        %1347 = vmatpush1.msra.mxu0 0.0
        %1348 = vmatprep.subr.mxu0 0.0
        %1349 = vmatpush1.msra.mxu0 0.0
        %1350 = vmatprep.subr.mxu0 0.0
        %1351 = vmatpush1.msra.mxu0 0.0
        %1352 = vmatprep.subr.mxu0 0.0
        %1353 = vmatpush1.msra.mxu0 0.0
        %1354 = vmatprep.subr.mxu0 0.0
        %1355 = vmatpush1.msra.mxu0 0.0
        %1356 = vmatprep.subr.mxu0 0.0
        %1357 = vmatpush1.msra.mxu0 0.0
        %1358 = vmatprep.subr.mxu0 0.0
        %1359 = vmatpush1.msra.mxu0 0.0
        %1360 = vmatprep.subr.mxu0 0.0
        %1361 = vmatpush1.msra.mxu0 0.0
        %1362 = vmatprep.subr.mxu0 0.0
        %1363 = vmatpush1.msra.mxu0 0.0
        %1364 = vmatprep.subr.mxu0 0.0
        %1365 = vmatpush1.msra.mxu0 0.0
        %1366 = vmatprep.subr.mxu0 0.0
        %1367 = vmatpush1.msra.mxu0 0.0
        %1368 = vmatprep.mubr.f32.mxu0 0.0
        %1369 = vmatmul.mubr.f32.gmra.mrb[0].mxu0 %v1225
        %v1370 = vpop.f32.mrb[0].mxu0
        %v1371 = vadd.f32 0.0, %v1370
        %v1372 = vpop.f32.mrb[0].mxu0
        %1373 = vdwg.mxu0
        %v1374 = vadd.f32 %v1205, %v1300
        %v1375 = vadd.f32 %v1206, %v1302
        %v1376 = vadd.f32 %v1207, %v1371
        %s1377 = scalar_lea.vmem %s1, 56
        %v1378 = vld [vmem:[%s1377] sm:$0xff]
        %v1379 = vld [vmem:[%s208] sm:$0xff]
        %v1380 = vld [vmem:[%s208 + $0x8] sm:$0xf]
        %v1383 = vcombine.high %v1379, %v1379
        %1384 = vrot.lane.b32.xlu0 %v1379, 107
        %v1385 = vpop.permute.xlu0 %1384
        %1386 = vrot.lane.b32.xlu0 %v1383, 107
        %v1387 = vpop.permute.xlu0 %1386
        %1388 = vrot.lane.b32.xlu0 %v1380, 107
        %v1389 = vpop.permute.xlu0 %1388
        %vm1390 = vcmask 875520
        %v1391 = vsel %vm1390, %v1385, %v1387
        %v1392 = vsel %vm1390, %v1387, %v1389
        %v1394 = vsel %vm230, %v1378, 0
        %v1396 = vsel %vm234, %v1391, 0
        %v1398 = vsel %vm234, %v1392, 0
        %v1400 = vsel %vm234, %v1389, 0
        %1402 = vmatprep.subr.mxu0 %v1398
        %1403 = vmatpush1.msra.mxu0 %v1396
        %1404 = vmatprep.subr.mxu0 0.0
        %1405 = vmatpush1.msra.mxu0 0.0
        %1406 = vmatprep.subr.mxu0 0.0
        %1407 = vmatpush1.msra.mxu0 0.0
        %1408 = vmatprep.subr.mxu0 0.0
        %1409 = vmatpush1.msra.mxu0 0.0
        %1410 = vmatprep.subr.mxu0 0.0
        %1411 = vmatpush1.msra.mxu0 0.0
        %1412 = vmatprep.subr.mxu0 0.0
        %1413 = vmatpush1.msra.mxu0 0.0
        %1414 = vmatprep.subr.mxu0 0.0
        %1415 = vmatpush1.msra.mxu0 0.0
        %1416 = vmatprep.subr.mxu0 0.0
        %1417 = vmatpush1.msra.mxu0 0.0
        %1418 = vmatprep.subr.mxu0 0.0
        %1419 = vmatpush1.msra.mxu0 0.0
        %1420 = vmatprep.subr.mxu0 0.0
        %1421 = vmatpush1.msra.mxu0 0.0
        %1422 = vmatprep.subr.mxu0 0.0
        %1423 = vmatpush1.msra.mxu0 0.0
        %1424 = vmatprep.subr.mxu0 0.0
        %1425 = vmatpush1.msra.mxu0 0.0
        %1426 = vmatprep.subr.mxu0 0.0
        %1427 = vmatpush1.msra.mxu0 0.0
        %1428 = vmatprep.subr.mxu0 0.0
        %1429 = vmatpush1.msra.mxu0 0.0
        %1430 = vmatprep.subr.mxu0 0.0
        %1431 = vmatpush1.msra.mxu0 0.0
        %1432 = vmatprep.subr.mxu0 0.0
        %1433 = vmatpush1.msra.mxu0 0.0
        %1434 = vmatprep.subr.mxu0 0.0
        %1435 = vmatpush1.msra.mxu0 0.0
        %1436 = vmatprep.subr.mxu0 0.0
        %1437 = vmatpush1.msra.mxu0 0.0
        %1438 = vmatprep.subr.mxu0 0.0
        %1439 = vmatpush1.msra.mxu0 0.0
        %1440 = vmatprep.subr.mxu0 0.0
        %1441 = vmatpush1.msra.mxu0 0.0
        %1442 = vmatprep.subr.mxu0 0.0
        %1443 = vmatpush1.msra.mxu0 0.0
        %1444 = vmatprep.subr.mxu0 0.0
        %1445 = vmatpush1.msra.mxu0 0.0
        %1446 = vmatprep.subr.mxu0 0.0
        %1447 = vmatpush1.msra.mxu0 0.0
        %1448 = vmatprep.subr.mxu0 0.0
        %1449 = vmatpush1.msra.mxu0 0.0
        %1450 = vmatprep.subr.mxu0 0.0
        %1451 = vmatpush1.msra.mxu0 0.0
        %1452 = vmatprep.subr.mxu0 0.0
        %1453 = vmatpush1.msra.mxu0 0.0
        %1454 = vmatprep.subr.mxu0 0.0
        %1455 = vmatpush1.msra.mxu0 0.0
        %1456 = vmatprep.subr.mxu0 0.0
        %1457 = vmatpush1.msra.mxu0 0.0
        %1458 = vmatprep.subr.mxu0 0.0
        %1459 = vmatpush1.msra.mxu0 0.0
        %1460 = vmatprep.subr.mxu0 0.0
        %1461 = vmatpush1.msra.mxu0 0.0
        %1462 = vmatprep.subr.mxu0 0.0
        %1463 = vmatpush1.msra.mxu0 0.0
        %1464 = vmatprep.subr.mxu0 0.0
        %1465 = vmatpush1.msra.mxu0 0.0
        %1466 = vmatprep.mubr.f32.mxu0 0.0
        %1467 = vmatmul.mubr.f32.gmra.mrb[0].mxu0 %v1394
        %v1468 = vpop.f32.mrb[0].mxu0
        %v1469 = vadd.f32 0.0, %v1468
        %v1470 = vpop.f32.mrb[0].mxu0
        %v1471 = vadd.f32 0.0, %v1470
        %1472 = vdwg.mxu0
        %1473 = vmatprep.subr.mxu0 0.0
        %1474 = vmatpush1.msra.mxu0 %v1400
        %1475 = vmatprep.subr.mxu0 0.0
        %1476 = vmatpush1.msra.mxu0 0.0
        %1477 = vmatprep.subr.mxu0 0.0
        %1478 = vmatpush1.msra.mxu0 0.0
        %1479 = vmatprep.subr.mxu0 0.0
        %1480 = vmatpush1.msra.mxu0 0.0
        %1481 = vmatprep.subr.mxu0 0.0
        %1482 = vmatpush1.msra.mxu0 0.0
        %1483 = vmatprep.subr.mxu0 0.0
        %1484 = vmatpush1.msra.mxu0 0.0
        %1485 = vmatprep.subr.mxu0 0.0
        %1486 = vmatpush1.msra.mxu0 0.0
        %1487 = vmatprep.subr.mxu0 0.0
        %1488 = vmatpush1.msra.mxu0 0.0
        %1489 = vmatprep.subr.mxu0 0.0
        %1490 = vmatpush1.msra.mxu0 0.0
        %1491 = vmatprep.subr.mxu0 0.0
        %1492 = vmatpush1.msra.mxu0 0.0
        %1493 = vmatprep.subr.mxu0 0.0
        %1494 = vmatpush1.msra.mxu0 0.0
        %1495 = vmatprep.subr.mxu0 0.0
        %1496 = vmatpush1.msra.mxu0 0.0
        %1497 = vmatprep.subr.mxu0 0.0
        %1498 = vmatpush1.msra.mxu0 0.0
        %1499 = vmatprep.subr.mxu0 0.0
        %1500 = vmatpush1.msra.mxu0 0.0
        %1501 = vmatprep.subr.mxu0 0.0
        %1502 = vmatpush1.msra.mxu0 0.0
        %1503 = vmatprep.subr.mxu0 0.0
        %1504 = vmatpush1.msra.mxu0 0.0
        %1505 = vmatprep.subr.mxu0 0.0
        %1506 = vmatpush1.msra.mxu0 0.0
        %1507 = vmatprep.subr.mxu0 0.0
        %1508 = vmatpush1.msra.mxu0 0.0
        %1509 = vmatprep.subr.mxu0 0.0
        %1510 = vmatpush1.msra.mxu0 0.0
        %1511 = vmatprep.subr.mxu0 0.0
        %1512 = vmatpush1.msra.mxu0 0.0
        %1513 = vmatprep.subr.mxu0 0.0
        %1514 = vmatpush1.msra.mxu0 0.0
        %1515 = vmatprep.subr.mxu0 0.0
        %1516 = vmatpush1.msra.mxu0 0.0
        %1517 = vmatprep.subr.mxu0 0.0
        %1518 = vmatpush1.msra.mxu0 0.0
        %1519 = vmatprep.subr.mxu0 0.0
        %1520 = vmatpush1.msra.mxu0 0.0
        %1521 = vmatprep.subr.mxu0 0.0
        %1522 = vmatpush1.msra.mxu0 0.0
        %1523 = vmatprep.subr.mxu0 0.0
        %1524 = vmatpush1.msra.mxu0 0.0
        %1525 = vmatprep.subr.mxu0 0.0
        %1526 = vmatpush1.msra.mxu0 0.0
        %1527 = vmatprep.subr.mxu0 0.0
        %1528 = vmatpush1.msra.mxu0 0.0
        %1529 = vmatprep.subr.mxu0 0.0
        %1530 = vmatpush1.msra.mxu0 0.0
        %1531 = vmatprep.subr.mxu0 0.0
        %1532 = vmatpush1.msra.mxu0 0.0
        %1533 = vmatprep.subr.mxu0 0.0
        %1534 = vmatpush1.msra.mxu0 0.0
        %1535 = vmatprep.subr.mxu0 0.0
        %1536 = vmatpush1.msra.mxu0 0.0
        %1537 = vmatprep.mubr.f32.mxu0 0.0
        %1538 = vmatmul.mubr.f32.gmra.mrb[0].mxu0 %v1394
        %v1539 = vpop.f32.mrb[0].mxu0
        %v1540 = vadd.f32 0.0, %v1539
        %v1541 = vpop.f32.mrb[0].mxu0
        %1542 = vdwg.mxu0
        %v1543 = vadd.f32 %v1374, %v1469
        %v1544 = vadd.f32 %v1375, %v1471
        %v1545 = vadd.f32 %v1376, %v1540
        %s1546 = scalar_lea.vmem %s1, 64
        %v1547 = vld [vmem:[%s1546] sm:$0xff]
        %v1548 = vld [vmem:[%s208] sm:$0xff]
        %v1549 = vld [vmem:[%s208 + $0x8] sm:$0xf]
        %v1552 = vcombine.high %v1548, %v1548
        %1553 = vrot.lane.b32.xlu0 %v1548, 92
        %v1554 = vpop.permute.xlu0 %1553
        %1555 = vrot.lane.b32.xlu0 %v1552, 92
        %v1556 = vpop.permute.xlu0 %1555
        %1557 = vrot.lane.b32.xlu0 %v1549, 92
        %v1558 = vpop.permute.xlu0 %1557
        %vm1559 = vcmask 752640
        %v1560 = vsel %vm1559, %v1554, %v1556
        %v1561 = vsel %vm1559, %v1556, %v1558
        %v1563 = vsel %vm230, %v1547, 0
        %v1565 = vsel %vm234, %v1560, 0
        %v1567 = vsel %vm234, %v1561, 0
        %v1569 = vsel %vm234, %v1558, 0
        %1571 = vmatprep.subr.mxu0 %v1567
        %1572 = vmatpush1.msra.mxu0 %v1565
        %1573 = vmatprep.subr.mxu0 0.0
        %1574 = vmatpush1.msra.mxu0 0.0
        %1575 = vmatprep.subr.mxu0 0.0
        %1576 = vmatpush1.msra.mxu0 0.0
        %1577 = vmatprep.subr.mxu0 0.0
        %1578 = vmatpush1.msra.mxu0 0.0
        %1579 = vmatprep.subr.mxu0 0.0
        %1580 = vmatpush1.msra.mxu0 0.0
        %1581 = vmatprep.subr.mxu0 0.0
        %1582 = vmatpush1.msra.mxu0 0.0
        %1583 = vmatprep.subr.mxu0 0.0
        %1584 = vmatpush1.msra.mxu0 0.0
        %1585 = vmatprep.subr.mxu0 0.0
        %1586 = vmatpush1.msra.mxu0 0.0
        %1587 = vmatprep.subr.mxu0 0.0
        %1588 = vmatpush1.msra.mxu0 0.0
        %1589 = vmatprep.subr.mxu0 0.0
        %1590 = vmatpush1.msra.mxu0 0.0
        %1591 = vmatprep.subr.mxu0 0.0
        %1592 = vmatpush1.msra.mxu0 0.0
        %1593 = vmatprep.subr.mxu0 0.0
        %1594 = vmatpush1.msra.mxu0 0.0
        %1595 = vmatprep.subr.mxu0 0.0
        %1596 = vmatpush1.msra.mxu0 0.0
        %1597 = vmatprep.subr.mxu0 0.0
        %1598 = vmatpush1.msra.mxu0 0.0
        %1599 = vmatprep.subr.mxu0 0.0
        %1600 = vmatpush1.msra.mxu0 0.0
        %1601 = vmatprep.subr.mxu0 0.0
        %1602 = vmatpush1.msra.mxu0 0.0
        %1603 = vmatprep.subr.mxu0 0.0
        %1604 = vmatpush1.msra.mxu0 0.0
        %1605 = vmatprep.subr.mxu0 0.0
        %1606 = vmatpush1.msra.mxu0 0.0
        %1607 = vmatprep.subr.mxu0 0.0
        %1608 = vmatpush1.msra.mxu0 0.0
        %1609 = vmatprep.subr.mxu0 0.0
        %1610 = vmatpush1.msra.mxu0 0.0
        %1611 = vmatprep.subr.mxu0 0.0
        %1612 = vmatpush1.msra.mxu0 0.0
        %1613 = vmatprep.subr.mxu0 0.0
        %1614 = vmatpush1.msra.mxu0 0.0
        %1615 = vmatprep.subr.mxu0 0.0
        %1616 = vmatpush1.msra.mxu0 0.0
        %1617 = vmatprep.subr.mxu0 0.0
        %1618 = vmatpush1.msra.mxu0 0.0
        %1619 = vmatprep.subr.mxu0 0.0
        %1620 = vmatpush1.msra.mxu0 0.0
        %1621 = vmatprep.subr.mxu0 0.0
        %1622 = vmatpush1.msra.mxu0 0.0
        %1623 = vmatprep.subr.mxu0 0.0
        %1624 = vmatpush1.msra.mxu0 0.0
        %1625 = vmatprep.subr.mxu0 0.0
        %1626 = vmatpush1.msra.mxu0 0.0
        %1627 = vmatprep.subr.mxu0 0.0
        %1628 = vmatpush1.msra.mxu0 0.0
        %1629 = vmatprep.subr.mxu0 0.0
        %1630 = vmatpush1.msra.mxu0 0.0
        %1631 = vmatprep.subr.mxu0 0.0
        %1632 = vmatpush1.msra.mxu0 0.0
        %1633 = vmatprep.subr.mxu0 0.0
        %1634 = vmatpush1.msra.mxu0 0.0
        %1635 = vmatprep.mubr.f32.mxu0 0.0
        %1636 = vmatmul.mubr.f32.gmra.mrb[0].mxu0 %v1563
        %v1637 = vpop.f32.mrb[0].mxu0
        %v1638 = vadd.f32 0.0, %v1637
        %v1639 = vpop.f32.mrb[0].mxu0
        %v1640 = vadd.f32 0.0, %v1639
        %1641 = vdwg.mxu0
        %1642 = vmatprep.subr.mxu0 0.0
        %1643 = vmatpush1.msra.mxu0 %v1569
        %1644 = vmatprep.subr.mxu0 0.0
        %1645 = vmatpush1.msra.mxu0 0.0
        %1646 = vmatprep.subr.mxu0 0.0
        %1647 = vmatpush1.msra.mxu0 0.0
        %1648 = vmatprep.subr.mxu0 0.0
        %1649 = vmatpush1.msra.mxu0 0.0
        %1650 = vmatprep.subr.mxu0 0.0
        %1651 = vmatpush1.msra.mxu0 0.0
        %1652 = vmatprep.subr.mxu0 0.0
        %1653 = vmatpush1.msra.mxu0 0.0
        %1654 = vmatprep.subr.mxu0 0.0
        %1655 = vmatpush1.msra.mxu0 0.0
        %1656 = vmatprep.subr.mxu0 0.0
        %1657 = vmatpush1.msra.mxu0 0.0
        %1658 = vmatprep.subr.mxu0 0.0
        %1659 = vmatpush1.msra.mxu0 0.0
        %1660 = vmatprep.subr.mxu0 0.0
        %1661 = vmatpush1.msra.mxu0 0.0
        %1662 = vmatprep.subr.mxu0 0.0
        %1663 = vmatpush1.msra.mxu0 0.0
        %1664 = vmatprep.subr.mxu0 0.0
        %1665 = vmatpush1.msra.mxu0 0.0
        %1666 = vmatprep.subr.mxu0 0.0
        %1667 = vmatpush1.msra.mxu0 0.0
        %1668 = vmatprep.subr.mxu0 0.0
        %1669 = vmatpush1.msra.mxu0 0.0
        %1670 = vmatprep.subr.mxu0 0.0
        %1671 = vmatpush1.msra.mxu0 0.0
        %1672 = vmatprep.subr.mxu0 0.0
        %1673 = vmatpush1.msra.mxu0 0.0
        %1674 = vmatprep.subr.mxu0 0.0
        %1675 = vmatpush1.msra.mxu0 0.0
        %1676 = vmatprep.subr.mxu0 0.0
        %1677 = vmatpush1.msra.mxu0 0.0
        %1678 = vmatprep.subr.mxu0 0.0
        %1679 = vmatpush1.msra.mxu0 0.0
        %1680 = vmatprep.subr.mxu0 0.0
        %1681 = vmatpush1.msra.mxu0 0.0
        %1682 = vmatprep.subr.mxu0 0.0
        %1683 = vmatpush1.msra.mxu0 0.0
        %1684 = vmatprep.subr.mxu0 0.0
        %1685 = vmatpush1.msra.mxu0 0.0
        %1686 = vmatprep.subr.mxu0 0.0
        %1687 = vmatpush1.msra.mxu0 0.0
        %1688 = vmatprep.subr.mxu0 0.0
        %1689 = vmatpush1.msra.mxu0 0.0
        %1690 = vmatprep.subr.mxu0 0.0
        %1691 = vmatpush1.msra.mxu0 0.0
        %1692 = vmatprep.subr.mxu0 0.0
        %1693 = vmatpush1.msra.mxu0 0.0
        %1694 = vmatprep.subr.mxu0 0.0
        %1695 = vmatpush1.msra.mxu0 0.0
        %1696 = vmatprep.subr.mxu0 0.0
        %1697 = vmatpush1.msra.mxu0 0.0
        %1698 = vmatprep.subr.mxu0 0.0
        %1699 = vmatpush1.msra.mxu0 0.0
        %1700 = vmatprep.subr.mxu0 0.0
        %1701 = vmatpush1.msra.mxu0 0.0
        %1702 = vmatprep.subr.mxu0 0.0
        %1703 = vmatpush1.msra.mxu0 0.0
        %1704 = vmatprep.subr.mxu0 0.0
        %1705 = vmatpush1.msra.mxu0 0.0
        %1706 = vmatprep.mubr.f32.mxu0 0.0
        %1707 = vmatmul.mubr.f32.gmra.mrb[0].mxu0 %v1563
        %v1708 = vpop.f32.mrb[0].mxu0
        %v1709 = vadd.f32 0.0, %v1708
        %v1710 = vpop.f32.mrb[0].mxu0
        %1711 = vdwg.mxu0
        %v1712 = vadd.f32 %v1543, %v1638
        %v1713 = vadd.f32 %v1544, %v1640
        %v1714 = vadd.f32 %v1545, %v1709
        %s1715 = scalar_lea.vmem %s1, 72
        %v1716 = vld [vmem:[%s1715] sm:$0xff]
        %v1717 = vld [vmem:[%s208] sm:$0xff]
        %v1718 = vld [vmem:[%s208 + $0x8] sm:$0xf]
        %v1721 = vcombine.high %v1717, %v1717
        %1722 = vrot.lane.b32.xlu0 %v1717, 91
        %v1723 = vpop.permute.xlu0 %1722
        %1724 = vrot.lane.b32.xlu0 %v1721, 91
        %v1725 = vpop.permute.xlu0 %1724
        %1726 = vrot.lane.b32.xlu0 %v1718, 91
        %v1727 = vpop.permute.xlu0 %1726
        %vm1728 = vcmask 744448
        %v1729 = vsel %vm1728, %v1723, %v1725
        %v1730 = vsel %vm1728, %v1725, %v1727
        %v1732 = vsel %vm230, %v1716, 0
        %v1734 = vsel %vm234, %v1729, 0
        %v1736 = vsel %vm234, %v1730, 0
        %v1738 = vsel %vm234, %v1727, 0
        %1740 = vmatprep.subr.mxu0 %v1736
        %1741 = vmatpush1.msra.mxu0 %v1734
        %1742 = vmatprep.subr.mxu0 0.0
        %1743 = vmatpush1.msra.mxu0 0.0
        %1744 = vmatprep.subr.mxu0 0.0
        %1745 = vmatpush1.msra.mxu0 0.0
        %1746 = vmatprep.subr.mxu0 0.0
        %1747 = vmatpush1.msra.mxu0 0.0
        %1748 = vmatprep.subr.mxu0 0.0
        %1749 = vmatpush1.msra.mxu0 0.0
        %1750 = vmatprep.subr.mxu0 0.0
        %1751 = vmatpush1.msra.mxu0 0.0
        %1752 = vmatprep.subr.mxu0 0.0
        %1753 = vmatpush1.msra.mxu0 0.0
        %1754 = vmatprep.subr.mxu0 0.0
        %1755 = vmatpush1.msra.mxu0 0.0
        %1756 = vmatprep.subr.mxu0 0.0
        %1757 = vmatpush1.msra.mxu0 0.0
        %1758 = vmatprep.subr.mxu0 0.0
        %1759 = vmatpush1.msra.mxu0 0.0
        %1760 = vmatprep.subr.mxu0 0.0
        %1761 = vmatpush1.msra.mxu0 0.0
        %1762 = vmatprep.subr.mxu0 0.0
        %1763 = vmatpush1.msra.mxu0 0.0
        %1764 = vmatprep.subr.mxu0 0.0
        %1765 = vmatpush1.msra.mxu0 0.0
        %1766 = vmatprep.subr.mxu0 0.0
        %1767 = vmatpush1.msra.mxu0 0.0
        %1768 = vmatprep.subr.mxu0 0.0
        %1769 = vmatpush1.msra.mxu0 0.0
        %1770 = vmatprep.subr.mxu0 0.0
        %1771 = vmatpush1.msra.mxu0 0.0
        %1772 = vmatprep.subr.mxu0 0.0
        %1773 = vmatpush1.msra.mxu0 0.0
        %1774 = vmatprep.subr.mxu0 0.0
        %1775 = vmatpush1.msra.mxu0 0.0
        %1776 = vmatprep.subr.mxu0 0.0
        %1777 = vmatpush1.msra.mxu0 0.0
        %1778 = vmatprep.subr.mxu0 0.0
        %1779 = vmatpush1.msra.mxu0 0.0
        %1780 = vmatprep.subr.mxu0 0.0
        %1781 = vmatpush1.msra.mxu0 0.0
        %1782 = vmatprep.subr.mxu0 0.0
        %1783 = vmatpush1.msra.mxu0 0.0
        %1784 = vmatprep.subr.mxu0 0.0
        %1785 = vmatpush1.msra.mxu0 0.0
        %1786 = vmatprep.subr.mxu0 0.0
        %1787 = vmatpush1.msra.mxu0 0.0
        %1788 = vmatprep.subr.mxu0 0.0
        %1789 = vmatpush1.msra.mxu0 0.0
        %1790 = vmatprep.subr.mxu0 0.0
        %1791 = vmatpush1.msra.mxu0 0.0
        %1792 = vmatprep.subr.mxu0 0.0
        %1793 = vmatpush1.msra.mxu0 0.0
        %1794 = vmatprep.subr.mxu0 0.0
        %1795 = vmatpush1.msra.mxu0 0.0
        %1796 = vmatprep.subr.mxu0 0.0
        %1797 = vmatpush1.msra.mxu0 0.0
        %1798 = vmatprep.subr.mxu0 0.0
        %1799 = vmatpush1.msra.mxu0 0.0
        %1800 = vmatprep.subr.mxu0 0.0
        %1801 = vmatpush1.msra.mxu0 0.0
        %1802 = vmatprep.subr.mxu0 0.0
        %1803 = vmatpush1.msra.mxu0 0.0
        %1804 = vmatprep.mubr.f32.mxu0 0.0
        %1805 = vmatmul.mubr.f32.gmra.mrb[0].mxu0 %v1732
        %v1806 = vpop.f32.mrb[0].mxu0
        %v1807 = vadd.f32 0.0, %v1806
        %v1808 = vpop.f32.mrb[0].mxu0
        %v1809 = vadd.f32 0.0, %v1808
        %1810 = vdwg.mxu0
        %1811 = vmatprep.subr.mxu0 0.0
        %1812 = vmatpush1.msra.mxu0 %v1738
        %1813 = vmatprep.subr.mxu0 0.0
        %1814 = vmatpush1.msra.mxu0 0.0
        %1815 = vmatprep.subr.mxu0 0.0
        %1816 = vmatpush1.msra.mxu0 0.0
        %1817 = vmatprep.subr.mxu0 0.0
        %1818 = vmatpush1.msra.mxu0 0.0
        %1819 = vmatprep.subr.mxu0 0.0
        %1820 = vmatpush1.msra.mxu0 0.0
        %1821 = vmatprep.subr.mxu0 0.0
        %1822 = vmatpush1.msra.mxu0 0.0
        %1823 = vmatprep.subr.mxu0 0.0
        %1824 = vmatpush1.msra.mxu0 0.0
        %1825 = vmatprep.subr.mxu0 0.0
        %1826 = vmatpush1.msra.mxu0 0.0
        %1827 = vmatprep.subr.mxu0 0.0
        %1828 = vmatpush1.msra.mxu0 0.0
        %1829 = vmatprep.subr.mxu0 0.0
        %1830 = vmatpush1.msra.mxu0 0.0
        %1831 = vmatprep.subr.mxu0 0.0
        %1832 = vmatpush1.msra.mxu0 0.0
        %1833 = vmatprep.subr.mxu0 0.0
        %1834 = vmatpush1.msra.mxu0 0.0
        %1835 = vmatprep.subr.mxu0 0.0
        %1836 = vmatpush1.msra.mxu0 0.0
        %1837 = vmatprep.subr.mxu0 0.0
        %1838 = vmatpush1.msra.mxu0 0.0
        %1839 = vmatprep.subr.mxu0 0.0
        %1840 = vmatpush1.msra.mxu0 0.0
        %1841 = vmatprep.subr.mxu0 0.0
        %1842 = vmatpush1.msra.mxu0 0.0
        %1843 = vmatprep.subr.mxu0 0.0
        %1844 = vmatpush1.msra.mxu0 0.0
        %1845 = vmatprep.subr.mxu0 0.0
        %1846 = vmatpush1.msra.mxu0 0.0
        %1847 = vmatprep.subr.mxu0 0.0
        %1848 = vmatpush1.msra.mxu0 0.0
        %1849 = vmatprep.subr.mxu0 0.0
        %1850 = vmatpush1.msra.mxu0 0.0
        %1851 = vmatprep.subr.mxu0 0.0
        %1852 = vmatpush1.msra.mxu0 0.0
        %1853 = vmatprep.subr.mxu0 0.0
        %1854 = vmatpush1.msra.mxu0 0.0
        %1855 = vmatprep.subr.mxu0 0.0
        %1856 = vmatpush1.msra.mxu0 0.0
        %1857 = vmatprep.subr.mxu0 0.0
        %1858 = vmatpush1.msra.mxu0 0.0
        %1859 = vmatprep.subr.mxu0 0.0
        %1860 = vmatpush1.msra.mxu0 0.0
        %1861 = vmatprep.subr.mxu0 0.0
        %1862 = vmatpush1.msra.mxu0 0.0
        %1863 = vmatprep.subr.mxu0 0.0
        %1864 = vmatpush1.msra.mxu0 0.0
        %1865 = vmatprep.subr.mxu0 0.0
        %1866 = vmatpush1.msra.mxu0 0.0
        %1867 = vmatprep.subr.mxu0 0.0
        %1868 = vmatpush1.msra.mxu0 0.0
        %1869 = vmatprep.subr.mxu0 0.0
        %1870 = vmatpush1.msra.mxu0 0.0
        %1871 = vmatprep.subr.mxu0 0.0
        %1872 = vmatpush1.msra.mxu0 0.0
        %1873 = vmatprep.subr.mxu0 0.0
        %1874 = vmatpush1.msra.mxu0 0.0
        %1875 = vmatprep.mubr.f32.mxu0 0.0
        %1876 = vmatmul.mubr.f32.gmra.mrb[0].mxu0 %v1732
        %v1877 = vpop.f32.mrb[0].mxu0
        %v1878 = vadd.f32 0.0, %v1877
        %v1879 = vpop.f32.mrb[0].mxu0
        %1880 = vdwg.mxu0
        %v1881 = vadd.f32 %v1712, %v1807
        %v1882 = vadd.f32 %v1713, %v1809
        %v1883 = vadd.f32 %v1714, %v1878
        %s1884 = scalar_lea.vmem %s1, 80
        %v1885 = vld [vmem:[%s1884] sm:$0xff]
        %v1886 = vld [vmem:[%s208] sm:$0xff]
        %v1887 = vld [vmem:[%s208 + $0x8] sm:$0xf]
        %v1890 = vcombine.high %v1886, %v1886
        %1891 = vrot.lane.b32.xlu0 %v1886, 90
        %v1892 = vpop.permute.xlu0 %1891
        %1893 = vrot.lane.b32.xlu0 %v1890, 90
        %v1894 = vpop.permute.xlu0 %1893
        %1895 = vrot.lane.b32.xlu0 %v1887, 90
        %v1896 = vpop.permute.xlu0 %1895
        %vm1897 = vcmask 736256
        %v1898 = vsel %vm1897, %v1892, %v1894
        %v1899 = vsel %vm1897, %v1894, %v1896
        %v1901 = vsel %vm230, %v1885, 0
        %v1903 = vsel %vm234, %v1898, 0
        %v1905 = vsel %vm234, %v1899, 0
        %v1907 = vsel %vm234, %v1896, 0
        %1909 = vmatprep.subr.mxu0 %v1905
        %1910 = vmatpush1.msra.mxu0 %v1903
        %1911 = vmatprep.subr.mxu0 0.0
        %1912 = vmatpush1.msra.mxu0 0.0
        %1913 = vmatprep.subr.mxu0 0.0
        %1914 = vmatpush1.msra.mxu0 0.0
        %1915 = vmatprep.subr.mxu0 0.0
        %1916 = vmatpush1.msra.mxu0 0.0
        %1917 = vmatprep.subr.mxu0 0.0
        %1918 = vmatpush1.msra.mxu0 0.0
        %1919 = vmatprep.subr.mxu0 0.0
        %1920 = vmatpush1.msra.mxu0 0.0
        %1921 = vmatprep.subr.mxu0 0.0
        %1922 = vmatpush1.msra.mxu0 0.0
        %1923 = vmatprep.subr.mxu0 0.0
        %1924 = vmatpush1.msra.mxu0 0.0
        %1925 = vmatprep.subr.mxu0 0.0
        %1926 = vmatpush1.msra.mxu0 0.0
        %1927 = vmatprep.subr.mxu0 0.0
        %1928 = vmatpush1.msra.mxu0 0.0
        %1929 = vmatprep.subr.mxu0 0.0
        %1930 = vmatpush1.msra.mxu0 0.0
        %1931 = vmatprep.subr.mxu0 0.0
        %1932 = vmatpush1.msra.mxu0 0.0
        %1933 = vmatprep.subr.mxu0 0.0
        %1934 = vmatpush1.msra.mxu0 0.0
        %1935 = vmatprep.subr.mxu0 0.0
        %1936 = vmatpush1.msra.mxu0 0.0
        %1937 = vmatprep.subr.mxu0 0.0
        %1938 = vmatpush1.msra.mxu0 0.0
        %1939 = vmatprep.subr.mxu0 0.0
        %1940 = vmatpush1.msra.mxu0 0.0
        %1941 = vmatprep.subr.mxu0 0.0
        %1942 = vmatpush1.msra.mxu0 0.0
        %1943 = vmatprep.subr.mxu0 0.0
        %1944 = vmatpush1.msra.mxu0 0.0
        %1945 = vmatprep.subr.mxu0 0.0
        %1946 = vmatpush1.msra.mxu0 0.0
        %1947 = vmatprep.subr.mxu0 0.0
        %1948 = vmatpush1.msra.mxu0 0.0
        %1949 = vmatprep.subr.mxu0 0.0
        %1950 = vmatpush1.msra.mxu0 0.0
        %1951 = vmatprep.subr.mxu0 0.0
        %1952 = vmatpush1.msra.mxu0 0.0
        %1953 = vmatprep.subr.mxu0 0.0
        %1954 = vmatpush1.msra.mxu0 0.0
        %1955 = vmatprep.subr.mxu0 0.0
        %1956 = vmatpush1.msra.mxu0 0.0
        %1957 = vmatprep.subr.mxu0 0.0
        %1958 = vmatpush1.msra.mxu0 0.0
        %1959 = vmatprep.subr.mxu0 0.0
        %1960 = vmatpush1.msra.mxu0 0.0
        %1961 = vmatprep.subr.mxu0 0.0
        %1962 = vmatpush1.msra.mxu0 0.0
        %1963 = vmatprep.subr.mxu0 0.0
        %1964 = vmatpush1.msra.mxu0 0.0
        %1965 = vmatprep.subr.mxu0 0.0
        %1966 = vmatpush1.msra.mxu0 0.0
        %1967 = vmatprep.subr.mxu0 0.0
        %1968 = vmatpush1.msra.mxu0 0.0
        %1969 = vmatprep.subr.mxu0 0.0
        %1970 = vmatpush1.msra.mxu0 0.0
        %1971 = vmatprep.subr.mxu0 0.0
        %1972 = vmatpush1.msra.mxu0 0.0
        %1973 = vmatprep.mubr.f32.mxu0 0.0
        %1974 = vmatmul.mubr.f32.gmra.mrb[0].mxu0 %v1901
        %v1975 = vpop.f32.mrb[0].mxu0
        %v1976 = vadd.f32 0.0, %v1975
        %v1977 = vpop.f32.mrb[0].mxu0
        %v1978 = vadd.f32 0.0, %v1977
        %1979 = vdwg.mxu0
        %1980 = vmatprep.subr.mxu0 0.0
        %1981 = vmatpush1.msra.mxu0 %v1907
        %1982 = vmatprep.subr.mxu0 0.0
        %1983 = vmatpush1.msra.mxu0 0.0
        %1984 = vmatprep.subr.mxu0 0.0
        %1985 = vmatpush1.msra.mxu0 0.0
        %1986 = vmatprep.subr.mxu0 0.0
        %1987 = vmatpush1.msra.mxu0 0.0
        %1988 = vmatprep.subr.mxu0 0.0
        %1989 = vmatpush1.msra.mxu0 0.0
        %1990 = vmatprep.subr.mxu0 0.0
        %1991 = vmatpush1.msra.mxu0 0.0
        %1992 = vmatprep.subr.mxu0 0.0
        %1993 = vmatpush1.msra.mxu0 0.0
        %1994 = vmatprep.subr.mxu0 0.0
        %1995 = vmatpush1.msra.mxu0 0.0
        %1996 = vmatprep.subr.mxu0 0.0
        %1997 = vmatpush1.msra.mxu0 0.0
        %1998 = vmatprep.subr.mxu0 0.0
        %1999 = vmatpush1.msra.mxu0 0.0
        %2000 = vmatprep.subr.mxu0 0.0
        %2001 = vmatpush1.msra.mxu0 0.0
        %2002 = vmatprep.subr.mxu0 0.0
        %2003 = vmatpush1.msra.mxu0 0.0
        %2004 = vmatprep.subr.mxu0 0.0
        %2005 = vmatpush1.msra.mxu0 0.0
        %2006 = vmatprep.subr.mxu0 0.0
        %2007 = vmatpush1.msra.mxu0 0.0
        %2008 = vmatprep.subr.mxu0 0.0
        %2009 = vmatpush1.msra.mxu0 0.0
        %2010 = vmatprep.subr.mxu0 0.0
        %2011 = vmatpush1.msra.mxu0 0.0
        %2012 = vmatprep.subr.mxu0 0.0
        %2013 = vmatpush1.msra.mxu0 0.0
        %2014 = vmatprep.subr.mxu0 0.0
        %2015 = vmatpush1.msra.mxu0 0.0
        %2016 = vmatprep.subr.mxu0 0.0
        %2017 = vmatpush1.msra.mxu0 0.0
        %2018 = vmatprep.subr.mxu0 0.0
        %2019 = vmatpush1.msra.mxu0 0.0
        %2020 = vmatprep.subr.mxu0 0.0
        %2021 = vmatpush1.msra.mxu0 0.0
        %2022 = vmatprep.subr.mxu0 0.0
        %2023 = vmatpush1.msra.mxu0 0.0
        %2024 = vmatprep.subr.mxu0 0.0
        %2025 = vmatpush1.msra.mxu0 0.0
        %2026 = vmatprep.subr.mxu0 0.0
        %2027 = vmatpush1.msra.mxu0 0.0
        %2028 = vmatprep.subr.mxu0 0.0
        %2029 = vmatpush1.msra.mxu0 0.0
        %2030 = vmatprep.subr.mxu0 0.0
        %2031 = vmatpush1.msra.mxu0 0.0
        %2032 = vmatprep.subr.mxu0 0.0
        %2033 = vmatpush1.msra.mxu0 0.0
        %2034 = vmatprep.subr.mxu0 0.0
        %2035 = vmatpush1.msra.mxu0 0.0
        %2036 = vmatprep.subr.mxu0 0.0
        %2037 = vmatpush1.msra.mxu0 0.0
        %2038 = vmatprep.subr.mxu0 0.0
        %2039 = vmatpush1.msra.mxu0 0.0
        %2040 = vmatprep.subr.mxu0 0.0
        %2041 = vmatpush1.msra.mxu0 0.0
        %2042 = vmatprep.subr.mxu0 0.0
        %2043 = vmatpush1.msra.mxu0 0.0
        %2044 = vmatprep.mubr.f32.mxu0 0.0
        %2045 = vmatmul.mubr.f32.gmra.mrb[0].mxu0 %v1901
        %v2046 = vpop.f32.mrb[0].mxu0
        %v2047 = vadd.f32 0.0, %v2046
        %v2048 = vpop.f32.mrb[0].mxu0
        %2049 = vdwg.mxu0
        %v2050 = vadd.f32 %v1881, %v1976
        %v2051 = vadd.f32 %v1882, %v1978
        %v2052 = vadd.f32 %v1883, %v2047
        %s2053 = scalar_lea.vmem %s1, 88
        %v2054 = vld [vmem:[%s2053] sm:$0xff]
        %v2055 = vld [vmem:[%s208] sm:$0xff]
        %v2056 = vld [vmem:[%s208 + $0x8] sm:$0xf]
        %v2059 = vcombine.high %v2055, %v2055
        %2060 = vrot.lane.b32.xlu0 %v2055, 89
        %v2061 = vpop.permute.xlu0 %2060
        %2062 = vrot.lane.b32.xlu0 %v2059, 89
        %v2063 = vpop.permute.xlu0 %2062
        %2064 = vrot.lane.b32.xlu0 %v2056, 89
        %v2065 = vpop.permute.xlu0 %2064
        %vm2066 = vcmask 728064
        %v2067 = vsel %vm2066, %v2061, %v2063
        %v2068 = vsel %vm2066, %v2063, %v2065
        %v2070 = vsel %vm230, %v2054, 0
        %v2072 = vsel %vm234, %v2067, 0
        %v2074 = vsel %vm234, %v2068, 0
        %v2076 = vsel %vm234, %v2065, 0
        %2078 = vmatprep.subr.mxu0 %v2074
        %2079 = vmatpush1.msra.mxu0 %v2072
        %2080 = vmatprep.subr.mxu0 0.0
        %2081 = vmatpush1.msra.mxu0 0.0
        %2082 = vmatprep.subr.mxu0 0.0
        %2083 = vmatpush1.msra.mxu0 0.0
        %2084 = vmatprep.subr.mxu0 0.0
        %2085 = vmatpush1.msra.mxu0 0.0
        %2086 = vmatprep.subr.mxu0 0.0
        %2087 = vmatpush1.msra.mxu0 0.0
        %2088 = vmatprep.subr.mxu0 0.0
        %2089 = vmatpush1.msra.mxu0 0.0
        %2090 = vmatprep.subr.mxu0 0.0
        %2091 = vmatpush1.msra.mxu0 0.0
        %2092 = vmatprep.subr.mxu0 0.0
        %2093 = vmatpush1.msra.mxu0 0.0
        %2094 = vmatprep.subr.mxu0 0.0
        %2095 = vmatpush1.msra.mxu0 0.0
        %2096 = vmatprep.subr.mxu0 0.0
        %2097 = vmatpush1.msra.mxu0 0.0
        %2098 = vmatprep.subr.mxu0 0.0
        %2099 = vmatpush1.msra.mxu0 0.0
        %2100 = vmatprep.subr.mxu0 0.0
        %2101 = vmatpush1.msra.mxu0 0.0
        %2102 = vmatprep.subr.mxu0 0.0
        %2103 = vmatpush1.msra.mxu0 0.0
        %2104 = vmatprep.subr.mxu0 0.0
        %2105 = vmatpush1.msra.mxu0 0.0
        %2106 = vmatprep.subr.mxu0 0.0
        %2107 = vmatpush1.msra.mxu0 0.0
        %2108 = vmatprep.subr.mxu0 0.0
        %2109 = vmatpush1.msra.mxu0 0.0
        %2110 = vmatprep.subr.mxu0 0.0
        %2111 = vmatpush1.msra.mxu0 0.0
        %2112 = vmatprep.subr.mxu0 0.0
        %2113 = vmatpush1.msra.mxu0 0.0
        %2114 = vmatprep.subr.mxu0 0.0
        %2115 = vmatpush1.msra.mxu0 0.0
        %2116 = vmatprep.subr.mxu0 0.0
        %2117 = vmatpush1.msra.mxu0 0.0
        %2118 = vmatprep.subr.mxu0 0.0
        %2119 = vmatpush1.msra.mxu0 0.0
        %2120 = vmatprep.subr.mxu0 0.0
        %2121 = vmatpush1.msra.mxu0 0.0
        %2122 = vmatprep.subr.mxu0 0.0
        %2123 = vmatpush1.msra.mxu0 0.0
        %2124 = vmatprep.subr.mxu0 0.0
        %2125 = vmatpush1.msra.mxu0 0.0
        %2126 = vmatprep.subr.mxu0 0.0
        %2127 = vmatpush1.msra.mxu0 0.0
        %2128 = vmatprep.subr.mxu0 0.0
        %2129 = vmatpush1.msra.mxu0 0.0
        %2130 = vmatprep.subr.mxu0 0.0
        %2131 = vmatpush1.msra.mxu0 0.0
        %2132 = vmatprep.subr.mxu0 0.0
        %2133 = vmatpush1.msra.mxu0 0.0
        %2134 = vmatprep.subr.mxu0 0.0
        %2135 = vmatpush1.msra.mxu0 0.0
        %2136 = vmatprep.subr.mxu0 0.0
        %2137 = vmatpush1.msra.mxu0 0.0
        %2138 = vmatprep.subr.mxu0 0.0
        %2139 = vmatpush1.msra.mxu0 0.0
        %2140 = vmatprep.subr.mxu0 0.0
        %2141 = vmatpush1.msra.mxu0 0.0
        %2142 = vmatprep.mubr.f32.mxu0 0.0
        %2143 = vmatmul.mubr.f32.gmra.mrb[0].mxu0 %v2070
        %v2144 = vpop.f32.mrb[0].mxu0
        %v2145 = vadd.f32 0.0, %v2144
        %v2146 = vpop.f32.mrb[0].mxu0
        %v2147 = vadd.f32 0.0, %v2146
        %2148 = vdwg.mxu0
        %2149 = vmatprep.subr.mxu0 0.0
        %2150 = vmatpush1.msra.mxu0 %v2076
        %2151 = vmatprep.subr.mxu0 0.0
        %2152 = vmatpush1.msra.mxu0 0.0
        %2153 = vmatprep.subr.mxu0 0.0
        %2154 = vmatpush1.msra.mxu0 0.0
        %2155 = vmatprep.subr.mxu0 0.0
        %2156 = vmatpush1.msra.mxu0 0.0
        %2157 = vmatprep.subr.mxu0 0.0
        %2158 = vmatpush1.msra.mxu0 0.0
        %2159 = vmatprep.subr.mxu0 0.0
        %2160 = vmatpush1.msra.mxu0 0.0
        %2161 = vmatprep.subr.mxu0 0.0
        %2162 = vmatpush1.msra.mxu0 0.0
        %2163 = vmatprep.subr.mxu0 0.0
        %2164 = vmatpush1.msra.mxu0 0.0
        %2165 = vmatprep.subr.mxu0 0.0
        %2166 = vmatpush1.msra.mxu0 0.0
        %2167 = vmatprep.subr.mxu0 0.0
        %2168 = vmatpush1.msra.mxu0 0.0
        %2169 = vmatprep.subr.mxu0 0.0
        %2170 = vmatpush1.msra.mxu0 0.0
        %2171 = vmatprep.subr.mxu0 0.0
        %2172 = vmatpush1.msra.mxu0 0.0
        %2173 = vmatprep.subr.mxu0 0.0
        %2174 = vmatpush1.msra.mxu0 0.0
        %2175 = vmatprep.subr.mxu0 0.0
        %2176 = vmatpush1.msra.mxu0 0.0
        %2177 = vmatprep.subr.mxu0 0.0
        %2178 = vmatpush1.msra.mxu0 0.0
        %2179 = vmatprep.subr.mxu0 0.0
        %2180 = vmatpush1.msra.mxu0 0.0
        %2181 = vmatprep.subr.mxu0 0.0
        %2182 = vmatpush1.msra.mxu0 0.0
        %2183 = vmatprep.subr.mxu0 0.0
        %2184 = vmatpush1.msra.mxu0 0.0
        %2185 = vmatprep.subr.mxu0 0.0
        %2186 = vmatpush1.msra.mxu0 0.0
        %2187 = vmatprep.subr.mxu0 0.0
        %2188 = vmatpush1.msra.mxu0 0.0
        %2189 = vmatprep.subr.mxu0 0.0
        %2190 = vmatpush1.msra.mxu0 0.0
        %2191 = vmatprep.subr.mxu0 0.0
        %2192 = vmatpush1.msra.mxu0 0.0
        %2193 = vmatprep.subr.mxu0 0.0
        %2194 = vmatpush1.msra.mxu0 0.0
        %2195 = vmatprep.subr.mxu0 0.0
        %2196 = vmatpush1.msra.mxu0 0.0
        %2197 = vmatprep.subr.mxu0 0.0
        %2198 = vmatpush1.msra.mxu0 0.0
        %2199 = vmatprep.subr.mxu0 0.0
        %2200 = vmatpush1.msra.mxu0 0.0
        %2201 = vmatprep.subr.mxu0 0.0
        %2202 = vmatpush1.msra.mxu0 0.0
        %2203 = vmatprep.subr.mxu0 0.0
        %2204 = vmatpush1.msra.mxu0 0.0
        %2205 = vmatprep.subr.mxu0 0.0
        %2206 = vmatpush1.msra.mxu0 0.0
        %2207 = vmatprep.subr.mxu0 0.0
        %2208 = vmatpush1.msra.mxu0 0.0
        %2209 = vmatprep.subr.mxu0 0.0
        %2210 = vmatpush1.msra.mxu0 0.0
        %2211 = vmatprep.subr.mxu0 0.0
        %2212 = vmatpush1.msra.mxu0 0.0
        %2213 = vmatprep.mubr.f32.mxu0 0.0
        %2214 = vmatmul.mubr.f32.gmra.mrb[0].mxu0 %v2070
        %v2215 = vpop.f32.mrb[0].mxu0
        %v2216 = vadd.f32 0.0, %v2215
        %v2217 = vpop.f32.mrb[0].mxu0
        %2218 = vdwg.mxu0
        %v2219 = vadd.f32 %v2050, %v2145
        %v2220 = vadd.f32 %v2051, %v2147
        %v2221 = vadd.f32 %v2052, %v2216
        %s2222 = scalar_lea.vmem %s1, 96
        %v2223 = vld [vmem:[%s2222] sm:$0xff]
        %v2224 = vld [vmem:[%s208] sm:$0xff]
        %v2225 = vld [vmem:[%s208 + $0x8] sm:$0xf]
        %v2228 = vcombine.high %v2224, %v2224
        %2229 = vrot.lane.b32.xlu0 %v2224, 74
        %v2230 = vpop.permute.xlu0 %2229
        %2231 = vrot.lane.b32.xlu0 %v2228, 74
        %v2232 = vpop.permute.xlu0 %2231
        %2233 = vrot.lane.b32.xlu0 %v2225, 74
        %v2234 = vpop.permute.xlu0 %2233
        %vm2235 = vcmask 605184
        %v2236 = vsel %vm2235, %v2230, %v2232
        %v2237 = vsel %vm2235, %v2232, %v2234
        %v2239 = vsel %vm230, %v2223, 0
        %v2241 = vsel %vm234, %v2236, 0
        %v2243 = vsel %vm234, %v2237, 0
        %v2245 = vsel %vm234, %v2234, 0
        %2247 = vmatprep.subr.mxu0 %v2243
        %2248 = vmatpush1.msra.mxu0 %v2241
        %2249 = vmatprep.subr.mxu0 0.0
        %2250 = vmatpush1.msra.mxu0 0.0
        %2251 = vmatprep.subr.mxu0 0.0
        %2252 = vmatpush1.msra.mxu0 0.0
        %2253 = vmatprep.subr.mxu0 0.0
        %2254 = vmatpush1.msra.mxu0 0.0
        %2255 = vmatprep.subr.mxu0 0.0
        %2256 = vmatpush1.msra.mxu0 0.0
        %2257 = vmatprep.subr.mxu0 0.0
        %2258 = vmatpush1.msra.mxu0 0.0
        %2259 = vmatprep.subr.mxu0 0.0
        %2260 = vmatpush1.msra.mxu0 0.0
        %2261 = vmatprep.subr.mxu0 0.0
        %2262 = vmatpush1.msra.mxu0 0.0
        %2263 = vmatprep.subr.mxu0 0.0
        %2264 = vmatpush1.msra.mxu0 0.0
        %2265 = vmatprep.subr.mxu0 0.0
        %2266 = vmatpush1.msra.mxu0 0.0
        %2267 = vmatprep.subr.mxu0 0.0
        %2268 = vmatpush1.msra.mxu0 0.0
        %2269 = vmatprep.subr.mxu0 0.0
        %2270 = vmatpush1.msra.mxu0 0.0
        %2271 = vmatprep.subr.mxu0 0.0
        %2272 = vmatpush1.msra.mxu0 0.0
        %2273 = vmatprep.subr.mxu0 0.0
        %2274 = vmatpush1.msra.mxu0 0.0
        %2275 = vmatprep.subr.mxu0 0.0
        %2276 = vmatpush1.msra.mxu0 0.0
        %2277 = vmatprep.subr.mxu0 0.0
        %2278 = vmatpush1.msra.mxu0 0.0
        %2279 = vmatprep.subr.mxu0 0.0
        %2280 = vmatpush1.msra.mxu0 0.0
        %2281 = vmatprep.subr.mxu0 0.0
        %2282 = vmatpush1.msra.mxu0 0.0
        %2283 = vmatprep.subr.mxu0 0.0
        %2284 = vmatpush1.msra.mxu0 0.0
        %2285 = vmatprep.subr.mxu0 0.0
        %2286 = vmatpush1.msra.mxu0 0.0
        %2287 = vmatprep.subr.mxu0 0.0
        %2288 = vmatpush1.msra.mxu0 0.0
        %2289 = vmatprep.subr.mxu0 0.0
        %2290 = vmatpush1.msra.mxu0 0.0
        %2291 = vmatprep.subr.mxu0 0.0
        %2292 = vmatpush1.msra.mxu0 0.0
        %2293 = vmatprep.subr.mxu0 0.0
        %2294 = vmatpush1.msra.mxu0 0.0
        %2295 = vmatprep.subr.mxu0 0.0
        %2296 = vmatpush1.msra.mxu0 0.0
        %2297 = vmatprep.subr.mxu0 0.0
        %2298 = vmatpush1.msra.mxu0 0.0
        %2299 = vmatprep.subr.mxu0 0.0
        %2300 = vmatpush1.msra.mxu0 0.0
        %2301 = vmatprep.subr.mxu0 0.0
        %2302 = vmatpush1.msra.mxu0 0.0
        %2303 = vmatprep.subr.mxu0 0.0
        %2304 = vmatpush1.msra.mxu0 0.0
        %2305 = vmatprep.subr.mxu0 0.0
        %2306 = vmatpush1.msra.mxu0 0.0
        %2307 = vmatprep.subr.mxu0 0.0
        %2308 = vmatpush1.msra.mxu0 0.0
        %2309 = vmatprep.subr.mxu0 0.0
        %2310 = vmatpush1.msra.mxu0 0.0
        %2311 = vmatprep.mubr.f32.mxu0 0.0
        %2312 = vmatmul.mubr.f32.gmra.mrb[0].mxu0 %v2239
        %v2313 = vpop.f32.mrb[0].mxu0
        %v2314 = vadd.f32 0.0, %v2313
        %v2315 = vpop.f32.mrb[0].mxu0
        %v2316 = vadd.f32 0.0, %v2315
        %2317 = vdwg.mxu0
        %2318 = vmatprep.subr.mxu0 0.0
        %2319 = vmatpush1.msra.mxu0 %v2245
        %2320 = vmatprep.subr.mxu0 0.0
        %2321 = vmatpush1.msra.mxu0 0.0
        %2322 = vmatprep.subr.mxu0 0.0
        %2323 = vmatpush1.msra.mxu0 0.0
        %2324 = vmatprep.subr.mxu0 0.0
        %2325 = vmatpush1.msra.mxu0 0.0
        %2326 = vmatprep.subr.mxu0 0.0
        %2327 = vmatpush1.msra.mxu0 0.0
        %2328 = vmatprep.subr.mxu0 0.0
        %2329 = vmatpush1.msra.mxu0 0.0
        %2330 = vmatprep.subr.mxu0 0.0
        %2331 = vmatpush1.msra.mxu0 0.0
        %2332 = vmatprep.subr.mxu0 0.0
        %2333 = vmatpush1.msra.mxu0 0.0
        %2334 = vmatprep.subr.mxu0 0.0
        %2335 = vmatpush1.msra.mxu0 0.0
        %2336 = vmatprep.subr.mxu0 0.0
        %2337 = vmatpush1.msra.mxu0 0.0
        %2338 = vmatprep.subr.mxu0 0.0
        %2339 = vmatpush1.msra.mxu0 0.0
        %2340 = vmatprep.subr.mxu0 0.0
        %2341 = vmatpush1.msra.mxu0 0.0
        %2342 = vmatprep.subr.mxu0 0.0
        %2343 = vmatpush1.msra.mxu0 0.0
        %2344 = vmatprep.subr.mxu0 0.0
        %2345 = vmatpush1.msra.mxu0 0.0
        %2346 = vmatprep.subr.mxu0 0.0
        %2347 = vmatpush1.msra.mxu0 0.0
        %2348 = vmatprep.subr.mxu0 0.0
        %2349 = vmatpush1.msra.mxu0 0.0
        %2350 = vmatprep.subr.mxu0 0.0
        %2351 = vmatpush1.msra.mxu0 0.0
        %2352 = vmatprep.subr.mxu0 0.0
        %2353 = vmatpush1.msra.mxu0 0.0
        %2354 = vmatprep.subr.mxu0 0.0
        %2355 = vmatpush1.msra.mxu0 0.0
        %2356 = vmatprep.subr.mxu0 0.0
        %2357 = vmatpush1.msra.mxu0 0.0
        %2358 = vmatprep.subr.mxu0 0.0
        %2359 = vmatpush1.msra.mxu0 0.0
        %2360 = vmatprep.subr.mxu0 0.0
        %2361 = vmatpush1.msra.mxu0 0.0
        %2362 = vmatprep.subr.mxu0 0.0
        %2363 = vmatpush1.msra.mxu0 0.0
        %2364 = vmatprep.subr.mxu0 0.0
        %2365 = vmatpush1.msra.mxu0 0.0
        %2366 = vmatprep.subr.mxu0 0.0
        %2367 = vmatpush1.msra.mxu0 0.0
        %2368 = vmatprep.subr.mxu0 0.0
        %2369 = vmatpush1.msra.mxu0 0.0
        %2370 = vmatprep.subr.mxu0 0.0
        %2371 = vmatpush1.msra.mxu0 0.0
        %2372 = vmatprep.subr.mxu0 0.0
        %2373 = vmatpush1.msra.mxu0 0.0
        %2374 = vmatprep.subr.mxu0 0.0
        %2375 = vmatpush1.msra.mxu0 0.0
        %2376 = vmatprep.subr.mxu0 0.0
        %2377 = vmatpush1.msra.mxu0 0.0
        %2378 = vmatprep.subr.mxu0 0.0
        %2379 = vmatpush1.msra.mxu0 0.0
        %2380 = vmatprep.subr.mxu0 0.0
        %2381 = vmatpush1.msra.mxu0 0.0
        %2382 = vmatprep.mubr.f32.mxu0 0.0
        %2383 = vmatmul.mubr.f32.gmra.mrb[0].mxu0 %v2239
        %v2384 = vpop.f32.mrb[0].mxu0
        %v2385 = vadd.f32 0.0, %v2384
        %v2386 = vpop.f32.mrb[0].mxu0
        %2387 = vdwg.mxu0
        %v2388 = vadd.f32 %v2219, %v2314
        %v2389 = vadd.f32 %v2220, %v2316
        %v2390 = vadd.f32 %v2221, %v2385
        %s2391 = scalar_lea.vmem %s1, 104
        %v2392 = vld [vmem:[%s2391] sm:$0xff]
        %v2393 = vld [vmem:[%s208] sm:$0xff]
        %v2394 = vld [vmem:[%s208 + $0x8] sm:$0xf]
        %v2397 = vcombine.high %v2393, %v2393
        %2398 = vrot.lane.b32.xlu0 %v2393, 73
        %v2399 = vpop.permute.xlu0 %2398
        %2400 = vrot.lane.b32.xlu0 %v2397, 73
        %v2401 = vpop.permute.xlu0 %2400
        %2402 = vrot.lane.b32.xlu0 %v2394, 73
        %v2403 = vpop.permute.xlu0 %2402
        %vm2404 = vcmask 596992
        %v2405 = vsel %vm2404, %v2399, %v2401
        %v2406 = vsel %vm2404, %v2401, %v2403
        %v2408 = vsel %vm230, %v2392, 0
        %v2410 = vsel %vm234, %v2405, 0
        %v2412 = vsel %vm234, %v2406, 0
        %v2414 = vsel %vm234, %v2403, 0
        %2416 = vmatprep.subr.mxu0 %v2412
        %2417 = vmatpush1.msra.mxu0 %v2410
        %2418 = vmatprep.subr.mxu0 0.0
        %2419 = vmatpush1.msra.mxu0 0.0
        %2420 = vmatprep.subr.mxu0 0.0
        %2421 = vmatpush1.msra.mxu0 0.0
        %2422 = vmatprep.subr.mxu0 0.0
        %2423 = vmatpush1.msra.mxu0 0.0
        %2424 = vmatprep.subr.mxu0 0.0
        %2425 = vmatpush1.msra.mxu0 0.0
        %2426 = vmatprep.subr.mxu0 0.0
        %2427 = vmatpush1.msra.mxu0 0.0
        %2428 = vmatprep.subr.mxu0 0.0
        %2429 = vmatpush1.msra.mxu0 0.0
        %2430 = vmatprep.subr.mxu0 0.0
        %2431 = vmatpush1.msra.mxu0 0.0
        %2432 = vmatprep.subr.mxu0 0.0
        %2433 = vmatpush1.msra.mxu0 0.0
        %2434 = vmatprep.subr.mxu0 0.0
        %2435 = vmatpush1.msra.mxu0 0.0
        %2436 = vmatprep.subr.mxu0 0.0
        %2437 = vmatpush1.msra.mxu0 0.0
        %2438 = vmatprep.subr.mxu0 0.0
        %2439 = vmatpush1.msra.mxu0 0.0
        %2440 = vmatprep.subr.mxu0 0.0
        %2441 = vmatpush1.msra.mxu0 0.0
        %2442 = vmatprep.subr.mxu0 0.0
        %2443 = vmatpush1.msra.mxu0 0.0
        %2444 = vmatprep.subr.mxu0 0.0
        %2445 = vmatpush1.msra.mxu0 0.0
        %2446 = vmatprep.subr.mxu0 0.0
        %2447 = vmatpush1.msra.mxu0 0.0
        %2448 = vmatprep.subr.mxu0 0.0
        %2449 = vmatpush1.msra.mxu0 0.0
        %2450 = vmatprep.subr.mxu0 0.0
        %2451 = vmatpush1.msra.mxu0 0.0
        %2452 = vmatprep.subr.mxu0 0.0
        %2453 = vmatpush1.msra.mxu0 0.0
        %2454 = vmatprep.subr.mxu0 0.0
        %2455 = vmatpush1.msra.mxu0 0.0
        %2456 = vmatprep.subr.mxu0 0.0
        %2457 = vmatpush1.msra.mxu0 0.0
        %2458 = vmatprep.subr.mxu0 0.0
        %2459 = vmatpush1.msra.mxu0 0.0
        %2460 = vmatprep.subr.mxu0 0.0
        %2461 = vmatpush1.msra.mxu0 0.0
        %2462 = vmatprep.subr.mxu0 0.0
        %2463 = vmatpush1.msra.mxu0 0.0
        %2464 = vmatprep.subr.mxu0 0.0
        %2465 = vmatpush1.msra.mxu0 0.0
        %2466 = vmatprep.subr.mxu0 0.0
        %2467 = vmatpush1.msra.mxu0 0.0
        %2468 = vmatprep.subr.mxu0 0.0
        %2469 = vmatpush1.msra.mxu0 0.0
        %2470 = vmatprep.subr.mxu0 0.0
        %2471 = vmatpush1.msra.mxu0 0.0
        %2472 = vmatprep.subr.mxu0 0.0
        %2473 = vmatpush1.msra.mxu0 0.0
        %2474 = vmatprep.subr.mxu0 0.0
        %2475 = vmatpush1.msra.mxu0 0.0
        %2476 = vmatprep.subr.mxu0 0.0
        %2477 = vmatpush1.msra.mxu0 0.0
        %2478 = vmatprep.subr.mxu0 0.0
        %2479 = vmatpush1.msra.mxu0 0.0
        %2480 = vmatprep.mubr.f32.mxu0 0.0
        %2481 = vmatmul.mubr.f32.gmra.mrb[0].mxu0 %v2408
        %v2482 = vpop.f32.mrb[0].mxu0
        %v2483 = vadd.f32 0.0, %v2482
        %v2484 = vpop.f32.mrb[0].mxu0
        %v2485 = vadd.f32 0.0, %v2484
        %2486 = vdwg.mxu0
        %2487 = vmatprep.subr.mxu0 0.0
        %2488 = vmatpush1.msra.mxu0 %v2414
        %2489 = vmatprep.subr.mxu0 0.0
        %2490 = vmatpush1.msra.mxu0 0.0
        %2491 = vmatprep.subr.mxu0 0.0
        %2492 = vmatpush1.msra.mxu0 0.0
        %2493 = vmatprep.subr.mxu0 0.0
        %2494 = vmatpush1.msra.mxu0 0.0
        %2495 = vmatprep.subr.mxu0 0.0
        %2496 = vmatpush1.msra.mxu0 0.0
        %2497 = vmatprep.subr.mxu0 0.0
        %2498 = vmatpush1.msra.mxu0 0.0
        %2499 = vmatprep.subr.mxu0 0.0
        %2500 = vmatpush1.msra.mxu0 0.0
        %2501 = vmatprep.subr.mxu0 0.0
        %2502 = vmatpush1.msra.mxu0 0.0
        %2503 = vmatprep.subr.mxu0 0.0
        %2504 = vmatpush1.msra.mxu0 0.0
        %2505 = vmatprep.subr.mxu0 0.0
        %2506 = vmatpush1.msra.mxu0 0.0
        %2507 = vmatprep.subr.mxu0 0.0
        %2508 = vmatpush1.msra.mxu0 0.0
        %2509 = vmatprep.subr.mxu0 0.0
        %2510 = vmatpush1.msra.mxu0 0.0
        %2511 = vmatprep.subr.mxu0 0.0
        %2512 = vmatpush1.msra.mxu0 0.0
        %2513 = vmatprep.subr.mxu0 0.0
        %2514 = vmatpush1.msra.mxu0 0.0
        %2515 = vmatprep.subr.mxu0 0.0
        %2516 = vmatpush1.msra.mxu0 0.0
        %2517 = vmatprep.subr.mxu0 0.0
        %2518 = vmatpush1.msra.mxu0 0.0
        %2519 = vmatprep.subr.mxu0 0.0
        %2520 = vmatpush1.msra.mxu0 0.0
        %2521 = vmatprep.subr.mxu0 0.0
        %2522 = vmatpush1.msra.mxu0 0.0
        %2523 = vmatprep.subr.mxu0 0.0
        %2524 = vmatpush1.msra.mxu0 0.0
        %2525 = vmatprep.subr.mxu0 0.0
        %2526 = vmatpush1.msra.mxu0 0.0
        %2527 = vmatprep.subr.mxu0 0.0
        %2528 = vmatpush1.msra.mxu0 0.0
        %2529 = vmatprep.subr.mxu0 0.0
        %2530 = vmatpush1.msra.mxu0 0.0
        %2531 = vmatprep.subr.mxu0 0.0
        %2532 = vmatpush1.msra.mxu0 0.0
        %2533 = vmatprep.subr.mxu0 0.0
        %2534 = vmatpush1.msra.mxu0 0.0
        %2535 = vmatprep.subr.mxu0 0.0
        %2536 = vmatpush1.msra.mxu0 0.0
        %2537 = vmatprep.subr.mxu0 0.0
        %2538 = vmatpush1.msra.mxu0 0.0
        %2539 = vmatprep.subr.mxu0 0.0
        %2540 = vmatpush1.msra.mxu0 0.0
        %2541 = vmatprep.subr.mxu0 0.0
        %2542 = vmatpush1.msra.mxu0 0.0
        %2543 = vmatprep.subr.mxu0 0.0
        %2544 = vmatpush1.msra.mxu0 0.0
        %2545 = vmatprep.subr.mxu0 0.0
        %2546 = vmatpush1.msra.mxu0 0.0
        %2547 = vmatprep.subr.mxu0 0.0
        %2548 = vmatpush1.msra.mxu0 0.0
        %2549 = vmatprep.subr.mxu0 0.0
        %2550 = vmatpush1.msra.mxu0 0.0
        %2551 = vmatprep.mubr.f32.mxu0 0.0
        %2552 = vmatmul.mubr.f32.gmra.mrb[0].mxu0 %v2408
        %v2553 = vpop.f32.mrb[0].mxu0
        %v2554 = vadd.f32 0.0, %v2553
        %v2555 = vpop.f32.mrb[0].mxu0
        %2556 = vdwg.mxu0
        %v2557 = vadd.f32 %v2388, %v2483
        %v2558 = vadd.f32 %v2389, %v2485
        %v2559 = vadd.f32 %v2390, %v2554
        %s2560 = scalar_lea.vmem %s1, 112
        %v2561 = vld [vmem:[%s2560] sm:$0xff]
        %v2562 = vld [vmem:[%s208] sm:$0xff]
        %v2563 = vld [vmem:[%s208 + $0x8] sm:$0xf]
        %v2566 = vcombine.high %v2562, %v2562
        %2567 = vrot.lane.b32.xlu0 %v2562, 72
        %v2568 = vpop.permute.xlu0 %2567
        %2569 = vrot.lane.b32.xlu0 %v2566, 72
        %v2570 = vpop.permute.xlu0 %2569
        %2571 = vrot.lane.b32.xlu0 %v2563, 72
        %v2572 = vpop.permute.xlu0 %2571
        %vm2573 = vcmask 588800
        %v2574 = vsel %vm2573, %v2568, %v2570
        %v2575 = vsel %vm2573, %v2570, %v2572
        %v2577 = vsel %vm230, %v2561, 0
        %v2579 = vsel %vm234, %v2574, 0
        %v2581 = vsel %vm234, %v2575, 0
        %v2583 = vsel %vm234, %v2572, 0
        %2585 = vmatprep.subr.mxu0 %v2581
        %2586 = vmatpush1.msra.mxu0 %v2579
        %2587 = vmatprep.subr.mxu0 0.0
        %2588 = vmatpush1.msra.mxu0 0.0
        %2589 = vmatprep.subr.mxu0 0.0
        %2590 = vmatpush1.msra.mxu0 0.0
        %2591 = vmatprep.subr.mxu0 0.0
        %2592 = vmatpush1.msra.mxu0 0.0
        %2593 = vmatprep.subr.mxu0 0.0
        %2594 = vmatpush1.msra.mxu0 0.0
        %2595 = vmatprep.subr.mxu0 0.0
        %2596 = vmatpush1.msra.mxu0 0.0
        %2597 = vmatprep.subr.mxu0 0.0
        %2598 = vmatpush1.msra.mxu0 0.0
        %2599 = vmatprep.subr.mxu0 0.0
        %2600 = vmatpush1.msra.mxu0 0.0
        %2601 = vmatprep.subr.mxu0 0.0
        %2602 = vmatpush1.msra.mxu0 0.0
        %2603 = vmatprep.subr.mxu0 0.0
        %2604 = vmatpush1.msra.mxu0 0.0
        %2605 = vmatprep.subr.mxu0 0.0
        %2606 = vmatpush1.msra.mxu0 0.0
        %2607 = vmatprep.subr.mxu0 0.0
        %2608 = vmatpush1.msra.mxu0 0.0
        %2609 = vmatprep.subr.mxu0 0.0
        %2610 = vmatpush1.msra.mxu0 0.0
        %2611 = vmatprep.subr.mxu0 0.0
        %2612 = vmatpush1.msra.mxu0 0.0
        %2613 = vmatprep.subr.mxu0 0.0
        %2614 = vmatpush1.msra.mxu0 0.0
        %2615 = vmatprep.subr.mxu0 0.0
        %2616 = vmatpush1.msra.mxu0 0.0
        %2617 = vmatprep.subr.mxu0 0.0
        %2618 = vmatpush1.msra.mxu0 0.0
        %2619 = vmatprep.subr.mxu0 0.0
        %2620 = vmatpush1.msra.mxu0 0.0
        %2621 = vmatprep.subr.mxu0 0.0
        %2622 = vmatpush1.msra.mxu0 0.0
        %2623 = vmatprep.subr.mxu0 0.0
        %2624 = vmatpush1.msra.mxu0 0.0
        %2625 = vmatprep.subr.mxu0 0.0
        %2626 = vmatpush1.msra.mxu0 0.0
        %2627 = vmatprep.subr.mxu0 0.0
        %2628 = vmatpush1.msra.mxu0 0.0
        %2629 = vmatprep.subr.mxu0 0.0
        %2630 = vmatpush1.msra.mxu0 0.0
        %2631 = vmatprep.subr.mxu0 0.0
        %2632 = vmatpush1.msra.mxu0 0.0
        %2633 = vmatprep.subr.mxu0 0.0
        %2634 = vmatpush1.msra.mxu0 0.0
        %2635 = vmatprep.subr.mxu0 0.0
        %2636 = vmatpush1.msra.mxu0 0.0
        %2637 = vmatprep.subr.mxu0 0.0
        %2638 = vmatpush1.msra.mxu0 0.0
        %2639 = vmatprep.subr.mxu0 0.0
        %2640 = vmatpush1.msra.mxu0 0.0
        %2641 = vmatprep.subr.mxu0 0.0
        %2642 = vmatpush1.msra.mxu0 0.0
        %2643 = vmatprep.subr.mxu0 0.0
        %2644 = vmatpush1.msra.mxu0 0.0
        %2645 = vmatprep.subr.mxu0 0.0
        %2646 = vmatpush1.msra.mxu0 0.0
        %2647 = vmatprep.subr.mxu0 0.0
        %2648 = vmatpush1.msra.mxu0 0.0
        %2649 = vmatprep.mubr.f32.mxu0 0.0
        %2650 = vmatmul.mubr.f32.gmra.mrb[0].mxu0 %v2577
        %v2651 = vpop.f32.mrb[0].mxu0
        %v2652 = vadd.f32 0.0, %v2651
        %v2653 = vpop.f32.mrb[0].mxu0
        %v2654 = vadd.f32 0.0, %v2653
        %2655 = vdwg.mxu0
        %2656 = vmatprep.subr.mxu0 0.0
        %2657 = vmatpush1.msra.mxu0 %v2583
        %2658 = vmatprep.subr.mxu0 0.0
        %2659 = vmatpush1.msra.mxu0 0.0
        %2660 = vmatprep.subr.mxu0 0.0
        %2661 = vmatpush1.msra.mxu0 0.0
        %2662 = vmatprep.subr.mxu0 0.0
        %2663 = vmatpush1.msra.mxu0 0.0
        %2664 = vmatprep.subr.mxu0 0.0
        %2665 = vmatpush1.msra.mxu0 0.0
        %2666 = vmatprep.subr.mxu0 0.0
        %2667 = vmatpush1.msra.mxu0 0.0
        %2668 = vmatprep.subr.mxu0 0.0
        %2669 = vmatpush1.msra.mxu0 0.0
        %2670 = vmatprep.subr.mxu0 0.0
        %2671 = vmatpush1.msra.mxu0 0.0
        %2672 = vmatprep.subr.mxu0 0.0
        %2673 = vmatpush1.msra.mxu0 0.0
        %2674 = vmatprep.subr.mxu0 0.0
        %2675 = vmatpush1.msra.mxu0 0.0
        %2676 = vmatprep.subr.mxu0 0.0
        %2677 = vmatpush1.msra.mxu0 0.0
        %2678 = vmatprep.subr.mxu0 0.0
        %2679 = vmatpush1.msra.mxu0 0.0
        %2680 = vmatprep.subr.mxu0 0.0
        %2681 = vmatpush1.msra.mxu0 0.0
        %2682 = vmatprep.subr.mxu0 0.0
        %2683 = vmatpush1.msra.mxu0 0.0
        %2684 = vmatprep.subr.mxu0 0.0
        %2685 = vmatpush1.msra.mxu0 0.0
        %2686 = vmatprep.subr.mxu0 0.0
        %2687 = vmatpush1.msra.mxu0 0.0
        %2688 = vmatprep.subr.mxu0 0.0
        %2689 = vmatpush1.msra.mxu0 0.0
        %2690 = vmatprep.subr.mxu0 0.0
        %2691 = vmatpush1.msra.mxu0 0.0
        %2692 = vmatprep.subr.mxu0 0.0
        %2693 = vmatpush1.msra.mxu0 0.0
        %2694 = vmatprep.subr.mxu0 0.0
        %2695 = vmatpush1.msra.mxu0 0.0
        %2696 = vmatprep.subr.mxu0 0.0
        %2697 = vmatpush1.msra.mxu0 0.0
        %2698 = vmatprep.subr.mxu0 0.0
        %2699 = vmatpush1.msra.mxu0 0.0
        %2700 = vmatprep.subr.mxu0 0.0
        %2701 = vmatpush1.msra.mxu0 0.0
        %2702 = vmatprep.subr.mxu0 0.0
        %2703 = vmatpush1.msra.mxu0 0.0
        %2704 = vmatprep.subr.mxu0 0.0
        %2705 = vmatpush1.msra.mxu0 0.0
        %2706 = vmatprep.subr.mxu0 0.0
        %2707 = vmatpush1.msra.mxu0 0.0
        %2708 = vmatprep.subr.mxu0 0.0
        %2709 = vmatpush1.msra.mxu0 0.0
        %2710 = vmatprep.subr.mxu0 0.0
        %2711 = vmatpush1.msra.mxu0 0.0
        %2712 = vmatprep.subr.mxu0 0.0
        %2713 = vmatpush1.msra.mxu0 0.0
        %2714 = vmatprep.subr.mxu0 0.0
        %2715 = vmatpush1.msra.mxu0 0.0
        %2716 = vmatprep.subr.mxu0 0.0
        %2717 = vmatpush1.msra.mxu0 0.0
        %2718 = vmatprep.subr.mxu0 0.0
        %2719 = vmatpush1.msra.mxu0 0.0
        %2720 = vmatprep.mubr.f32.mxu0 0.0
        %2721 = vmatmul.mubr.f32.gmra.mrb[0].mxu0 %v2577
        %v2722 = vpop.f32.mrb[0].mxu0
        %v2723 = vadd.f32 0.0, %v2722
        %v2724 = vpop.f32.mrb[0].mxu0
        %2725 = vdwg.mxu0
        %v2726 = vadd.f32 %v2557, %v2652
        %v2727 = vadd.f32 %v2558, %v2654
        %v2728 = vadd.f32 %v2559, %v2723
        %s2729 = scalar_lea.vmem %s1, 120
        %v2730 = vld [vmem:[%s2729] sm:$0xff]
        %v2731 = vld [vmem:[%s208] sm:$0xff]
        %v2732 = vld [vmem:[%s208 + $0x8] sm:$0xf]
        %v2735 = vcombine.high %v2731, %v2731
        %2736 = vrot.lane.b32.xlu0 %v2731, 71
        %v2737 = vpop.permute.xlu0 %2736
        %2738 = vrot.lane.b32.xlu0 %v2735, 71
        %v2739 = vpop.permute.xlu0 %2738
        %2740 = vrot.lane.b32.xlu0 %v2732, 71
        %v2741 = vpop.permute.xlu0 %2740
        %vm2742 = vcmask 580608
        %v2743 = vsel %vm2742, %v2737, %v2739
        %v2744 = vsel %vm2742, %v2739, %v2741
        %v2746 = vsel %vm230, %v2730, 0
        %v2748 = vsel %vm234, %v2743, 0
        %v2750 = vsel %vm234, %v2744, 0
        %v2752 = vsel %vm234, %v2741, 0
        %2754 = vmatprep.subr.mxu0 %v2750
        %2755 = vmatpush1.msra.mxu0 %v2748
        %2756 = vmatprep.subr.mxu0 0.0
        %2757 = vmatpush1.msra.mxu0 0.0
        %2758 = vmatprep.subr.mxu0 0.0
        %2759 = vmatpush1.msra.mxu0 0.0
        %2760 = vmatprep.subr.mxu0 0.0
        %2761 = vmatpush1.msra.mxu0 0.0
        %2762 = vmatprep.subr.mxu0 0.0
        %2763 = vmatpush1.msra.mxu0 0.0
        %2764 = vmatprep.subr.mxu0 0.0
        %2765 = vmatpush1.msra.mxu0 0.0
        %2766 = vmatprep.subr.mxu0 0.0
        %2767 = vmatpush1.msra.mxu0 0.0
        %2768 = vmatprep.subr.mxu0 0.0
        %2769 = vmatpush1.msra.mxu0 0.0
        %2770 = vmatprep.subr.mxu0 0.0
        %2771 = vmatpush1.msra.mxu0 0.0
        %2772 = vmatprep.subr.mxu0 0.0
        %2773 = vmatpush1.msra.mxu0 0.0
        %2774 = vmatprep.subr.mxu0 0.0
        %2775 = vmatpush1.msra.mxu0 0.0
        %2776 = vmatprep.subr.mxu0 0.0
        %2777 = vmatpush1.msra.mxu0 0.0
        %2778 = vmatprep.subr.mxu0 0.0
        %2779 = vmatpush1.msra.mxu0 0.0
        %2780 = vmatprep.subr.mxu0 0.0
        %2781 = vmatpush1.msra.mxu0 0.0
        %2782 = vmatprep.subr.mxu0 0.0
        %2783 = vmatpush1.msra.mxu0 0.0
        %2784 = vmatprep.subr.mxu0 0.0
        %2785 = vmatpush1.msra.mxu0 0.0
        %2786 = vmatprep.subr.mxu0 0.0
        %2787 = vmatpush1.msra.mxu0 0.0
        %2788 = vmatprep.subr.mxu0 0.0
        %2789 = vmatpush1.msra.mxu0 0.0
        %2790 = vmatprep.subr.mxu0 0.0
        %2791 = vmatpush1.msra.mxu0 0.0
        %2792 = vmatprep.subr.mxu0 0.0
        %2793 = vmatpush1.msra.mxu0 0.0
        %2794 = vmatprep.subr.mxu0 0.0
        %2795 = vmatpush1.msra.mxu0 0.0
        %2796 = vmatprep.subr.mxu0 0.0
        %2797 = vmatpush1.msra.mxu0 0.0
        %2798 = vmatprep.subr.mxu0 0.0
        %2799 = vmatpush1.msra.mxu0 0.0
        %2800 = vmatprep.subr.mxu0 0.0
        %2801 = vmatpush1.msra.mxu0 0.0
        %2802 = vmatprep.subr.mxu0 0.0
        %2803 = vmatpush1.msra.mxu0 0.0
        %2804 = vmatprep.subr.mxu0 0.0
        %2805 = vmatpush1.msra.mxu0 0.0
        %2806 = vmatprep.subr.mxu0 0.0
        %2807 = vmatpush1.msra.mxu0 0.0
        %2808 = vmatprep.subr.mxu0 0.0
        %2809 = vmatpush1.msra.mxu0 0.0
        %2810 = vmatprep.subr.mxu0 0.0
        %2811 = vmatpush1.msra.mxu0 0.0
        %2812 = vmatprep.subr.mxu0 0.0
        %2813 = vmatpush1.msra.mxu0 0.0
        %2814 = vmatprep.subr.mxu0 0.0
        %2815 = vmatpush1.msra.mxu0 0.0
        %2816 = vmatprep.subr.mxu0 0.0
        %2817 = vmatpush1.msra.mxu0 0.0
        %2818 = vmatprep.mubr.f32.mxu0 0.0
        %2819 = vmatmul.mubr.f32.gmra.mrb[0].mxu0 %v2746
        %v2820 = vpop.f32.mrb[0].mxu0
        %v2821 = vadd.f32 0.0, %v2820
        %v2822 = vpop.f32.mrb[0].mxu0
        %v2823 = vadd.f32 0.0, %v2822
        %2824 = vdwg.mxu0
        %2825 = vmatprep.subr.mxu0 0.0
        %2826 = vmatpush1.msra.mxu0 %v2752
        %2827 = vmatprep.subr.mxu0 0.0
        %2828 = vmatpush1.msra.mxu0 0.0
        %2829 = vmatprep.subr.mxu0 0.0
        %2830 = vmatpush1.msra.mxu0 0.0
        %2831 = vmatprep.subr.mxu0 0.0
        %2832 = vmatpush1.msra.mxu0 0.0
        %2833 = vmatprep.subr.mxu0 0.0
        %2834 = vmatpush1.msra.mxu0 0.0
        %2835 = vmatprep.subr.mxu0 0.0
        %2836 = vmatpush1.msra.mxu0 0.0
        %2837 = vmatprep.subr.mxu0 0.0
        %2838 = vmatpush1.msra.mxu0 0.0
        %2839 = vmatprep.subr.mxu0 0.0
        %2840 = vmatpush1.msra.mxu0 0.0
        %2841 = vmatprep.subr.mxu0 0.0
        %2842 = vmatpush1.msra.mxu0 0.0
        %2843 = vmatprep.subr.mxu0 0.0
        %2844 = vmatpush1.msra.mxu0 0.0
        %2845 = vmatprep.subr.mxu0 0.0
        %2846 = vmatpush1.msra.mxu0 0.0
        %2847 = vmatprep.subr.mxu0 0.0
        %2848 = vmatpush1.msra.mxu0 0.0
        %2849 = vmatprep.subr.mxu0 0.0
        %2850 = vmatpush1.msra.mxu0 0.0
        %2851 = vmatprep.subr.mxu0 0.0
        %2852 = vmatpush1.msra.mxu0 0.0
        %2853 = vmatprep.subr.mxu0 0.0
        %2854 = vmatpush1.msra.mxu0 0.0
        %2855 = vmatprep.subr.mxu0 0.0
        %2856 = vmatpush1.msra.mxu0 0.0
        %2857 = vmatprep.subr.mxu0 0.0
        %2858 = vmatpush1.msra.mxu0 0.0
        %2859 = vmatprep.subr.mxu0 0.0
        %2860 = vmatpush1.msra.mxu0 0.0
        %2861 = vmatprep.subr.mxu0 0.0
        %2862 = vmatpush1.msra.mxu0 0.0
        %2863 = vmatprep.subr.mxu0 0.0
        %2864 = vmatpush1.msra.mxu0 0.0
        %2865 = vmatprep.subr.mxu0 0.0
        %2866 = vmatpush1.msra.mxu0 0.0
        %2867 = vmatprep.subr.mxu0 0.0
        %2868 = vmatpush1.msra.mxu0 0.0
        %2869 = vmatprep.subr.mxu0 0.0
        %2870 = vmatpush1.msra.mxu0 0.0
        %2871 = vmatprep.subr.mxu0 0.0
        %2872 = vmatpush1.msra.mxu0 0.0
        %2873 = vmatprep.subr.mxu0 0.0
        %2874 = vmatpush1.msra.mxu0 0.0
        %2875 = vmatprep.subr.mxu0 0.0
        %2876 = vmatpush1.msra.mxu0 0.0
        %2877 = vmatprep.subr.mxu0 0.0
        %2878 = vmatpush1.msra.mxu0 0.0
        %2879 = vmatprep.subr.mxu0 0.0
        %2880 = vmatpush1.msra.mxu0 0.0
        %2881 = vmatprep.subr.mxu0 0.0
        %2882 = vmatpush1.msra.mxu0 0.0
        %2883 = vmatprep.subr.mxu0 0.0
        %2884 = vmatpush1.msra.mxu0 0.0
        %2885 = vmatprep.subr.mxu0 0.0
        %2886 = vmatpush1.msra.mxu0 0.0
        %2887 = vmatprep.subr.mxu0 0.0
        %2888 = vmatpush1.msra.mxu0 0.0
        %2889 = vmatprep.mubr.f32.mxu0 0.0
        %2890 = vmatmul.mubr.f32.gmra.mrb[0].mxu0 %v2746
        %v2891 = vpop.f32.mrb[0].mxu0
        %v2892 = vadd.f32 0.0, %v2891
        %v2893 = vpop.f32.mrb[0].mxu0
        %2894 = vdwg.mxu0
        %v2895 = vadd.f32 %v2726, %v2821
        %v2896 = vadd.f32 %v2727, %v2823
        %v2897 = vadd.f32 %v2728, %v2892
        %v2898 = vld [vmem:[%s212] sm:$0xff]
        %2900 = vset.pattern.permute.xlu0 0
        %2901 = vperm.xlu0 %2900, %v2898
        %v2902 = vpop.permute.xlu0 %2901
        %v2904 = vadd.f32 %v2895, %v2902
        %v2905 = vadd.f32 %v2896, %v2902
        %v2906 = vadd.f32 %v2897, %v2902
        %vm2907 = vcmp.ge.f32.partialorder %v2904, 0.0
        %vm2908 = vcmp.ge.f32.partialorder %v2905, 0.0
        %vm2909 = vcmp.ge.f32.partialorder %v2906, 0.0
        %v2910 = vmul.f32 %v2904, 0.2
        %v2911 = vmul.f32 %v2905, 0.2
        %v2912 = vmul.f32 %v2906, 0.2
        %v2913 = vsel %vm2907, %v2904, %v2910
        %v2914 = vsel %vm2908, %v2905, %v2911
        %v2915 = vsel %vm2909, %v2906, %v2912
        %2917 = vrot.lane.b32.xlu0 %v2913, 110
        %v2918 = vpop.permute.xlu0 %2917
        %2922 = vrot.lane.b32.xlu0 %v2913, 18
        %v2923 = vpop.permute.xlu0 %2922
        %2924 = vrot.lane.b32.xlu0 %v2914, 18
        %v2925 = vpop.permute.xlu0 %2924
        %2926 = vrot.lane.b32.xlu0 %v2915, 18
        %v2927 = vpop.permute.xlu0 %2926
        %vm2928 = vcmask 146432
        %v2929 = vsel %vm2928, %v2923, %v2925
        %v2930 = vsel %vm2928, %v2925, %v2927
        %2934 = vrot.lane.b32.xlu0 %v2914, 54
        %v2935 = vpop.permute.xlu0 %2934
        %v2937 = vsel %vm2928, %v2918, %v2923
        %vm2938 = vcmask 261120
        %v2939 = vsel %vm2938, %v2930, %v2935
        %v2940 = vmul.f32 %v2937, 0.25
        %v2941 = vmul.f32 %v2929, 0.25
        %v2942 = vmul.f32 %v2939, 0.25
        %v2943 = vmul.f32 %v2937, 0.5
        %v2944 = vmul.f32 %v2929, 0.5
        %v2945 = vmul.f32 %v2939, 0.5
        %2949 = vrot.lane.b32.xlu0 %v2943, 110
        %v2950 = vpop.permute.xlu0 %2949
        %2951 = vrot.lane.b32.xlu0 %v2944, 110
        %v2952 = vpop.permute.xlu0 %2951
        %2953 = vrot.lane.b32.xlu0 %v2945, 110
        %v2954 = vpop.permute.xlu0 %2953
        %v2955 = vsel %vm883, %v2950, %v2952
        %v2956 = vsel %vm883, %v2952, %v2954
        %v2960 = vadd.f32 %v2940, %v2955
        %v2961 = vadd.f32 %v2941, %v2956
        %v2962 = vadd.f32 %v2942, %v2954
        %2966 = vrot.lane.b32.xlu0 %v2940, 92
        %v2967 = vpop.permute.xlu0 %2966
        %2968 = vrot.lane.b32.xlu0 %v2941, 92
        %v2969 = vpop.permute.xlu0 %2968
        %2970 = vrot.lane.b32.xlu0 %v2942, 92
        %v2971 = vpop.permute.xlu0 %2970
        %v2972 = vsel %vm1559, %v2967, %v2969
        %v2973 = vsel %vm1559, %v2969, %v2971
        %v2977 = vadd.f32 %v2960, %v2972
        %v2978 = vadd.f32 %v2961, %v2973
        %v2979 = vadd.f32 %v2962, %v2971
        %v2980 = vld [vmem:[%s3] sm:$0xff]
        %v2981 = vld [vmem:[%s3 + $0x8] sm:$0x7f]
        %vm2982 = vcmask 121856
        %v2984 = vsel %vm2982, %v2977, 0
        %vm2986 = vcmask 1046528
        %v2988 = vsel %vm2986, %v2981, 0
        %2990 = vmatprep.subr.mxu0 0.0
        %2991 = vmatpush1.msra.mxu0 %v2980
        %2992 = vmatprep.subr.mxu0 0.0
        %2993 = vmatpush1.msra.mxu0 %v2988
        %2994 = vmatprep.subr.mxu0 0.0
        %2995 = vmatpush1.msra.mxu0 0.0
        %2996 = vmatprep.subr.mxu0 0.0
        %2997 = vmatpush1.msra.mxu0 0.0
        %2998 = vmatprep.subr.mxu0 0.0
        %2999 = vmatpush1.msra.mxu0 0.0
        %3000 = vmatprep.subr.mxu0 0.0
        %3001 = vmatpush1.msra.mxu0 0.0
        %3002 = vmatprep.subr.mxu0 0.0
        %3003 = vmatpush1.msra.mxu0 0.0
        %3004 = vmatprep.subr.mxu0 0.0
        %3005 = vmatpush1.msra.mxu0 0.0
        %3006 = vmatprep.subr.mxu0 0.0
        %3007 = vmatpush1.msra.mxu0 0.0
        %3008 = vmatprep.subr.mxu0 0.0
        %3009 = vmatpush1.msra.mxu0 0.0
        %3010 = vmatprep.subr.mxu0 0.0
        %3011 = vmatpush1.msra.mxu0 0.0
        %3012 = vmatprep.subr.mxu0 0.0
        %3013 = vmatpush1.msra.mxu0 0.0
        %3014 = vmatprep.subr.mxu0 0.0
        %3015 = vmatpush1.msra.mxu0 0.0
        %3016 = vmatprep.subr.mxu0 0.0
        %3017 = vmatpush1.msra.mxu0 0.0
        %3018 = vmatprep.subr.mxu0 0.0
        %3019 = vmatpush1.msra.mxu0 0.0
        %3020 = vmatprep.subr.mxu0 0.0
        %3021 = vmatpush1.msra.mxu0 0.0
        %3022 = vmatprep.subr.mxu0 0.0
        %3023 = vmatpush1.msra.mxu0 0.0
        %3024 = vmatprep.subr.mxu0 0.0
        %3025 = vmatpush1.msra.mxu0 0.0
        %3026 = vmatprep.subr.mxu0 0.0
        %3027 = vmatpush1.msra.mxu0 0.0
        %3028 = vmatprep.subr.mxu0 0.0
        %3029 = vmatpush1.msra.mxu0 0.0
        %3030 = vmatprep.subr.mxu0 0.0
        %3031 = vmatpush1.msra.mxu0 0.0
        %3032 = vmatprep.subr.mxu0 0.0
        %3033 = vmatpush1.msra.mxu0 0.0
        %3034 = vmatprep.subr.mxu0 0.0
        %3035 = vmatpush1.msra.mxu0 0.0
        %3036 = vmatprep.subr.mxu0 0.0
        %3037 = vmatpush1.msra.mxu0 0.0
        %3038 = vmatprep.subr.mxu0 0.0
        %3039 = vmatpush1.msra.mxu0 0.0
        %3040 = vmatprep.subr.mxu0 0.0
        %3041 = vmatpush1.msra.mxu0 0.0
        %3042 = vmatprep.subr.mxu0 0.0
        %3043 = vmatpush1.msra.mxu0 0.0
        %3044 = vmatprep.subr.mxu0 0.0
        %3045 = vmatpush1.msra.mxu0 0.0
        %3046 = vmatprep.subr.mxu0 0.0
        %3047 = vmatpush1.msra.mxu0 0.0
        %3048 = vmatprep.subr.mxu0 0.0
        %3049 = vmatpush1.msra.mxu0 0.0
        %3050 = vmatprep.subr.mxu0 0.0
        %3051 = vmatpush1.msra.mxu0 0.0
        %3052 = vmatprep.subr.mxu0 0.0
        %3053 = vmatpush1.msra.mxu0 0.0
        %3054 = vmatprep.mubr.f32.mxu0 0.0
        %3055 = vmatmul.mubr.f32.gmra.mrb[0].mxu0 %v2984
        %v3056 = vpop.f32.mrb[0].mxu0
        %v3057 = vadd.f32 0.0, %v3056
        %v3058 = vpop.f32.mrb[0].mxu0
        %3059 = vdwg.mxu0
        %vm3060 = vcmask 64512
        %3061 = vst.msk [vmem:[%s203] sm:$0xff] %vm3060, %v3057
        %3062 = vrot.lane.b32.xlu0 %v2977, 92
        %v3063 = vpop.permute.xlu0 %3062
        %v3064 = vsel %vm2982, %v3063, 0
        %3066 = vmatprep.subr.mxu0 0.0
        %3067 = vmatpush1.msra.mxu0 %v2980
        %3068 = vmatprep.subr.mxu0 0.0
        %3069 = vmatpush1.msra.mxu0 %v2988
        %3070 = vmatprep.subr.mxu0 0.0
        %3071 = vmatpush1.msra.mxu0 0.0
        %3072 = vmatprep.subr.mxu0 0.0
        %3073 = vmatpush1.msra.mxu0 0.0
        %3074 = vmatprep.subr.mxu0 0.0
        %3075 = vmatpush1.msra.mxu0 0.0
        %3076 = vmatprep.subr.mxu0 0.0
        %3077 = vmatpush1.msra.mxu0 0.0
        %3078 = vmatprep.subr.mxu0 0.0
        %3079 = vmatpush1.msra.mxu0 0.0
        %3080 = vmatprep.subr.mxu0 0.0
        %3081 = vmatpush1.msra.mxu0 0.0
        %3082 = vmatprep.subr.mxu0 0.0
        %3083 = vmatpush1.msra.mxu0 0.0
        %3084 = vmatprep.subr.mxu0 0.0
        %3085 = vmatpush1.msra.mxu0 0.0
        %3086 = vmatprep.subr.mxu0 0.0
        %3087 = vmatpush1.msra.mxu0 0.0
        %3088 = vmatprep.subr.mxu0 0.0
        %3089 = vmatpush1.msra.mxu0 0.0
        %3090 = vmatprep.subr.mxu0 0.0
        %3091 = vmatpush1.msra.mxu0 0.0
        %3092 = vmatprep.subr.mxu0 0.0
        %3093 = vmatpush1.msra.mxu0 0.0
        %3094 = vmatprep.subr.mxu0 0.0
        %3095 = vmatpush1.msra.mxu0 0.0
        %3096 = vmatprep.subr.mxu0 0.0
        %3097 = vmatpush1.msra.mxu0 0.0
        %3098 = vmatprep.subr.mxu0 0.0
        %3099 = vmatpush1.msra.mxu0 0.0
        %3100 = vmatprep.subr.mxu0 0.0
        %3101 = vmatpush1.msra.mxu0 0.0
        %3102 = vmatprep.subr.mxu0 0.0
        %3103 = vmatpush1.msra.mxu0 0.0
        %3104 = vmatprep.subr.mxu0 0.0
        %3105 = vmatpush1.msra.mxu0 0.0
        %3106 = vmatprep.subr.mxu0 0.0
        %3107 = vmatpush1.msra.mxu0 0.0
        %3108 = vmatprep.subr.mxu0 0.0
        %3109 = vmatpush1.msra.mxu0 0.0
        %3110 = vmatprep.subr.mxu0 0.0
        %3111 = vmatpush1.msra.mxu0 0.0
        %3112 = vmatprep.subr.mxu0 0.0
        %3113 = vmatpush1.msra.mxu0 0.0
        %3114 = vmatprep.subr.mxu0 0.0
        %3115 = vmatpush1.msra.mxu0 0.0
        %3116 = vmatprep.subr.mxu0 0.0
        %3117 = vmatpush1.msra.mxu0 0.0
        %3118 = vmatprep.subr.mxu0 0.0
        %3119 = vmatpush1.msra.mxu0 0.0
        %3120 = vmatprep.subr.mxu0 0.0
        %3121 = vmatpush1.msra.mxu0 0.0
        %3122 = vmatprep.subr.mxu0 0.0
        %3123 = vmatpush1.msra.mxu0 0.0
        %3124 = vmatprep.subr.mxu0 0.0
        %3125 = vmatpush1.msra.mxu0 0.0
        %3126 = vmatprep.subr.mxu0 0.0
        %3127 = vmatpush1.msra.mxu0 0.0
        %3128 = vmatprep.subr.mxu0 0.0
        %3129 = vmatpush1.msra.mxu0 0.0
        %3130 = vmatprep.mubr.f32.mxu0 0.0
        %3131 = vmatmul.mubr.f32.gmra.mrb[0].mxu0 %v3064
        %v3132 = vpop.f32.mrb[0].mxu0
        %v3133 = vadd.f32 0.0, %v3132
        %v3134 = vpop.f32.mrb[0].mxu0
        %3135 = vdwg.mxu0
        %3137 = vrot.lane.b32.xlu0 %v3133, 8
        %v3138 = vpop.permute.xlu0 %3137
        %vm3140 = vcmask 130112
        %3141 = vst.msk [vmem:[%s203] sm:$0xff] %vm3140, %v3138
        %3142 = vrot.lane.b32.xlu0 %v2977, 56
        %v3143 = vpop.permute.xlu0 %3142
        %v3144 = vsel %vm2982, %v3143, 0
        %3146 = vmatprep.subr.mxu0 0.0
        %3147 = vmatpush1.msra.mxu0 %v2980
        %3148 = vmatprep.subr.mxu0 0.0
        %3149 = vmatpush1.msra.mxu0 %v2988
        %3150 = vmatprep.subr.mxu0 0.0
        %3151 = vmatpush1.msra.mxu0 0.0
        %3152 = vmatprep.subr.mxu0 0.0
        %3153 = vmatpush1.msra.mxu0 0.0
        %3154 = vmatprep.subr.mxu0 0.0
        %3155 = vmatpush1.msra.mxu0 0.0
        %3156 = vmatprep.subr.mxu0 0.0
        %3157 = vmatpush1.msra.mxu0 0.0
        %3158 = vmatprep.subr.mxu0 0.0
        %3159 = vmatpush1.msra.mxu0 0.0
        %3160 = vmatprep.subr.mxu0 0.0
        %3161 = vmatpush1.msra.mxu0 0.0
        %3162 = vmatprep.subr.mxu0 0.0
        %3163 = vmatpush1.msra.mxu0 0.0
        %3164 = vmatprep.subr.mxu0 0.0
        %3165 = vmatpush1.msra.mxu0 0.0
        %3166 = vmatprep.subr.mxu0 0.0
        %3167 = vmatpush1.msra.mxu0 0.0
        %3168 = vmatprep.subr.mxu0 0.0
        %3169 = vmatpush1.msra.mxu0 0.0
        %3170 = vmatprep.subr.mxu0 0.0
        %3171 = vmatpush1.msra.mxu0 0.0
        %3172 = vmatprep.subr.mxu0 0.0
        %3173 = vmatpush1.msra.mxu0 0.0
        %3174 = vmatprep.subr.mxu0 0.0
        %3175 = vmatpush1.msra.mxu0 0.0
        %3176 = vmatprep.subr.mxu0 0.0
        %3177 = vmatpush1.msra.mxu0 0.0
        %3178 = vmatprep.subr.mxu0 0.0
        %3179 = vmatpush1.msra.mxu0 0.0
        %3180 = vmatprep.subr.mxu0 0.0
        %3181 = vmatpush1.msra.mxu0 0.0
        %3182 = vmatprep.subr.mxu0 0.0
        %3183 = vmatpush1.msra.mxu0 0.0
        %3184 = vmatprep.subr.mxu0 0.0
        %3185 = vmatpush1.msra.mxu0 0.0
        %3186 = vmatprep.subr.mxu0 0.0
        %3187 = vmatpush1.msra.mxu0 0.0
        %3188 = vmatprep.subr.mxu0 0.0
        %3189 = vmatpush1.msra.mxu0 0.0
        %3190 = vmatprep.subr.mxu0 0.0
        %3191 = vmatpush1.msra.mxu0 0.0
        %3192 = vmatprep.subr.mxu0 0.0
        %3193 = vmatpush1.msra.mxu0 0.0
        %3194 = vmatprep.subr.mxu0 0.0
        %3195 = vmatpush1.msra.mxu0 0.0
        %3196 = vmatprep.subr.mxu0 0.0
        %3197 = vmatpush1.msra.mxu0 0.0
        %3198 = vmatprep.subr.mxu0 0.0
        %3199 = vmatpush1.msra.mxu0 0.0
        %3200 = vmatprep.subr.mxu0 0.0
        %3201 = vmatpush1.msra.mxu0 0.0
        %3202 = vmatprep.subr.mxu0 0.0
        %3203 = vmatpush1.msra.mxu0 0.0
        %3204 = vmatprep.subr.mxu0 0.0
        %3205 = vmatpush1.msra.mxu0 0.0
        %3206 = vmatprep.subr.mxu0 0.0
        %3207 = vmatpush1.msra.mxu0 0.0
        %3208 = vmatprep.subr.mxu0 0.0
        %3209 = vmatpush1.msra.mxu0 0.0
        %3210 = vmatprep.mubr.f32.mxu0 0.0
        %3211 = vmatmul.mubr.f32.gmra.mrb[0].mxu0 %v3144
        %v3212 = vpop.f32.mrb[0].mxu0
        %v3213 = vadd.f32 0.0, %v3212
        %v3214 = vpop.f32.mrb[0].mxu0
        %3215 = vdwg.mxu0
        %3217 = vrot.lane.b32.xlu0 %v3213, 16
        %v3218 = vpop.permute.xlu0 %3217
        %vm3220 = vcmask 195712
        %3221 = vst.msk [vmem:[%s203] sm:$0xff] %vm3220, %v3218
        %3222 = vrot.lane.b32.xlu0 %v2977, 20
        %v3223 = vpop.permute.xlu0 %3222
        %v3224 = vsel %vm2982, %v3223, 0
        %3226 = vmatprep.subr.mxu0 0.0
        %3227 = vmatpush1.msra.mxu0 %v2980
        %3228 = vmatprep.subr.mxu0 0.0
        %3229 = vmatpush1.msra.mxu0 %v2988
        %3230 = vmatprep.subr.mxu0 0.0
        %3231 = vmatpush1.msra.mxu0 0.0
        %3232 = vmatprep.subr.mxu0 0.0
        %3233 = vmatpush1.msra.mxu0 0.0
        %3234 = vmatprep.subr.mxu0 0.0
        %3235 = vmatpush1.msra.mxu0 0.0
        %3236 = vmatprep.subr.mxu0 0.0
        %3237 = vmatpush1.msra.mxu0 0.0
        %3238 = vmatprep.subr.mxu0 0.0
        %3239 = vmatpush1.msra.mxu0 0.0
        %3240 = vmatprep.subr.mxu0 0.0
        %3241 = vmatpush1.msra.mxu0 0.0
        %3242 = vmatprep.subr.mxu0 0.0
        %3243 = vmatpush1.msra.mxu0 0.0
        %3244 = vmatprep.subr.mxu0 0.0
        %3245 = vmatpush1.msra.mxu0 0.0
        %3246 = vmatprep.subr.mxu0 0.0
        %3247 = vmatpush1.msra.mxu0 0.0
        %3248 = vmatprep.subr.mxu0 0.0
        %3249 = vmatpush1.msra.mxu0 0.0
        %3250 = vmatprep.subr.mxu0 0.0
        %3251 = vmatpush1.msra.mxu0 0.0
        %3252 = vmatprep.subr.mxu0 0.0
        %3253 = vmatpush1.msra.mxu0 0.0
        %3254 = vmatprep.subr.mxu0 0.0
        %3255 = vmatpush1.msra.mxu0 0.0
        %3256 = vmatprep.subr.mxu0 0.0
        %3257 = vmatpush1.msra.mxu0 0.0
        %3258 = vmatprep.subr.mxu0 0.0
        %3259 = vmatpush1.msra.mxu0 0.0
        %3260 = vmatprep.subr.mxu0 0.0
        %3261 = vmatpush1.msra.mxu0 0.0
        %3262 = vmatprep.subr.mxu0 0.0
        %3263 = vmatpush1.msra.mxu0 0.0
        %3264 = vmatprep.subr.mxu0 0.0
        %3265 = vmatpush1.msra.mxu0 0.0
        %3266 = vmatprep.subr.mxu0 0.0
        %3267 = vmatpush1.msra.mxu0 0.0
        %3268 = vmatprep.subr.mxu0 0.0
        %3269 = vmatpush1.msra.mxu0 0.0
        %3270 = vmatprep.subr.mxu0 0.0
        %3271 = vmatpush1.msra.mxu0 0.0
        %3272 = vmatprep.subr.mxu0 0.0
        %3273 = vmatpush1.msra.mxu0 0.0
        %3274 = vmatprep.subr.mxu0 0.0
        %3275 = vmatpush1.msra.mxu0 0.0
        %3276 = vmatprep.subr.mxu0 0.0
        %3277 = vmatpush1.msra.mxu0 0.0
        %3278 = vmatprep.subr.mxu0 0.0
        %3279 = vmatpush1.msra.mxu0 0.0
        %3280 = vmatprep.subr.mxu0 0.0
        %3281 = vmatpush1.msra.mxu0 0.0
        %3282 = vmatprep.subr.mxu0 0.0
        %3283 = vmatpush1.msra.mxu0 0.0
        %3284 = vmatprep.subr.mxu0 0.0
        %3285 = vmatpush1.msra.mxu0 0.0
        %3286 = vmatprep.subr.mxu0 0.0
        %3287 = vmatpush1.msra.mxu0 0.0
        %3288 = vmatprep.subr.mxu0 0.0
        %3289 = vmatpush1.msra.mxu0 0.0
        %3290 = vmatprep.mubr.f32.mxu0 0.0
        %3291 = vmatmul.mubr.f32.gmra.mrb[0].mxu0 %v3224
        %v3292 = vpop.f32.mrb[0].mxu0
        %v3293 = vadd.f32 0.0, %v3292
        %v3294 = vpop.f32.mrb[0].mxu0
        %3295 = vdwg.mxu0
        %3297 = vrot.lane.b32.xlu0 %v3293, 24
        %v3298 = vpop.permute.xlu0 %3297
        %vm3300 = vcmask 261312
        %3301 = vst.msk [vmem:[%s203] sm:$0xff] %vm3300, %v3298
        %3303 = vrot.lane.b32.xlu0 %v2978, 112
        %v3304 = vpop.permute.xlu0 %3303
        %v3305 = vsel %vm2982, %v3304, 0
        %3307 = vmatprep.subr.mxu0 0.0
        %3308 = vmatpush1.msra.mxu0 %v2980
        %3309 = vmatprep.subr.mxu0 0.0
        %3310 = vmatpush1.msra.mxu0 %v2988
        %3311 = vmatprep.subr.mxu0 0.0
        %3312 = vmatpush1.msra.mxu0 0.0
        %3313 = vmatprep.subr.mxu0 0.0
        %3314 = vmatpush1.msra.mxu0 0.0
        %3315 = vmatprep.subr.mxu0 0.0
        %3316 = vmatpush1.msra.mxu0 0.0
        %3317 = vmatprep.subr.mxu0 0.0
        %3318 = vmatpush1.msra.mxu0 0.0
        %3319 = vmatprep.subr.mxu0 0.0
        %3320 = vmatpush1.msra.mxu0 0.0
        %3321 = vmatprep.subr.mxu0 0.0
        %3322 = vmatpush1.msra.mxu0 0.0
        %3323 = vmatprep.subr.mxu0 0.0
        %3324 = vmatpush1.msra.mxu0 0.0
        %3325 = vmatprep.subr.mxu0 0.0
        %3326 = vmatpush1.msra.mxu0 0.0
        %3327 = vmatprep.subr.mxu0 0.0
        %3328 = vmatpush1.msra.mxu0 0.0
        %3329 = vmatprep.subr.mxu0 0.0
        %3330 = vmatpush1.msra.mxu0 0.0
        %3331 = vmatprep.subr.mxu0 0.0
        %3332 = vmatpush1.msra.mxu0 0.0
        %3333 = vmatprep.subr.mxu0 0.0
        %3334 = vmatpush1.msra.mxu0 0.0
        %3335 = vmatprep.subr.mxu0 0.0
        %3336 = vmatpush1.msra.mxu0 0.0
        %3337 = vmatprep.subr.mxu0 0.0
        %3338 = vmatpush1.msra.mxu0 0.0
        %3339 = vmatprep.subr.mxu0 0.0
        %3340 = vmatpush1.msra.mxu0 0.0
        %3341 = vmatprep.subr.mxu0 0.0
        %3342 = vmatpush1.msra.mxu0 0.0
        %3343 = vmatprep.subr.mxu0 0.0
        %3344 = vmatpush1.msra.mxu0 0.0
        %3345 = vmatprep.subr.mxu0 0.0
        %3346 = vmatpush1.msra.mxu0 0.0
        %3347 = vmatprep.subr.mxu0 0.0
        %3348 = vmatpush1.msra.mxu0 0.0
        %3349 = vmatprep.subr.mxu0 0.0
        %3350 = vmatpush1.msra.mxu0 0.0
        %3351 = vmatprep.subr.mxu0 0.0
        %3352 = vmatpush1.msra.mxu0 0.0
        %3353 = vmatprep.subr.mxu0 0.0
        %3354 = vmatpush1.msra.mxu0 0.0
        %3355 = vmatprep.subr.mxu0 0.0
        %3356 = vmatpush1.msra.mxu0 0.0
        %3357 = vmatprep.subr.mxu0 0.0
        %3358 = vmatpush1.msra.mxu0 0.0
        %3359 = vmatprep.subr.mxu0 0.0
        %3360 = vmatpush1.msra.mxu0 0.0
        %3361 = vmatprep.subr.mxu0 0.0
        %3362 = vmatpush1.msra.mxu0 0.0
        %3363 = vmatprep.subr.mxu0 0.0
        %3364 = vmatpush1.msra.mxu0 0.0
        %3365 = vmatprep.subr.mxu0 0.0
        %3366 = vmatpush1.msra.mxu0 0.0
        %3367 = vmatprep.subr.mxu0 0.0
        %3368 = vmatpush1.msra.mxu0 0.0
        %3369 = vmatprep.subr.mxu0 0.0
        %3370 = vmatpush1.msra.mxu0 0.0
        %3371 = vmatprep.mubr.f32.mxu0 0.0
        %3372 = vmatmul.mubr.f32.gmra.mrb[0].mxu0 %v3305
        %v3373 = vpop.f32.mrb[0].mxu0
        %v3374 = vadd.f32 0.0, %v3373
        %v3375 = vpop.f32.mrb[0].mxu0
        %3376 = vdwg.mxu0
        %3378 = vrot.lane.b32.xlu0 %v3374, 32
        %v3379 = vpop.permute.xlu0 %3378
        %vm3381 = vcmask 326912
        %3382 = vst.msk [vmem:[%s203] sm:$0xff] %vm3381, %v3379
        %3383 = vrot.lane.b32.xlu0 %v2978, 76
        %v3384 = vpop.permute.xlu0 %3383
        %v3385 = vsel %vm2982, %v3384, 0
        %3387 = vmatprep.subr.mxu0 0.0
        %3388 = vmatpush1.msra.mxu0 %v2980
        %3389 = vmatprep.subr.mxu0 0.0
        %3390 = vmatpush1.msra.mxu0 %v2988
        %3391 = vmatprep.subr.mxu0 0.0
        %3392 = vmatpush1.msra.mxu0 0.0
        %3393 = vmatprep.subr.mxu0 0.0
        %3394 = vmatpush1.msra.mxu0 0.0
        %3395 = vmatprep.subr.mxu0 0.0
        %3396 = vmatpush1.msra.mxu0 0.0
        %3397 = vmatprep.subr.mxu0 0.0
        %3398 = vmatpush1.msra.mxu0 0.0
        %3399 = vmatprep.subr.mxu0 0.0
        %3400 = vmatpush1.msra.mxu0 0.0
        %3401 = vmatprep.subr.mxu0 0.0
        %3402 = vmatpush1.msra.mxu0 0.0
        %3403 = vmatprep.subr.mxu0 0.0
        %3404 = vmatpush1.msra.mxu0 0.0
        %3405 = vmatprep.subr.mxu0 0.0
        %3406 = vmatpush1.msra.mxu0 0.0
        %3407 = vmatprep.subr.mxu0 0.0
        %3408 = vmatpush1.msra.mxu0 0.0
        %3409 = vmatprep.subr.mxu0 0.0
        %3410 = vmatpush1.msra.mxu0 0.0
        %3411 = vmatprep.subr.mxu0 0.0
        %3412 = vmatpush1.msra.mxu0 0.0
        %3413 = vmatprep.subr.mxu0 0.0
        %3414 = vmatpush1.msra.mxu0 0.0
        %3415 = vmatprep.subr.mxu0 0.0
        %3416 = vmatpush1.msra.mxu0 0.0
        %3417 = vmatprep.subr.mxu0 0.0
        %3418 = vmatpush1.msra.mxu0 0.0
        %3419 = vmatprep.subr.mxu0 0.0
        %3420 = vmatpush1.msra.mxu0 0.0
        %3421 = vmatprep.subr.mxu0 0.0
        %3422 = vmatpush1.msra.mxu0 0.0
        %3423 = vmatprep.subr.mxu0 0.0
        %3424 = vmatpush1.msra.mxu0 0.0
        %3425 = vmatprep.subr.mxu0 0.0
        %3426 = vmatpush1.msra.mxu0 0.0
        %3427 = vmatprep.subr.mxu0 0.0
        %3428 = vmatpush1.msra.mxu0 0.0
        %3429 = vmatprep.subr.mxu0 0.0
        %3430 = vmatpush1.msra.mxu0 0.0
        %3431 = vmatprep.subr.mxu0 0.0
        %3432 = vmatpush1.msra.mxu0 0.0
        %3433 = vmatprep.subr.mxu0 0.0
        %3434 = vmatpush1.msra.mxu0 0.0
        %3435 = vmatprep.subr.mxu0 0.0
        %3436 = vmatpush1.msra.mxu0 0.0
        %3437 = vmatprep.subr.mxu0 0.0
        %3438 = vmatpush1.msra.mxu0 0.0
        %3439 = vmatprep.subr.mxu0 0.0
        %3440 = vmatpush1.msra.mxu0 0.0
        %3441 = vmatprep.subr.mxu0 0.0
        %3442 = vmatpush1.msra.mxu0 0.0
        %3443 = vmatprep.subr.mxu0 0.0
        %3444 = vmatpush1.msra.mxu0 0.0
        %3445 = vmatprep.subr.mxu0 0.0
        %3446 = vmatpush1.msra.mxu0 0.0
        %3447 = vmatprep.subr.mxu0 0.0
        %3448 = vmatpush1.msra.mxu0 0.0
        %3449 = vmatprep.subr.mxu0 0.0
        %3450 = vmatpush1.msra.mxu0 0.0
        %3451 = vmatprep.mubr.f32.mxu0 0.0
        %3452 = vmatmul.mubr.f32.gmra.mrb[0].mxu0 %v3385
        %v3453 = vpop.f32.mrb[0].mxu0
        %v3454 = vadd.f32 0.0, %v3453
        %v3455 = vpop.f32.mrb[0].mxu0
        %3456 = vdwg.mxu0
        %3458 = vrot.lane.b32.xlu0 %v3454, 40
        %v3459 = vpop.permute.xlu0 %3458
        %vm3461 = vcmask 392512
        %3462 = vst.msk [vmem:[%s203] sm:$0xff] %vm3461, %v3459
        %3463 = vrot.lane.b32.xlu0 %v2978, 40
        %v3464 = vpop.permute.xlu0 %3463
        %v3465 = vsel %vm2982, %v3464, 0
        %3467 = vmatprep.subr.mxu0 0.0
        %3468 = vmatpush1.msra.mxu0 %v2980
        %3469 = vmatprep.subr.mxu0 0.0
        %3470 = vmatpush1.msra.mxu0 %v2988
        %3471 = vmatprep.subr.mxu0 0.0
        %3472 = vmatpush1.msra.mxu0 0.0
        %3473 = vmatprep.subr.mxu0 0.0
        %3474 = vmatpush1.msra.mxu0 0.0
        %3475 = vmatprep.subr.mxu0 0.0
        %3476 = vmatpush1.msra.mxu0 0.0
        %3477 = vmatprep.subr.mxu0 0.0
        %3478 = vmatpush1.msra.mxu0 0.0
        %3479 = vmatprep.subr.mxu0 0.0
        %3480 = vmatpush1.msra.mxu0 0.0
        %3481 = vmatprep.subr.mxu0 0.0
        %3482 = vmatpush1.msra.mxu0 0.0
        %3483 = vmatprep.subr.mxu0 0.0
        %3484 = vmatpush1.msra.mxu0 0.0
        %3485 = vmatprep.subr.mxu0 0.0
        %3486 = vmatpush1.msra.mxu0 0.0
        %3487 = vmatprep.subr.mxu0 0.0
        %3488 = vmatpush1.msra.mxu0 0.0
        %3489 = vmatprep.subr.mxu0 0.0
        %3490 = vmatpush1.msra.mxu0 0.0
        %3491 = vmatprep.subr.mxu0 0.0
        %3492 = vmatpush1.msra.mxu0 0.0
        %3493 = vmatprep.subr.mxu0 0.0
        %3494 = vmatpush1.msra.mxu0 0.0
        %3495 = vmatprep.subr.mxu0 0.0
        %3496 = vmatpush1.msra.mxu0 0.0
        %3497 = vmatprep.subr.mxu0 0.0
        %3498 = vmatpush1.msra.mxu0 0.0
        %3499 = vmatprep.subr.mxu0 0.0
        %3500 = vmatpush1.msra.mxu0 0.0
        %3501 = vmatprep.subr.mxu0 0.0
        %3502 = vmatpush1.msra.mxu0 0.0
        %3503 = vmatprep.subr.mxu0 0.0
        %3504 = vmatpush1.msra.mxu0 0.0
        %3505 = vmatprep.subr.mxu0 0.0
        %3506 = vmatpush1.msra.mxu0 0.0
        %3507 = vmatprep.subr.mxu0 0.0
        %3508 = vmatpush1.msra.mxu0 0.0
        %3509 = vmatprep.subr.mxu0 0.0
        %3510 = vmatpush1.msra.mxu0 0.0
        %3511 = vmatprep.subr.mxu0 0.0
        %3512 = vmatpush1.msra.mxu0 0.0
        %3513 = vmatprep.subr.mxu0 0.0
        %3514 = vmatpush1.msra.mxu0 0.0
        %3515 = vmatprep.subr.mxu0 0.0
        %3516 = vmatpush1.msra.mxu0 0.0
        %3517 = vmatprep.subr.mxu0 0.0
        %3518 = vmatpush1.msra.mxu0 0.0
        %3519 = vmatprep.subr.mxu0 0.0
        %3520 = vmatpush1.msra.mxu0 0.0
        %3521 = vmatprep.subr.mxu0 0.0
        %3522 = vmatpush1.msra.mxu0 0.0
        %3523 = vmatprep.subr.mxu0 0.0
        %3524 = vmatpush1.msra.mxu0 0.0
        %3525 = vmatprep.subr.mxu0 0.0
        %3526 = vmatpush1.msra.mxu0 0.0
        %3527 = vmatprep.subr.mxu0 0.0
        %3528 = vmatpush1.msra.mxu0 0.0
        %3529 = vmatprep.subr.mxu0 0.0
        %3530 = vmatpush1.msra.mxu0 0.0
        %3531 = vmatprep.mubr.f32.mxu0 0.0
        %3532 = vmatmul.mubr.f32.gmra.mrb[0].mxu0 %v3465
        %v3533 = vpop.f32.mrb[0].mxu0
        %v3534 = vadd.f32 0.0, %v3533
        %v3535 = vpop.f32.mrb[0].mxu0
        %3536 = vdwg.mxu0
        %3538 = vrot.lane.b32.xlu0 %v3534, 48
        %v3539 = vpop.permute.xlu0 %3538
        %vm3541 = vcmask 458112
        %3542 = vst.msk [vmem:[%s203] sm:$0xff] %vm3541, %v3539
        %3544 = vrot.lane.b32.xlu0 %v2978, 4
        %v3545 = vpop.permute.xlu0 %3544
        %3546 = vrot.lane.b32.xlu0 %v2979, 4
        %v3547 = vpop.permute.xlu0 %3546
        %v3548 = vsel %vm230, %v3545, %v3547
        %v3549 = vsel %vm2982, %v3548, 0
        %3551 = vmatprep.subr.mxu0 0.0
        %3552 = vmatpush1.msra.mxu0 %v2980
        %3553 = vmatprep.subr.mxu0 0.0
        %3554 = vmatpush1.msra.mxu0 %v2988
        %3555 = vmatprep.subr.mxu0 0.0
        %3556 = vmatpush1.msra.mxu0 0.0
        %3557 = vmatprep.subr.mxu0 0.0
        %3558 = vmatpush1.msra.mxu0 0.0
        %3559 = vmatprep.subr.mxu0 0.0
        %3560 = vmatpush1.msra.mxu0 0.0
        %3561 = vmatprep.subr.mxu0 0.0
        %3562 = vmatpush1.msra.mxu0 0.0
        %3563 = vmatprep.subr.mxu0 0.0
        %3564 = vmatpush1.msra.mxu0 0.0
        %3565 = vmatprep.subr.mxu0 0.0
        %3566 = vmatpush1.msra.mxu0 0.0
        %3567 = vmatprep.subr.mxu0 0.0
        %3568 = vmatpush1.msra.mxu0 0.0
        %3569 = vmatprep.subr.mxu0 0.0
        %3570 = vmatpush1.msra.mxu0 0.0
        %3571 = vmatprep.subr.mxu0 0.0
        %3572 = vmatpush1.msra.mxu0 0.0
        %3573 = vmatprep.subr.mxu0 0.0
        %3574 = vmatpush1.msra.mxu0 0.0
        %3575 = vmatprep.subr.mxu0 0.0
        %3576 = vmatpush1.msra.mxu0 0.0
        %3577 = vmatprep.subr.mxu0 0.0
        %3578 = vmatpush1.msra.mxu0 0.0
        %3579 = vmatprep.subr.mxu0 0.0
        %3580 = vmatpush1.msra.mxu0 0.0
        %3581 = vmatprep.subr.mxu0 0.0
        %3582 = vmatpush1.msra.mxu0 0.0
        %3583 = vmatprep.subr.mxu0 0.0
        %3584 = vmatpush1.msra.mxu0 0.0
        %3585 = vmatprep.subr.mxu0 0.0
        %3586 = vmatpush1.msra.mxu0 0.0
        %3587 = vmatprep.subr.mxu0 0.0
        %3588 = vmatpush1.msra.mxu0 0.0
        %3589 = vmatprep.subr.mxu0 0.0
        %3590 = vmatpush1.msra.mxu0 0.0
        %3591 = vmatprep.subr.mxu0 0.0
        %3592 = vmatpush1.msra.mxu0 0.0
        %3593 = vmatprep.subr.mxu0 0.0
        %3594 = vmatpush1.msra.mxu0 0.0
        %3595 = vmatprep.subr.mxu0 0.0
        %3596 = vmatpush1.msra.mxu0 0.0
        %3597 = vmatprep.subr.mxu0 0.0
        %3598 = vmatpush1.msra.mxu0 0.0
        %3599 = vmatprep.subr.mxu0 0.0
        %3600 = vmatpush1.msra.mxu0 0.0
        %3601 = vmatprep.subr.mxu0 0.0
        %3602 = vmatpush1.msra.mxu0 0.0
        %3603 = vmatprep.subr.mxu0 0.0
        %3604 = vmatpush1.msra.mxu0 0.0
        %3605 = vmatprep.subr.mxu0 0.0
        %3606 = vmatpush1.msra.mxu0 0.0
        %3607 = vmatprep.subr.mxu0 0.0
        %3608 = vmatpush1.msra.mxu0 0.0
        %3609 = vmatprep.subr.mxu0 0.0
        %3610 = vmatpush1.msra.mxu0 0.0
        %3611 = vmatprep.subr.mxu0 0.0
        %3612 = vmatpush1.msra.mxu0 0.0
        %3613 = vmatprep.subr.mxu0 0.0
        %3614 = vmatpush1.msra.mxu0 0.0
        %3615 = vmatprep.mubr.f32.mxu0 0.0
        %3616 = vmatmul.mubr.f32.gmra.mrb[0].mxu0 %v3549
        %v3617 = vpop.f32.mrb[0].mxu0
        %v3618 = vadd.f32 0.0, %v3617
        %v3619 = vpop.f32.mrb[0].mxu0
        %3620 = vdwg.mxu0
        %3622 = vrot.lane.b32.xlu0 %v3618, 56
        %v3623 = vpop.permute.xlu0 %3622
        %vm3625 = vcmask 523712
        %3626 = vst.msk [vmem:[%s203] sm:$0xff] %vm3625, %v3623
        %s3627 = sand.u32 %s120, 1
        %s3628 = scalar_lea.sflag [#allocation3], %s3627
        %s3629 = sand.u32 %s120, 1
        %s3630 = smul.addr %s3629, 8
        %s3631 = scalar_lea.vmem [#allocation2], %s3630
        // Predicated region
        $region37: #{tpu_custom_call.1} parent=35 // pred_check
          %p3632 = pneg %p130
        $region38: #{tpu_custom_call.1} parent=35 // pred_check_branch
          %3634 = sbr.rel (%p3632) target = $region40
        $region39: #{tpu_custom_call.1} parent=35 // pred_region
          %s3636 = ssub.s32 128, 128
          %3637 = vsyncadd %s3628, %s3636
          %s3638 = smul.addr %s18, 128
          %s3639 = scalar_lea.hbm %s4, %s3638
          %s3641 = sshll.u32 %s3631, 4
          %s3642 = int_to_ptr.vmem [resolvable:$true] %s3641
          %3644 = dma.vmem_to_hbm [thread:$0]  %s3642, 128, %s3639, %s3628
        $region40: #{tpu_custom_call.1} parent=35 // pred_fallthru
          _
      $region36: #{tpu_custom_call.1} parent=5 // pred_fallthru
        _
      %p3645 = scmp.le.s32.totalorder 2, %s13
      // Predicated region
      $region41: #{tpu_custom_call.1} parent=5 // pred_check
        %p3646 = pneg %p3645
      $region42: #{tpu_custom_call.1} parent=5 // pred_check_branch
        %3648 = sbr.rel (%p3646) target = $region44
      $region43: #{tpu_custom_call.1} parent=5 // pred_region
        %s3649 = ssub.s32 %s13, 2
        // Predicated region
        $region45: #{tpu_custom_call.1} parent=43 // pred_check
          %p3650 = pneg %p136
        $region46: #{tpu_custom_call.1} parent=43 // pred_check_branch
          %3652 = sbr.rel (%p3650) target = $region48
        $region47: #{tpu_custom_call.1} parent=43 // pred_region
          %s3653 = sand.u32 %s121, 1
          %s3654 = scalar_lea.sflag [#allocation3], %s3653
          %s3655 = sand.u32 %s121, 1
          %s3656 = smul.addr %s3655, 8
          %s3657 = scalar_lea.vmem [#allocation2], %s3656
          %3658 = dma.done %s3654, 128
        $region48: #{tpu_custom_call.1} parent=43 // pred_fallthru
          _
      $region44: #{tpu_custom_call.1} parent=5 // pred_fallthru
        _
    $region6: #{tpu_custom_call.1} parent=1 // loop_footer
      %s17 = sadd.s32 1, %s13
    $region7: #{tpu_custom_call.1} parent=1 // loop_footer_branch
      %12 = sbr.rel target = $region3
    $region8: #{tpu_custom_call.1} parent=1 // loop_exit
      _
    %3659 = vsyncpa [#allocation3], 1
    %s3660 = scalar_lea.sflag [#allocation3], 1
    %3661 = vsyncpa %s3660, 1

</llo_original>
